<compile_context>
chip_gen: v7x
topology: tpu7x:2x2x1
jax: 0.10.0
libtpu: 0.0.40
codegen_flags: <defaults>
</compile_context>

<pallas_src>
import functools

import jax
import jax.numpy as jnp
from jax.experimental import pallas as pl
from jax.experimental.pallas import tpu as pltpu

F_SIZE = 21    # hidden size used inside SuperpixelSCConv
_PAD = 128     # lane-block width per message type (one vreg lane tile)


# ----------------------------- fused Pallas kernel --------------------------

def _fused_forward_kernel(
    # features
    x0_ref, x1_ref, x2_ref,
    # dense operators (Laplacians / boundary maps)
    l0_ref, l1_ref, l2_ref, b2d3_ref, d2b1_ref, d1b1_ref, b2t_ref,
    # mean-pool matrices (rows pre-scaled by 1/count)
    p0_ref, p1_ref, p2_ref,
    # SCConv layer 1..3 source-batched weights: (w_node, b_node, w_edge, b_edge, w_tri, b_tri)
    l1wn_ref, l1bn_ref, l1we_ref, l1be_ref, l1wt_ref, l1bt_ref,
    l2wn_ref, l2bn_ref, l2we_ref, l2be_ref, l2wt_ref, l2bt_ref,
    l3wn_ref, l3bn_ref, l3we_ref, l3be_ref, l3wt_ref, l3bt_ref,
    # combined linears, pre-split into per-layer row blocks (padded to 128 rows)
    c1a_ref, c1b_ref, c1c_ref, c1bias_ref,
    c2a_ref, c2b_ref, c2c_ref, c2bias_ref,
    c3a_ref, c3b_ref, c3c_ref, c3bias_ref,
    # output linear, pre-split into per-rank row blocks
    oa_ref, ob_ref, oc_ref, obias_ref,
    # output
    out_ref,
):
    P = _PAD

    def dot(a, b):
        return jnp.dot(a, b, preferred_element_type=jnp.float32)

    l0 = l0_ref[...]
    l1 = l1_ref[...]
    l2 = l2_ref[...]
    b2d3 = b2d3_ref[...]
    d2b1 = d2b1_ref[...]
    d1b1 = d1b1_ref[...]
    b2t = b2t_ref[...]

    def scc_layer(x0, x1, x2, wn, bn, we, be, wt, bt):
        # Stage 1: one wide-N linear per source rank; message blocks live in
        # 128-lane-aligned column slots so the slices below are free.
        h0 = dot(x0, wn[...]) + bn[...]            # [n2n | n2e]
        h1 = dot(x1, we[...]) + be[...]            # [e2n | e2e | e2t]
        h2 = dot(x2, wt[...]) + bt[...]            # [t2t | t2e]
        n2n, n2e = h0[:, :P], h0[:, P:2 * P]
        e2n, e2e, e2t = h1[:, :P], h1[:, P:2 * P], h1[:, 2 * P:3 * P]
        t2t, t2e = h2[:, :P], h2[:, P:2 * P]
        # Stage 2: operator matmuls + add + relu + scale, fused, all in VMEM.
        y0 = 0.5 * jnp.maximum(dot(l0, n2n) + dot(d1b1, e2n), 0.0)
        y1 = (1.0 / 3.0) * jnp.maximum(
            dot(l1, e2e) + dot(d2b1, n2e) + dot(b2d3, t2e), 0.0)
        y2 = 0.5 * jnp.maximum(dot(l2, t2t) + dot(b2t, e2t), 0.0)
        return y0, y1, y2

    x0_0, x1_0, x2_0 = scc_layer(
        x0_ref[...], x1_ref[...], x2_ref[...],
        l1wn_ref, l1bn_ref, l1we_ref, l1be_ref, l1wt_ref, l1bt_ref)
    x0_1, x1_1, x2_1 = scc_layer(
        x0_0, x1_0, x2_0,
        l2wn_ref, l2bn_ref, l2we_ref, l2be_ref, l2wt_ref, l2bt_ref)
    x0_2, x1_2, x2_2 = scc_layer(
        x0_1, x1_1, x2_1,
        l3wn_ref, l3bn_ref, l3we_ref, l3be_ref, l3wt_ref, l3bt_ref)

    # combined_k(cat([X_0, X_1, X_2], dim=1)) expressed as a block-row sum
    # (no concatenate, no HBM round trip).
    x0c = (dot(x0_0, c1a_ref[...]) + dot(x0_1, c1b_ref[...])
           + dot(x0_2, c1c_ref[...]) + c1bias_ref[...])
    x1c = (dot(x1_0, c2a_ref[...]) + dot(x1_1, c2b_ref[...])
           + dot(x1_2, c2c_ref[...]) + c2bias_ref[...])
    x2c = (dot(x2_0, c3a_ref[...]) + dot(x2_1, c3b_ref[...])
           + dot(x2_2, c3c_ref[...]) + c3bias_ref[...])

    # global_mean_pool: single matmul with a count-prescaled one-hot matrix.
    g0 = dot(p0_ref[...], x0c)
    g1 = dot(p1_ref[...], x1c)
    g2 = dot(p2_ref[...], x2c)

    # output(cat([P0, P1, P2], dim=1)) as a block-row sum, then stable softmax.
    z = (dot(g0, oa_ref[...]) + dot(g1, ob_ref[...])
         + dot(g2, oc_ref[...]) + obias_ref[...])
    z = z - jnp.max(z, axis=1, keepdims=True)
    e = jnp.exp(z)
    out_ref[...] = e / jnp.sum(e, axis=1, keepdims=True)


# ------------------------------- wrapper -------------------------------------

def _pool_matrix(batch, num_graphs):
    """(num_graphs, n) one-hot membership matrix with rows scaled by 1/count."""
    oh = (jnp.arange(num_graphs)[:, None] == batch[None, :]).astype(jnp.float32)
    # Empty groups -> zero row (count clamped to 1), matching the previous behavior.
    cnt = jnp.maximum(jnp.sum(oh, axis=1, keepdims=True), 1.0)
    return oh / cnt


def superpixel_scconv(packed, X0, X1, X2, L0, L1, L2,
                      B2D3, D2B1TD1inv, D1invB1, B2TD2inv,
                      batch0, batch1, batch2, *, num_graphs):
    out_size = packed["output"][3].shape[1]
    p0 = _pool_matrix(batch0, num_graphs)
    p1 = _pool_matrix(batch1, num_graphs)
    p2 = _pool_matrix(batch2, num_graphs)

    inputs = [X0, X1, X2, L0, L1, L2, B2D3, D2B1TD1inv, D1invB1, B2TD2inv,
              p0, p1, p2]
    inputs += list(packed["layer1"]) + list(packed["layer2"]) + list(packed["layer3"])
    inputs += list(packed["combined1"]) + list(packed["combined2"]) + list(packed["combined3"])
    inputs += list(packed["output"])

    vmem = pl.BlockSpec(memory_space=pltpu.MemorySpace.VMEM)
    return pl.pallas_call(
        _fused_forward_kernel,
        out_shape=jax.ShapeDtypeStruct((num_graphs, out_size), jnp.float32),
        in_specs=[vmem] * len(inputs),
        out_specs=pl.BlockSpec(memory_space=pltpu.MemorySpace.VMEM),
    )(*inputs)


# -------------------------- parameter init / packing ------------------------

def init_linear(key, in_f, out_f):
    # Deterministic synthetic init (PyTorch-Linear-style uniform bounds).
    k1, k2 = jax.random.split(key)
    bound = 1.0 / (in_f ** 0.5)
    W = jax.random.uniform(k1, (in_f, out_f), jnp.float32, -bound, bound)
    b = jax.random.uniform(k2, (out_f,), jnp.float32, -bound, bound)
    return W, b


def init_scconv_layer(key, nf, ef, tf, out):
    names_ins = [("n2n", nf), ("n2e", nf), ("e2e", ef), ("e2n", ef),
                 ("e2t", ef), ("t2e", tf), ("t2t", tf)]
    keys = jax.random.split(key, len(names_ins))
    return {name: init_linear(k, fin, out)
            for (name, fin), k in zip(names_ins, keys)}


def _pad_to(x, rows=None, cols=None):
    r = 0 if rows is None else rows - x.shape[0]
    c = 0 if cols is None else cols - x.shape[1]
    return jnp.pad(x, ((0, r), (0, c)))


def _pack_msg_block(raw_layer, names, pad_in):
    Ws, bs = [], []
    for n in names:
        W, b = raw_layer[n]
        Ws.append(_pad_to(W, cols=_PAD))                 # (in, 128) zero-padded cols
        bs.append(jnp.pad(b, (0, _PAD - b.shape[0])))    # (128,) zero-padded
    Wcat = jnp.concatenate(Ws, axis=1)                   # (in, k*128)
    if pad_in:
        Wcat = _pad_to(Wcat, rows=_PAD)                  # zero rows for padded inputs
    bcat = jnp.concatenate(bs).reshape(1, -1)            # bias already (1, N)
    return Wcat, bcat


def pack_scconv_layer(raw_layer, pad_in):
    wn, bn = _pack_msg_block(raw_layer, ["n2n", "n2e"], pad_in)
    we, be = _pack_msg_block(raw_layer, ["e2n", "e2e", "e2t"], pad_in)
    wt, bt = _pack_msg_block(raw_layer, ["t2t", "t2e"], pad_in)
    return (wn, bn, we, be, wt, bt)


def pack_combined(Wb):
    W, b = Wb                                            # W: (3*F_SIZE, out)
    blocks = tuple(_pad_to(W[i * F_SIZE:(i + 1) * F_SIZE], rows=_PAD)
                   for i in range(3))
    return blocks + (b.reshape(1, -1),)


def pack_output(Wb, out_size):
    W, b = Wb                                            # W: (3*out, out)
    blocks = tuple(W[i * out_size:(i + 1) * out_size] for i in range(3))
    return blocks + (b.reshape(1, -1),)


def init_superpixel_scconv(key, nf, ef, tf, output_size):
    ks = jax.random.split(key, 7)
    raw = {
        "layer1": init_scconv_layer(ks[0], nf, ef, tf, F_SIZE),
        "layer2": init_scconv_layer(ks[1], F_SIZE, F_SIZE, F_SIZE, F_SIZE),
        "layer3": init_scconv_layer(ks[2], F_SIZE, F_SIZE, F_SIZE, F_SIZE),
        "combined1": init_linear(ks[3], 3 * F_SIZE, output_size),
        "combined2": init_linear(ks[4], 3 * F_SIZE, output_size),
        "combined3": init_linear(ks[5], 3 * F_SIZE, output_size),
        "output": init_linear(ks[6], 3 * output_size, output_size),
    }
    packed = {
        "layer1": pack_scconv_layer(raw["layer1"], pad_in=False),
        "layer2": pack_scconv_layer(raw["layer2"], pad_in=True),
        "layer3": pack_scconv_layer(raw["layer3"], pad_in=True),
        "combined1": pack_combined(raw["combined1"]),
        "combined2": pack_combined(raw["combined2"]),
        "combined3": pack_combined(raw["combined3"]),
        "output": pack_output(raw["output"], output_size),
    }
    return raw, packed


# --------------------------- pure-JAX reference ------------------------------

def reference_forward(raw, X0, X1, X2, L0, L1, L2, B2D3, D2B1TD1inv, D1invB1,
                      B2TD2inv, batch0, batch1, batch2, num_graphs):
    hp = jax.lax.Precision.HIGHEST

    def mm(a, b):
        return jnp.dot(a, b, precision=hp)

    def lin(p, x):
        return mm(x, p[0]) + p[1]

    def layer(p, x0, x1, x2):
        n2n = mm(L0, lin(p["n2n"], x0))
        n2e = mm(D2B1TD1inv, lin(p["n2e"], x0))
        e2n = mm(D1invB1, lin(p["e2n"], x1))
        e2e = mm(L1, lin(p["e2e"], x1))
        e2t = mm(B2TD2inv, lin(p["e2t"], x1))
        t2t = mm(L2, lin(p["t2t"], x2))
        t2e = mm(B2D3, lin(p["t2e"], x2))
        return (0.5 * jax.nn.relu(n2n + e2n),
                (1.0 / 3.0) * jax.nn.relu(e2e + n2e + t2e),
                0.5 * jax.nn.relu(t2t + e2t))

    a = layer(raw["layer1"], X0, X1, X2)
    b = layer(raw["layer2"], *a)
    c = layer(raw["layer3"], *b)

    x0c = lin(raw["combined1"], jnp.concatenate([a[0], b[0], c[0]], axis=1))
    x1c = lin(raw["combined2"], jnp.concatenate([a[1], b[1], c[1]], axis=1))
    x2c = lin(raw["combined3"], jnp.concatenate([a[2], b[2], c[2]], axis=1))

    def pool(x, batch):
        oh = (jnp.arange(num_graphs)[:, None] == batch[None, :]).astype(jnp.float32)
        cnt = jnp.maximum(jnp.sum(oh, axis=1, keepdims=True), 1.0)
        return mm(oh, x) / cnt

    out = jnp.concatenate([pool(x0c, batch0), pool(x1c, batch1), pool(x2c, batch2)],
                          axis=1)
    return jax.nn.softmax(lin(raw["output"], out), axis=1)


# --------------------------------- main --------------------------------------

if __name__ == "__main__":
    key = jax.random.PRNGKey(0)
    (k_params, k_x0, k_x1, k_x2, k_l0, k_l1, k_l2,
     k_b2d3, k_d2b1, k_d1b1, k_b2t) = jax.random.split(key, 11)

    # Small synthetic simplicial complex: 16 nodes, 24 edges, 8 triangles, 2 graphs.
    n0, n1, n2 = 16, 24, 8
    num_node_feats, num_edge_feats, num_triangle_feats = 3, 4, 5
    output_size, num_graphs = 10, 2

    X0 = jax.random.normal(k_x0, (n0, num_node_feats), jnp.float32)
    X1 = jax.random.normal(k_x1, (n1, num_edge_feats), jnp.float32)
    X2 = jax.random.normal(k_x2, (n2, num_triangle_feats), jnp.float32)

    # Dense stand-ins for the sparse Laplacians / (weighted) boundary operators.
    # TODO(synk): true sparse torch.sparse.mm has no Pallas sparse equivalent here;
    # operators are materialized dense (same numerics).
    L0 = jax.random.normal(k_l0, (n0, n0), jnp.float32) * 0.1
    L1 = jax.random.normal(k_l1, (n1, n1), jnp.float32) * 0.1
    L2 = jax.random.normal(k_l2, (n2, n2), jnp.float32) * 0.1
    B2D3 = jax.random.normal(k_b2d3, (n1, n2), jnp.float32) * 0.1
    D2B1TD1inv = jax.random.normal(k_d2b1, (n1, n0), jnp.float32) * 0.1
    D1invB1 = jax.random.normal(k_d1b1, (n0, n1), jnp.float32) * 0.1
    B2TD2inv = jax.random.normal(k_b2t, (n2, n1), jnp.float32) * 0.1

    # Batch assignment of each simplex to one of the 2 graphs.
    batch0 = jnp.array([0] * (n0 // 2) + [1] * (n0 - n0 // 2), jnp.int32)
    batch1 = jnp.array([0] * (n1 // 2) + [1] * (n1 - n1 // 2), jnp.int32)
    batch2 = jnp.array([0] * (n2 // 2) + [1] * (n2 - n2 // 2), jnp.int32)

    raw, packed = init_superpixel_scconv(
        k_params, num_node_feats, num_edge_feats, num_triangle_feats, output_size)

    fwd = jax.jit(functools.partial(superpixel_scconv, num_graphs=num_graphs))
    out = fwd(packed, X0, X1, X2, L0, L1, L2, B2D3, D2B1TD1inv, D1invB1, B2TD2inv,
              batch0, batch1, batch2)
    out = jax.block_until_ready(out)

    assert out.shape == (num_graphs, output_size)
    # Softmax rows must sum to 1.
    assert bool(jnp.all(jnp.abs(out.sum(axis=1) - 1.0) < 1e-5))

    # Cross-check the fused / block-restructured kernel against a pure-JAX
    # reference that follows the PyTorch module op-for-op.
    ref = reference_forward(raw, X0, X1, X2, L0, L1, L2, B2D3, D2B1TD1inv,
                            D1invB1, B2TD2inv, batch0, batch1, batch2, num_graphs)
    max_diff = float(jnp.max(jnp.abs(out - ref)))
    assert max_diff < 5e-3, max_diff

    print("KERNEL_OK")
</pallas_src>

<mosaic_0001>
module attributes {stable_mosaic.version = 11 : i64} {
  func.func @_fused_forward_kernel(%arg0: memref<16x3xf32, #tpu.memory_space<vmem>>, %arg1: memref<24x4xf32, #tpu.memory_space<vmem>>, %arg2: memref<8x5xf32, #tpu.memory_space<vmem>>, %arg3: memref<16x16xf32, #tpu.memory_space<vmem>>, %arg4: memref<24x24xf32, #tpu.memory_space<vmem>>, %arg5: memref<8x8xf32, #tpu.memory_space<vmem>>, %arg6: memref<24x8xf32, #tpu.memory_space<vmem>>, %arg7: memref<24x16xf32, #tpu.memory_space<vmem>>, %arg8: memref<16x24xf32, #tpu.memory_space<vmem>>, %arg9: memref<8x24xf32, #tpu.memory_space<vmem>>, %arg10: memref<2x16xf32, #tpu.memory_space<vmem>>, %arg11: memref<2x24xf32, #tpu.memory_space<vmem>>, %arg12: memref<2x8xf32, #tpu.memory_space<vmem>>, %arg13: memref<3x256xf32, #tpu.memory_space<vmem>>, %arg14: memref<1x256xf32, #tpu.memory_space<vmem>>, %arg15: memref<4x384xf32, #tpu.memory_space<vmem>>, %arg16: memref<1x384xf32, #tpu.memory_space<vmem>>, %arg17: memref<5x256xf32, #tpu.memory_space<vmem>>, %arg18: memref<1x256xf32, #tpu.memory_space<vmem>>, %arg19: memref<128x256xf32, #tpu.memory_space<vmem>>, %arg20: memref<1x256xf32, #tpu.memory_space<vmem>>, %arg21: memref<128x384xf32, #tpu.memory_space<vmem>>, %arg22: memref<1x384xf32, #tpu.memory_space<vmem>>, %arg23: memref<128x256xf32, #tpu.memory_space<vmem>>, %arg24: memref<1x256xf32, #tpu.memory_space<vmem>>, %arg25: memref<128x256xf32, #tpu.memory_space<vmem>>, %arg26: memref<1x256xf32, #tpu.memory_space<vmem>>, %arg27: memref<128x384xf32, #tpu.memory_space<vmem>>, %arg28: memref<1x384xf32, #tpu.memory_space<vmem>>, %arg29: memref<128x256xf32, #tpu.memory_space<vmem>>, %arg30: memref<1x256xf32, #tpu.memory_space<vmem>>, %arg31: memref<128x10xf32, #tpu.memory_space<vmem>>, %arg32: memref<128x10xf32, #tpu.memory_space<vmem>>, %arg33: memref<128x10xf32, #tpu.memory_space<vmem>>, %arg34: memref<1x10xf32, #tpu.memory_space<vmem>>, %arg35: memref<128x10xf32, #tpu.memory_space<vmem>>, %arg36: memref<128x10xf32, #tpu.memory_space<vmem>>, %arg37: memref<128x10xf32, #tpu.memory_space<vmem>>, %arg38: memref<1x10xf32, #tpu.memory_space<vmem>>, %arg39: memref<128x10xf32, #tpu.memory_space<vmem>>, %arg40: memref<128x10xf32, #tpu.memory_space<vmem>>, %arg41: memref<128x10xf32, #tpu.memory_space<vmem>>, %arg42: memref<1x10xf32, #tpu.memory_space<vmem>>, %arg43: memref<10x10xf32, #tpu.memory_space<vmem>>, %arg44: memref<10x10xf32, #tpu.memory_space<vmem>>, %arg45: memref<10x10xf32, #tpu.memory_space<vmem>>, %arg46: memref<1x10xf32, #tpu.memory_space<vmem>>, %arg47: memref<2x10xf32, #tpu.memory_space<vmem>>) attributes {dimension_semantics = [], scalar_prefetch = 0 : i64, scratch_operands = 0 : i64, tpu.core_type = #tpu.core_type<tc>} {
    %c0 = arith.constant 0 : index
    %c0_0 = arith.constant 0 : index
    %0 = vector.load %arg3[%c0, %c0_0] : memref<16x16xf32, #tpu.memory_space<vmem>>, vector<16x16xf32>
    %c0_1 = arith.constant 0 : index
    %c0_2 = arith.constant 0 : index
    %1 = vector.load %arg4[%c0_1, %c0_2] : memref<24x24xf32, #tpu.memory_space<vmem>>, vector<24x24xf32>
    %c0_3 = arith.constant 0 : index
    %c0_4 = arith.constant 0 : index
    %2 = vector.load %arg5[%c0_3, %c0_4] : memref<8x8xf32, #tpu.memory_space<vmem>>, vector<8x8xf32>
    %c0_5 = arith.constant 0 : index
    %c0_6 = arith.constant 0 : index
    %3 = vector.load %arg6[%c0_5, %c0_6] : memref<24x8xf32, #tpu.memory_space<vmem>>, vector<24x8xf32>
    %c0_7 = arith.constant 0 : index
    %c0_8 = arith.constant 0 : index
    %4 = vector.load %arg7[%c0_7, %c0_8] : memref<24x16xf32, #tpu.memory_space<vmem>>, vector<24x16xf32>
    %c0_9 = arith.constant 0 : index
    %c0_10 = arith.constant 0 : index
    %5 = vector.load %arg8[%c0_9, %c0_10] : memref<16x24xf32, #tpu.memory_space<vmem>>, vector<16x24xf32>
    %c0_11 = arith.constant 0 : index
    %c0_12 = arith.constant 0 : index
    %6 = vector.load %arg9[%c0_11, %c0_12] : memref<8x24xf32, #tpu.memory_space<vmem>>, vector<8x24xf32>
    %c0_13 = arith.constant 0 : index
    %c0_14 = arith.constant 0 : index
    %7 = vector.load %arg0[%c0_13, %c0_14] : memref<16x3xf32, #tpu.memory_space<vmem>>, vector<16x3xf32>
    %c0_15 = arith.constant 0 : index
    %c0_16 = arith.constant 0 : index
    %8 = vector.load %arg1[%c0_15, %c0_16] : memref<24x4xf32, #tpu.memory_space<vmem>>, vector<24x4xf32>
    %c0_17 = arith.constant 0 : index
    %c0_18 = arith.constant 0 : index
    %9 = vector.load %arg2[%c0_17, %c0_18] : memref<8x5xf32, #tpu.memory_space<vmem>>, vector<8x5xf32>
    %c0_19 = arith.constant 0 : index
    %c0_20 = arith.constant 0 : index
    %10 = vector.load %arg13[%c0_19, %c0_20] : memref<3x256xf32, #tpu.memory_space<vmem>>, vector<3x256xf32>
    %cst = arith.constant dense<0.000000e+00> : vector<16x256xf32>
    %11 = tpu.matmul %7, %10, %cst {dimension_numbers = #tpu.dot_dimension_numbers<[1], [0], [0], [1], [0, 0, 1, 1], [], []>} : vector<16x3xf32>, vector<3x256xf32>, vector<16x256xf32> -> vector<16x256xf32>
    %c0_21 = arith.constant 0 : index
    %c0_22 = arith.constant 0 : index
    %12 = vector.load %arg14[%c0_21, %c0_22] : memref<1x256xf32, #tpu.memory_space<vmem>>, vector<1x256xf32>
    %13 = vector.broadcast %12 : vector<1x256xf32> to vector<16x256xf32>
    %14 = arith.addf %11, %13 : vector<16x256xf32>
    %c0_23 = arith.constant 0 : index
    %c0_24 = arith.constant 0 : index
    %15 = vector.load %arg15[%c0_23, %c0_24] : memref<4x384xf32, #tpu.memory_space<vmem>>, vector<4x384xf32>
    %cst_25 = arith.constant dense<0.000000e+00> : vector<24x384xf32>
    %16 = tpu.matmul %8, %15, %cst_25 {dimension_numbers = #tpu.dot_dimension_numbers<[1], [0], [0], [1], [0, 0, 1, 1], [], []>} : vector<24x4xf32>, vector<4x384xf32>, vector<24x384xf32> -> vector<24x384xf32>
    %c0_26 = arith.constant 0 : index
    %c0_27 = arith.constant 0 : index
    %17 = vector.load %arg16[%c0_26, %c0_27] : memref<1x384xf32, #tpu.memory_space<vmem>>, vector<1x384xf32>
    %18 = vector.broadcast %17 : vector<1x384xf32> to vector<24x384xf32>
    %19 = arith.addf %16, %18 : vector<24x384xf32>
    %c0_28 = arith.constant 0 : index
    %c0_29 = arith.constant 0 : index
    %20 = vector.load %arg17[%c0_28, %c0_29] : memref<5x256xf32, #tpu.memory_space<vmem>>, vector<5x256xf32>
    %cst_30 = arith.constant dense<0.000000e+00> : vector<8x256xf32>
    %21 = tpu.matmul %9, %20, %cst_30 {dimension_numbers = #tpu.dot_dimension_numbers<[1], [0], [0], [1], [0, 0, 1, 1], [], []>} : vector<8x5xf32>, vector<5x256xf32>, vector<8x256xf32> -> vector<8x256xf32>
    %c0_31 = arith.constant 0 : index
    %c0_32 = arith.constant 0 : index
    %22 = vector.load %arg18[%c0_31, %c0_32] : memref<1x256xf32, #tpu.memory_space<vmem>>, vector<1x256xf32>
    %23 = vector.broadcast %22 : vector<1x256xf32> to vector<8x256xf32>
    %24 = arith.addf %21, %23 : vector<8x256xf32>
    %25 = vector.extract_strided_slice %14 {offsets = [0, 0], sizes = [16, 128], strides = [1, 1]} : vector<16x256xf32> to vector<16x128xf32>
    %26 = vector.extract_strided_slice %14 {offsets = [0, 128], sizes = [16, 128], strides = [1, 1]} : vector<16x256xf32> to vector<16x128xf32>
    %27 = vector.extract_strided_slice %19 {offsets = [0, 0], sizes = [24, 128], strides = [1, 1]} : vector<24x384xf32> to vector<24x128xf32>
    %28 = vector.extract_strided_slice %19 {offsets = [0, 128], sizes = [24, 128], strides = [1, 1]} : vector<24x384xf32> to vector<24x128xf32>
    %29 = vector.extract_strided_slice %19 {offsets = [0, 256], sizes = [24, 128], strides = [1, 1]} : vector<24x384xf32> to vector<24x128xf32>
    %30 = vector.extract_strided_slice %24 {offsets = [0, 0], sizes = [8, 128], strides = [1, 1]} : vector<8x256xf32> to vector<8x128xf32>
    %31 = vector.extract_strided_slice %24 {offsets = [0, 128], sizes = [8, 128], strides = [1, 1]} : vector<8x256xf32> to vector<8x128xf32>
    %cst_33 = arith.constant dense<0.000000e+00> : vector<16x128xf32>
    %32 = tpu.matmul %0, %25, %cst_33 {dimension_numbers = #tpu.dot_dimension_numbers<[1], [0], [0], [1], [0, 0, 1, 1], [], []>} : vector<16x16xf32>, vector<16x128xf32>, vector<16x128xf32> -> vector<16x128xf32>
    %cst_34 = arith.constant dense<0.000000e+00> : vector<16x128xf32>
    %33 = tpu.matmul %5, %27, %cst_34 {dimension_numbers = #tpu.dot_dimension_numbers<[1], [0], [0], [1], [0, 0, 1, 1], [], []>} : vector<16x24xf32>, vector<24x128xf32>, vector<16x128xf32> -> vector<16x128xf32>
    %34 = arith.addf %32, %33 : vector<16x128xf32>
    %cst_35 = arith.constant 0.000000e+00 : f32
    %35 = vector.broadcast %cst_35 : f32 to vector<16x128xf32>
    %36 = arith.maximumf %34, %35 : vector<16x128xf32>
    %cst_36 = arith.constant 5.000000e-01 : f32
    %37 = vector.broadcast %cst_36 : f32 to vector<16x128xf32>
    %38 = arith.mulf %37, %36 : vector<16x128xf32>
    %cst_37 = arith.constant dense<0.000000e+00> : vector<24x128xf32>
    %39 = tpu.matmul %1, %28, %cst_37 {dimension_numbers = #tpu.dot_dimension_numbers<[1], [0], [0], [1], [0, 0, 1, 1], [], []>} : vector<24x24xf32>, vector<24x128xf32>, vector<24x128xf32> -> vector<24x128xf32>
    %cst_38 = arith.constant dense<0.000000e+00> : vector<24x128xf32>
    %40 = tpu.matmul %4, %26, %cst_38 {dimension_numbers = #tpu.dot_dimension_numbers<[1], [0], [0], [1], [0, 0, 1, 1], [], []>} : vector<24x16xf32>, vector<16x128xf32>, vector<24x128xf32> -> vector<24x128xf32>
    %41 = arith.addf %39, %40 : vector<24x128xf32>
    %cst_39 = arith.constant dense<0.000000e+00> : vector<24x128xf32>
    %42 = tpu.matmul %3, %31, %cst_39 {dimension_numbers = #tpu.dot_dimension_numbers<[1], [0], [0], [1], [0, 0, 1, 1], [], []>} : vector<24x8xf32>, vector<8x128xf32>, vector<24x128xf32> -> vector<24x128xf32>
    %43 = arith.addf %41, %42 : vector<24x128xf32>
    %cst_40 = arith.constant 0.000000e+00 : f32
    %44 = vector.broadcast %cst_40 : f32 to vector<24x128xf32>
    %45 = arith.maximumf %43, %44 : vector<24x128xf32>
    %cst_41 = arith.constant 0.333333343 : f32
    %46 = vector.broadcast %cst_41 : f32 to vector<24x128xf32>
    %47 = arith.mulf %46, %45 : vector<24x128xf32>
    %cst_42 = arith.constant dense<0.000000e+00> : vector<8x128xf32>
    %48 = tpu.matmul %2, %30, %cst_42 {dimension_numbers = #tpu.dot_dimension_numbers<[1], [0], [0], [1], [0, 0, 1, 1], [], []>} : vector<8x8xf32>, vector<8x128xf32>, vector<8x128xf32> -> vector<8x128xf32>
    %cst_43 = arith.constant dense<0.000000e+00> : vector<8x128xf32>
    %49 = tpu.matmul %6, %29, %cst_43 {dimension_numbers = #tpu.dot_dimension_numbers<[1], [0], [0], [1], [0, 0, 1, 1], [], []>} : vector<8x24xf32>, vector<24x128xf32>, vector<8x128xf32> -> vector<8x128xf32>
    %50 = arith.addf %48, %49 : vector<8x128xf32>
    %cst_44 = arith.constant 0.000000e+00 : f32
    %51 = vector.broadcast %cst_44 : f32 to vector<8x128xf32>
    %52 = arith.maximumf %50, %51 : vector<8x128xf32>
    %cst_45 = arith.constant 5.000000e-01 : f32
    %53 = vector.broadcast %cst_45 : f32 to vector<8x128xf32>
    %54 = arith.mulf %53, %52 : vector<8x128xf32>
    %c0_46 = arith.constant 0 : index
    %c0_47 = arith.constant 0 : index
    %55 = vector.load %arg19[%c0_46, %c0_47] : memref<128x256xf32, #tpu.memory_space<vmem>>, vector<128x256xf32>
    %cst_48 = arith.constant dense<0.000000e+00> : vector<16x256xf32>
    %56 = tpu.matmul %38, %55, %cst_48 {dimension_numbers = #tpu.dot_dimension_numbers<[1], [0], [0], [1], [0, 0, 1, 1], [], []>} : vector<16x128xf32>, vector<128x256xf32>, vector<16x256xf32> -> vector<16x256xf32>
    %c0_49 = arith.constant 0 : index
    %c0_50 = arith.constant 0 : index
    %57 = vector.load %arg20[%c0_49, %c0_50] : memref<1x256xf32, #tpu.memory_space<vmem>>, vector<1x256xf32>
    %58 = vector.broadcast %57 : vector<1x256xf32> to vector<16x256xf32>
    %59 = arith.addf %56, %58 : vector<16x256xf32>
    %c0_51 = arith.constant 0 : index
    %c0_52 = arith.constant 0 : index
    %60 = vector.load %arg21[%c0_51, %c0_52] : memref<128x384xf32, #tpu.memory_space<vmem>>, vector<128x384xf32>
    %cst_53 = arith.constant dense<0.000000e+00> : vector<24x384xf32>
    %61 = tpu.matmul %47, %60, %cst_53 {dimension_numbers = #tpu.dot_dimension_numbers<[1], [0], [0], [1], [0, 0, 1, 1], [], []>} : vector<24x128xf32>, vector<128x384xf32>, vector<24x384xf32> -> vector<24x384xf32>
    %c0_54 = arith.constant 0 : index
    %c0_55 = arith.constant 0 : index
    %62 = vector.load %arg22[%c0_54, %c0_55] : memref<1x384xf32, #tpu.memory_space<vmem>>, vector<1x384xf32>
    %63 = vector.broadcast %62 : vector<1x384xf32> to vector<24x384xf32>
    %64 = arith.addf %61, %63 : vector<24x384xf32>
    %c0_56 = arith.constant 0 : index
    %c0_57 = arith.constant 0 : index
    %65 = vector.load %arg23[%c0_56, %c0_57] : memref<128x256xf32, #tpu.memory_space<vmem>>, vector<128x256xf32>
    %cst_58 = arith.constant dense<0.000000e+00> : vector<8x256xf32>
    %66 = tpu.matmul %54, %65, %cst_58 {dimension_numbers = #tpu.dot_dimension_numbers<[1], [0], [0], [1], [0, 0, 1, 1], [], []>} : vector<8x128xf32>, vector<128x256xf32>, vector<8x256xf32> -> vector<8x256xf32>
    %c0_59 = arith.constant 0 : index
    %c0_60 = arith.constant 0 : index
    %67 = vector.load %arg24[%c0_59, %c0_60] : memref<1x256xf32, #tpu.memory_space<vmem>>, vector<1x256xf32>
    %68 = vector.broadcast %67 : vector<1x256xf32> to vector<8x256xf32>
    %69 = arith.addf %66, %68 : vector<8x256xf32>
    %70 = vector.extract_strided_slice %59 {offsets = [0, 0], sizes = [16, 128], strides = [1, 1]} : vector<16x256xf32> to vector<16x128xf32>
    %71 = vector.extract_strided_slice %59 {offsets = [0, 128], sizes = [16, 128], strides = [1, 1]} : vector<16x256xf32> to vector<16x128xf32>
    %72 = vector.extract_strided_slice %64 {offsets = [0, 0], sizes = [24, 128], strides = [1, 1]} : vector<24x384xf32> to vector<24x128xf32>
    %73 = vector.extract_strided_slice %64 {offsets = [0, 128], sizes = [24, 128], strides = [1, 1]} : vector<24x384xf32> to vector<24x128xf32>
    %74 = vector.extract_strided_slice %64 {offsets = [0, 256], sizes = [24, 128], strides = [1, 1]} : vector<24x384xf32> to vector<24x128xf32>
    %75 = vector.extract_strided_slice %69 {offsets = [0, 0], sizes = [8, 128], strides = [1, 1]} : vector<8x256xf32> to vector<8x128xf32>
    %76 = vector.extract_strided_slice %69 {offsets = [0, 128], sizes = [8, 128], strides = [1, 1]} : vector<8x256xf32> to vector<8x128xf32>
    %cst_61 = arith.constant dense<0.000000e+00> : vector<16x128xf32>
    %77 = tpu.matmul %0, %70, %cst_61 {dimension_numbers = #tpu.dot_dimension_numbers<[1], [0], [0], [1], [0, 0, 1, 1], [], []>} : vector<16x16xf32>, vector<16x128xf32>, vector<16x128xf32> -> vector<16x128xf32>
    %cst_62 = arith.constant dense<0.000000e+00> : vector<16x128xf32>
    %78 = tpu.matmul %5, %72, %cst_62 {dimension_numbers = #tpu.dot_dimension_numbers<[1], [0], [0], [1], [0, 0, 1, 1], [], []>} : vector<16x24xf32>, vector<24x128xf32>, vector<16x128xf32> -> vector<16x128xf32>
    %79 = arith.addf %77, %78 : vector<16x128xf32>
    %cst_63 = arith.constant 0.000000e+00 : f32
    %80 = vector.broadcast %cst_63 : f32 to vector<16x128xf32>
    %81 = arith.maximumf %79, %80 : vector<16x128xf32>
    %cst_64 = arith.constant 5.000000e-01 : f32
    %82 = vector.broadcast %cst_64 : f32 to vector<16x128xf32>
    %83 = arith.mulf %82, %81 : vector<16x128xf32>
    %cst_65 = arith.constant dense<0.000000e+00> : vector<24x128xf32>
    %84 = tpu.matmul %1, %73, %cst_65 {dimension_numbers = #tpu.dot_dimension_numbers<[1], [0], [0], [1], [0, 0, 1, 1], [], []>} : vector<24x24xf32>, vector<24x128xf32>, vector<24x128xf32> -> vector<24x128xf32>
    %cst_66 = arith.constant dense<0.000000e+00> : vector<24x128xf32>
    %85 = tpu.matmul %4, %71, %cst_66 {dimension_numbers = #tpu.dot_dimension_numbers<[1], [0], [0], [1], [0, 0, 1, 1], [], []>} : vector<24x16xf32>, vector<16x128xf32>, vector<24x128xf32> -> vector<24x128xf32>
    %86 = arith.addf %84, %85 : vector<24x128xf32>
    %cst_67 = arith.constant dense<0.000000e+00> : vector<24x128xf32>
    %87 = tpu.matmul %3, %76, %cst_67 {dimension_numbers = #tpu.dot_dimension_numbers<[1], [0], [0], [1], [0, 0, 1, 1], [], []>} : vector<24x8xf32>, vector<8x128xf32>, vector<24x128xf32> -> vector<24x128xf32>
    %88 = arith.addf %86, %87 : vector<24x128xf32>
    %cst_68 = arith.constant 0.000000e+00 : f32
    %89 = vector.broadcast %cst_68 : f32 to vector<24x128xf32>
    %90 = arith.maximumf %88, %89 : vector<24x128xf32>
    %cst_69 = arith.constant 0.333333343 : f32
    %91 = vector.broadcast %cst_69 : f32 to vector<24x128xf32>
    %92 = arith.mulf %91, %90 : vector<24x128xf32>
    %cst_70 = arith.constant dense<0.000000e+00> : vector<8x128xf32>
    %93 = tpu.matmul %2, %75, %cst_70 {dimension_numbers = #tpu.dot_dimension_numbers<[1], [0], [0], [1], [0, 0, 1, 1], [], []>} : vector<8x8xf32>, vector<8x128xf32>, vector<8x128xf32> -> vector<8x128xf32>
    %cst_71 = arith.constant dense<0.000000e+00> : vector<8x128xf32>
    %94 = tpu.matmul %6, %74, %cst_71 {dimension_numbers = #tpu.dot_dimension_numbers<[1], [0], [0], [1], [0, 0, 1, 1], [], []>} : vector<8x24xf32>, vector<24x128xf32>, vector<8x128xf32> -> vector<8x128xf32>
    %95 = arith.addf %93, %94 : vector<8x128xf32>
    %cst_72 = arith.constant 0.000000e+00 : f32
    %96 = vector.broadcast %cst_72 : f32 to vector<8x128xf32>
    %97 = arith.maximumf %95, %96 : vector<8x128xf32>
    %cst_73 = arith.constant 5.000000e-01 : f32
    %98 = vector.broadcast %cst_73 : f32 to vector<8x128xf32>
    %99 = arith.mulf %98, %97 : vector<8x128xf32>
    %c0_74 = arith.constant 0 : index
    %c0_75 = arith.constant 0 : index
    %100 = vector.load %arg25[%c0_74, %c0_75] : memref<128x256xf32, #tpu.memory_space<vmem>>, vector<128x256xf32>
    %cst_76 = arith.constant dense<0.000000e+00> : vector<16x256xf32>
    %101 = tpu.matmul %83, %100, %cst_76 {dimension_numbers = #tpu.dot_dimension_numbers<[1], [0], [0], [1], [0, 0, 1, 1], [], []>} : vector<16x128xf32>, vector<128x256xf32>, vector<16x256xf32> -> vector<16x256xf32>
    %c0_77 = arith.constant 0 : index
    %c0_78 = arith.constant 0 : index
    %102 = vector.load %arg26[%c0_77, %c0_78] : memref<1x256xf32, #tpu.memory_space<vmem>>, vector<1x256xf32>
    %103 = vector.broadcast %102 : vector<1x256xf32> to vector<16x256xf32>
    %104 = arith.addf %101, %103 : vector<16x256xf32>
    %c0_79 = arith.constant 0 : index
    %c0_80 = arith.constant 0 : index
    %105 = vector.load %arg27[%c0_79, %c0_80] : memref<128x384xf32, #tpu.memory_space<vmem>>, vector<128x384xf32>
    %cst_81 = arith.constant dense<0.000000e+00> : vector<24x384xf32>
    %106 = tpu.matmul %92, %105, %cst_81 {dimension_numbers = #tpu.dot_dimension_numbers<[1], [0], [0], [1], [0, 0, 1, 1], [], []>} : vector<24x128xf32>, vector<128x384xf32>, vector<24x384xf32> -> vector<24x384xf32>
    %c0_82 = arith.constant 0 : index
    %c0_83 = arith.constant 0 : index
    %107 = vector.load %arg28[%c0_82, %c0_83] : memref<1x384xf32, #tpu.memory_space<vmem>>, vector<1x384xf32>
    %108 = vector.broadcast %107 : vector<1x384xf32> to vector<24x384xf32>
    %109 = arith.addf %106, %108 : vector<24x384xf32>
    %c0_84 = arith.constant 0 : index
    %c0_85 = arith.constant 0 : index
    %110 = vector.load %arg29[%c0_84, %c0_85] : memref<128x256xf32, #tpu.memory_space<vmem>>, vector<128x256xf32>
    %cst_86 = arith.constant dense<0.000000e+00> : vector<8x256xf32>
    %111 = tpu.matmul %99, %110, %cst_86 {dimension_numbers = #tpu.dot_dimension_numbers<[1], [0], [0], [1], [0, 0, 1, 1], [], []>} : vector<8x128xf32>, vector<128x256xf32>, vector<8x256xf32> -> vector<8x256xf32>
    %c0_87 = arith.constant 0 : index
    %c0_88 = arith.constant 0 : index
    %112 = vector.load %arg30[%c0_87, %c0_88] : memref<1x256xf32, #tpu.memory_space<vmem>>, vector<1x256xf32>
    %113 = vector.broadcast %112 : vector<1x256xf32> to vector<8x256xf32>
    %114 = arith.addf %111, %113 : vector<8x256xf32>
    %115 = vector.extract_strided_slice %104 {offsets = [0, 0], sizes = [16, 128], strides = [1, 1]} : vector<16x256xf32> to vector<16x128xf32>
    %116 = vector.extract_strided_slice %104 {offsets = [0, 128], sizes = [16, 128], strides = [1, 1]} : vector<16x256xf32> to vector<16x128xf32>
    %117 = vector.extract_strided_slice %109 {offsets = [0, 0], sizes = [24, 128], strides = [1, 1]} : vector<24x384xf32> to vector<24x128xf32>
    %118 = vector.extract_strided_slice %109 {offsets = [0, 128], sizes = [24, 128], strides = [1, 1]} : vector<24x384xf32> to vector<24x128xf32>
    %119 = vector.extract_strided_slice %109 {offsets = [0, 256], sizes = [24, 128], strides = [1, 1]} : vector<24x384xf32> to vector<24x128xf32>
    %120 = vector.extract_strided_slice %114 {offsets = [0, 0], sizes = [8, 128], strides = [1, 1]} : vector<8x256xf32> to vector<8x128xf32>
    %121 = vector.extract_strided_slice %114 {offsets = [0, 128], sizes = [8, 128], strides = [1, 1]} : vector<8x256xf32> to vector<8x128xf32>
    %cst_89 = arith.constant dense<0.000000e+00> : vector<16x128xf32>
    %122 = tpu.matmul %0, %115, %cst_89 {dimension_numbers = #tpu.dot_dimension_numbers<[1], [0], [0], [1], [0, 0, 1, 1], [], []>} : vector<16x16xf32>, vector<16x128xf32>, vector<16x128xf32> -> vector<16x128xf32>
    %cst_90 = arith.constant dense<0.000000e+00> : vector<16x128xf32>
    %123 = tpu.matmul %5, %117, %cst_90 {dimension_numbers = #tpu.dot_dimension_numbers<[1], [0], [0], [1], [0, 0, 1, 1], [], []>} : vector<16x24xf32>, vector<24x128xf32>, vector<16x128xf32> -> vector<16x128xf32>
    %124 = arith.addf %122, %123 : vector<16x128xf32>
    %cst_91 = arith.constant 0.000000e+00 : f32
    %125 = vector.broadcast %cst_91 : f32 to vector<16x128xf32>
    %126 = arith.maximumf %124, %125 : vector<16x128xf32>
    %cst_92 = arith.constant 5.000000e-01 : f32
    %127 = vector.broadcast %cst_92 : f32 to vector<16x128xf32>
    %128 = arith.mulf %127, %126 : vector<16x128xf32>
    %cst_93 = arith.constant dense<0.000000e+00> : vector<24x128xf32>
    %129 = tpu.matmul %1, %118, %cst_93 {dimension_numbers = #tpu.dot_dimension_numbers<[1], [0], [0], [1], [0, 0, 1, 1], [], []>} : vector<24x24xf32>, vector<24x128xf32>, vector<24x128xf32> -> vector<24x128xf32>
    %cst_94 = arith.constant dense<0.000000e+00> : vector<24x128xf32>
    %130 = tpu.matmul %4, %116, %cst_94 {dimension_numbers = #tpu.dot_dimension_numbers<[1], [0], [0], [1], [0, 0, 1, 1], [], []>} : vector<24x16xf32>, vector<16x128xf32>, vector<24x128xf32> -> vector<24x128xf32>
    %131 = arith.addf %129, %130 : vector<24x128xf32>
    %cst_95 = arith.constant dense<0.000000e+00> : vector<24x128xf32>
    %132 = tpu.matmul %3, %121, %cst_95 {dimension_numbers = #tpu.dot_dimension_numbers<[1], [0], [0], [1], [0, 0, 1, 1], [], []>} : vector<24x8xf32>, vector<8x128xf32>, vector<24x128xf32> -> vector<24x128xf32>
    %133 = arith.addf %131, %132 : vector<24x128xf32>
    %cst_96 = arith.constant 0.000000e+00 : f32
    %134 = vector.broadcast %cst_96 : f32 to vector<24x128xf32>
    %135 = arith.maximumf %133, %134 : vector<24x128xf32>
    %cst_97 = arith.constant 0.333333343 : f32
    %136 = vector.broadcast %cst_97 : f32 to vector<24x128xf32>
    %137 = arith.mulf %136, %135 : vector<24x128xf32>
    %cst_98 = arith.constant dense<0.000000e+00> : vector<8x128xf32>
    %138 = tpu.matmul %2, %120, %cst_98 {dimension_numbers = #tpu.dot_dimension_numbers<[1], [0], [0], [1], [0, 0, 1, 1], [], []>} : vector<8x8xf32>, vector<8x128xf32>, vector<8x128xf32> -> vector<8x128xf32>
    %cst_99 = arith.constant dense<0.000000e+00> : vector<8x128xf32>
    %139 = tpu.matmul %6, %119, %cst_99 {dimension_numbers = #tpu.dot_dimension_numbers<[1], [0], [0], [1], [0, 0, 1, 1], [], []>} : vector<8x24xf32>, vector<24x128xf32>, vector<8x128xf32> -> vector<8x128xf32>
    %140 = arith.addf %138, %139 : vector<8x128xf32>
    %cst_100 = arith.constant 0.000000e+00 : f32
    %141 = vector.broadcast %cst_100 : f32 to vector<8x128xf32>
    %142 = arith.maximumf %140, %141 : vector<8x128xf32>
    %cst_101 = arith.constant 5.000000e-01 : f32
    %143 = vector.broadcast %cst_101 : f32 to vector<8x128xf32>
    %144 = arith.mulf %143, %142 : vector<8x128xf32>
    %c0_102 = arith.constant 0 : index
    %c0_103 = arith.constant 0 : index
    %145 = vector.load %arg31[%c0_102, %c0_103] : memref<128x10xf32, #tpu.memory_space<vmem>>, vector<128x10xf32>
    %cst_104 = arith.constant dense<0.000000e+00> : vector<16x10xf32>
    %146 = tpu.matmul %38, %145, %cst_104 {dimension_numbers = #tpu.dot_dimension_numbers<[1], [0], [0], [1], [0, 0, 1, 1], [], []>} : vector<16x128xf32>, vector<128x10xf32>, vector<16x10xf32> -> vector<16x10xf32>
    %c0_105 = arith.constant 0 : index
    %c0_106 = arith.constant 0 : index
    %147 = vector.load %arg32[%c0_105, %c0_106] : memref<128x10xf32, #tpu.memory_space<vmem>>, vector<128x10xf32>
    %cst_107 = arith.constant dense<0.000000e+00> : vector<16x10xf32>
    %148 = tpu.matmul %83, %147, %cst_107 {dimension_numbers = #tpu.dot_dimension_numbers<[1], [0], [0], [1], [0, 0, 1, 1], [], []>} : vector<16x128xf32>, vector<128x10xf32>, vector<16x10xf32> -> vector<16x10xf32>
    %149 = arith.addf %146, %148 : vector<16x10xf32>
    %c0_108 = arith.constant 0 : index
    %c0_109 = arith.constant 0 : index
    %150 = vector.load %arg33[%c0_108, %c0_109] : memref<128x10xf32, #tpu.memory_space<vmem>>, vector<128x10xf32>
    %cst_110 = arith.constant dense<0.000000e+00> : vector<16x10xf32>
    %151 = tpu.matmul %128, %150, %cst_110 {dimension_numbers = #tpu.dot_dimension_numbers<[1], [0], [0], [1], [0, 0, 1, 1], [], []>} : vector<16x128xf32>, vector<128x10xf32>, vector<16x10xf32> -> vector<16x10xf32>
    %152 = arith.addf %149, %151 : vector<16x10xf32>
    %c0_111 = arith.constant 0 : index
    %c0_112 = arith.constant 0 : index
    %153 = vector.load %arg34[%c0_111, %c0_112] : memref<1x10xf32, #tpu.memory_space<vmem>>, vector<1x10xf32>
    %154 = vector.broadcast %153 : vector<1x10xf32> to vector<16x10xf32>
    %155 = arith.addf %152, %154 : vector<16x10xf32>
    %c0_113 = arith.constant 0 : index
    %c0_114 = arith.constant 0 : index
    %156 = vector.load %arg35[%c0_113, %c0_114] : memref<128x10xf32, #tpu.memory_space<vmem>>, vector<128x10xf32>
    %cst_115 = arith.constant dense<0.000000e+00> : vector<24x10xf32>
    %157 = tpu.matmul %47, %156, %cst_115 {dimension_numbers = #tpu.dot_dimension_numbers<[1], [0], [0], [1], [0, 0, 1, 1], [], []>} : vector<24x128xf32>, vector<128x10xf32>, vector<24x10xf32> -> vector<24x10xf32>
    %c0_116 = arith.constant 0 : index
    %c0_117 = arith.constant 0 : index
    %158 = vector.load %arg36[%c0_116, %c0_117] : memref<128x10xf32, #tpu.memory_space<vmem>>, vector<128x10xf32>
    %cst_118 = arith.constant dense<0.000000e+00> : vector<24x10xf32>
    %159 = tpu.matmul %92, %158, %cst_118 {dimension_numbers = #tpu.dot_dimension_numbers<[1], [0], [0], [1], [0, 0, 1, 1], [], []>} : vector<24x128xf32>, vector<128x10xf32>, vector<24x10xf32> -> vector<24x10xf32>
    %160 = arith.addf %157, %159 : vector<24x10xf32>
    %c0_119 = arith.constant 0 : index
    %c0_120 = arith.constant 0 : index
    %161 = vector.load %arg37[%c0_119, %c0_120] : memref<128x10xf32, #tpu.memory_space<vmem>>, vector<128x10xf32>
    %cst_121 = arith.constant dense<0.000000e+00> : vector<24x10xf32>
    %162 = tpu.matmul %137, %161, %cst_121 {dimension_numbers = #tpu.dot_dimension_numbers<[1], [0], [0], [1], [0, 0, 1, 1], [], []>} : vector<24x128xf32>, vector<128x10xf32>, vector<24x10xf32> -> vector<24x10xf32>
    %163 = arith.addf %160, %162 : vector<24x10xf32>
    %c0_122 = arith.constant 0 : index
    %c0_123 = arith.constant 0 : index
    %164 = vector.load %arg38[%c0_122, %c0_123] : memref<1x10xf32, #tpu.memory_space<vmem>>, vector<1x10xf32>
    %165 = vector.broadcast %164 : vector<1x10xf32> to vector<24x10xf32>
    %166 = arith.addf %163, %165 : vector<24x10xf32>
    %c0_124 = arith.constant 0 : index
    %c0_125 = arith.constant 0 : index
    %167 = vector.load %arg39[%c0_124, %c0_125] : memref<128x10xf32, #tpu.memory_space<vmem>>, vector<128x10xf32>
    %cst_126 = arith.constant dense<0.000000e+00> : vector<8x10xf32>
    %168 = tpu.matmul %54, %167, %cst_126 {dimension_numbers = #tpu.dot_dimension_numbers<[1], [0], [0], [1], [0, 0, 1, 1], [], []>} : vector<8x128xf32>, vector<128x10xf32>, vector<8x10xf32> -> vector<8x10xf32>
    %c0_127 = arith.constant 0 : index
    %c0_128 = arith.constant 0 : index
    %169 = vector.load %arg40[%c0_127, %c0_128] : memref<128x10xf32, #tpu.memory_space<vmem>>, vector<128x10xf32>
    %cst_129 = arith.constant dense<0.000000e+00> : vector<8x10xf32>
    %170 = tpu.matmul %99, %169, %cst_129 {dimension_numbers = #tpu.dot_dimension_numbers<[1], [0], [0], [1], [0, 0, 1, 1], [], []>} : vector<8x128xf32>, vector<128x10xf32>, vector<8x10xf32> -> vector<8x10xf32>
    %171 = arith.addf %168, %170 : vector<8x10xf32>
    %c0_130 = arith.constant 0 : index
    %c0_131 = arith.constant 0 : index
    %172 = vector.load %arg41[%c0_130, %c0_131] : memref<128x10xf32, #tpu.memory_space<vmem>>, vector<128x10xf32>
    %cst_132 = arith.constant dense<0.000000e+00> : vector<8x10xf32>
    %173 = tpu.matmul %144, %172, %cst_132 {dimension_numbers = #tpu.dot_dimension_numbers<[1], [0], [0], [1], [0, 0, 1, 1], [], []>} : vector<8x128xf32>, vector<128x10xf32>, vector<8x10xf32> -> vector<8x10xf32>
    %174 = arith.addf %171, %173 : vector<8x10xf32>
    %c0_133 = arith.constant 0 : index
    %c0_134 = arith.constant 0 : index
    %175 = vector.load %arg42[%c0_133, %c0_134] : memref<1x10xf32, #tpu.memory_space<vmem>>, vector<1x10xf32>
    %176 = vector.broadcast %175 : vector<1x10xf32> to vector<8x10xf32>
    %177 = arith.addf %174, %176 : vector<8x10xf32>
    %c0_135 = arith.constant 0 : index
    %c0_136 = arith.constant 0 : index
    %178 = vector.load %arg10[%c0_135, %c0_136] : memref<2x16xf32, #tpu.memory_space<vmem>>, vector<2x16xf32>
    %cst_137 = arith.constant dense<0.000000e+00> : vector<2x10xf32>
    %179 = tpu.matmul %178, %155, %cst_137 {dimension_numbers = #tpu.dot_dimension_numbers<[1], [0], [0], [1], [0, 0, 1, 1], [], []>} : vector<2x16xf32>, vector<16x10xf32>, vector<2x10xf32> -> vector<2x10xf32>
    %c0_138 = arith.constant 0 : index
    %c0_139 = arith.constant 0 : index
    %180 = vector.load %arg11[%c0_138, %c0_139] : memref<2x24xf32, #tpu.memory_space<vmem>>, vector<2x24xf32>
    %cst_140 = arith.constant dense<0.000000e+00> : vector<2x10xf32>
    %181 = tpu.matmul %180, %166, %cst_140 {dimension_numbers = #tpu.dot_dimension_numbers<[1], [0], [0], [1], [0, 0, 1, 1], [], []>} : vector<2x24xf32>, vector<24x10xf32>, vector<2x10xf32> -> vector<2x10xf32>
    %c0_141 = arith.constant 0 : index
    %c0_142 = arith.constant 0 : index
    %182 = vector.load %arg12[%c0_141, %c0_142] : memref<2x8xf32, #tpu.memory_space<vmem>>, vector<2x8xf32>
    %cst_143 = arith.constant dense<0.000000e+00> : vector<2x10xf32>
    %183 = tpu.matmul %182, %177, %cst_143 {dimension_numbers = #tpu.dot_dimension_numbers<[1], [0], [0], [1], [0, 0, 1, 1], [], []>} : vector<2x8xf32>, vector<8x10xf32>, vector<2x10xf32> -> vector<2x10xf32>
    %c0_144 = arith.constant 0 : index
    %c0_145 = arith.constant 0 : index
    %184 = vector.load %arg43[%c0_144, %c0_145] : memref<10x10xf32, #tpu.memory_space<vmem>>, vector<10x10xf32>
    %cst_146 = arith.constant dense<0.000000e+00> : vector<2x10xf32>
    %185 = tpu.matmul %179, %184, %cst_146 {dimension_numbers = #tpu.dot_dimension_numbers<[1], [0], [0], [1], [0, 0, 1, 1], [], []>} : vector<2x10xf32>, vector<10x10xf32>, vector<2x10xf32> -> vector<2x10xf32>
    %c0_147 = arith.constant 0 : index
    %c0_148 = arith.constant 0 : index
    %186 = vector.load %arg44[%c0_147, %c0_148] : memref<10x10xf32, #tpu.memory_space<vmem>>, vector<10x10xf32>
    %cst_149 = arith.constant dense<0.000000e+00> : vector<2x10xf32>
    %187 = tpu.matmul %181, %186, %cst_149 {dimension_numbers = #tpu.dot_dimension_numbers<[1], [0], [0], [1], [0, 0, 1, 1], [], []>} : vector<2x10xf32>, vector<10x10xf32>, vector<2x10xf32> -> vector<2x10xf32>
    %188 = arith.addf %185, %187 : vector<2x10xf32>
    %c0_150 = arith.constant 0 : index
    %c0_151 = arith.constant 0 : index
    %189 = vector.load %arg45[%c0_150, %c0_151] : memref<10x10xf32, #tpu.memory_space<vmem>>, vector<10x10xf32>
    %cst_152 = arith.constant dense<0.000000e+00> : vector<2x10xf32>
    %190 = tpu.matmul %183, %189, %cst_152 {dimension_numbers = #tpu.dot_dimension_numbers<[1], [0], [0], [1], [0, 0, 1, 1], [], []>} : vector<2x10xf32>, vector<10x10xf32>, vector<2x10xf32> -> vector<2x10xf32>
    %191 = arith.addf %188, %190 : vector<2x10xf32>
    %c0_153 = arith.constant 0 : index
    %c0_154 = arith.constant 0 : index
    %192 = vector.load %arg46[%c0_153, %c0_154] : memref<1x10xf32, #tpu.memory_space<vmem>>, vector<1x10xf32>
    %193 = vector.broadcast %192 : vector<1x10xf32> to vector<2x10xf32>
    %194 = arith.addf %191, %193 : vector<2x10xf32>
    %cst_155 = arith.constant dense<0xFF800000> : vector<2xf32>
    %195 = vector.multi_reduction <maximumf>, %194, %cst_155 [1] : vector<2x10xf32> to vector<2xf32>
    %196 = vector.shape_cast %195 : vector<2xf32> to vector<2x1xf32>
    %197 = vector.broadcast %196 : vector<2x1xf32> to vector<2x10xf32>
    %198 = arith.subf %194, %197 : vector<2x10xf32>
    %199 = math.exp %198 : vector<2x10xf32>
    %cst_156 = arith.constant dense<0.000000e+00> : vector<2xf32>
    %200 = vector.multi_reduction <add>, %199, %cst_156 [1] : vector<2x10xf32> to vector<2xf32>
    %201 = vector.shape_cast %200 : vector<2xf32> to vector<2x1xf32>
    %202 = vector.broadcast %201 : vector<2x1xf32> to vector<2x10xf32>
    %203 = arith.divf %199, %202 : vector<2x10xf32>
    %c0_157 = arith.constant 0 : index
    %c0_158 = arith.constant 0 : index
    %204 = vector.load %arg47[%c0_157, %c0_158] : memref<2x10xf32, #tpu.memory_space<vmem>>, vector<2x10xf32>
    tpu.vector_store %arg47[%c0_157, %c0_158], %203 {strides = array<i32>} : memref<2x10xf32, #tpu.memory_space<vmem>>, vector<2x10xf32>,
    return
  }
}

</mosaic_0001>

<llo_original>
// kernel: superpixel_scconv.1
$region0: #{superpixel_scconv.1}
  #allocation0 [shape = 'u32[]', space=smem, size = 0x4, offset = 0x4, fixed_abs, tag = 'smem constant byte address 0x4 - core index']
  #allocation1 [shape = 'u32[144,128]{1,0:T(1,128)}', space=vmem, size = 0x12000, scoped, tag = 'internal scratch']
  %s0 = inlined_call_operand.smem [shape: u32[48], index: -1, kind: input, shape index: {}]
  %s1 = sld [smem:[%s0]]
  %s2 = scalar_lea.smem %s0, 1
  %s3 = sld [smem:[%s2]]
  %s4 = scalar_lea.smem %s0, 2
  %s5 = sld [smem:[%s4]]
  %s6 = scalar_lea.smem %s0, 3
  %s7 = sld [smem:[%s6]]
  %s8 = scalar_lea.smem %s0, 4
  %s9 = sld [smem:[%s8]]
  %s10 = scalar_lea.smem %s0, 5
  %s11 = sld [smem:[%s10]]
  %s12 = scalar_lea.smem %s0, 6
  %s13 = sld [smem:[%s12]]
  %s14 = scalar_lea.smem %s0, 7
  %s15 = sld [smem:[%s14]]
  %s16 = scalar_lea.smem %s0, 8
  %s17 = sld [smem:[%s16]]
  %s18 = scalar_lea.smem %s0, 9
  %s19 = sld [smem:[%s18]]
  %s20 = scalar_lea.smem %s0, 10
  %s21 = sld [smem:[%s20]]
  %s22 = scalar_lea.smem %s0, 11
  %s23 = sld [smem:[%s22]]
  %s24 = scalar_lea.smem %s0, 12
  %s25 = sld [smem:[%s24]]
  %s26 = scalar_lea.smem %s0, 13
  %s27 = sld [smem:[%s26]]
  %s28 = scalar_lea.smem %s0, 14
  %s29 = sld [smem:[%s28]]
  %s30 = scalar_lea.smem %s0, 15
  %s31 = sld [smem:[%s30]]
  %s32 = scalar_lea.smem %s0, 16
  %s33 = sld [smem:[%s32]]
  %s34 = scalar_lea.smem %s0, 17
  %s35 = sld [smem:[%s34]]
  %s36 = scalar_lea.smem %s0, 18
  %s37 = sld [smem:[%s36]]
  %s38 = scalar_lea.smem %s0, 19
  %s39 = sld [smem:[%s38]]
  %s40 = scalar_lea.smem %s0, 20
  %s41 = sld [smem:[%s40]]
  %s42 = scalar_lea.smem %s0, 21
  %s43 = sld [smem:[%s42]]
  %s44 = scalar_lea.smem %s0, 22
  %s45 = sld [smem:[%s44]]
  %s46 = scalar_lea.smem %s0, 23
  %s47 = sld [smem:[%s46]]
  %s48 = scalar_lea.smem %s0, 24
  %s49 = sld [smem:[%s48]]
  %s50 = scalar_lea.smem %s0, 25
  %s51 = sld [smem:[%s50]]
  %s52 = scalar_lea.smem %s0, 26
  %s53 = sld [smem:[%s52]]
  %s54 = scalar_lea.smem %s0, 27
  %s55 = sld [smem:[%s54]]
  %s56 = scalar_lea.smem %s0, 28
  %s57 = sld [smem:[%s56]]
  %s58 = scalar_lea.smem %s0, 29
  %s59 = sld [smem:[%s58]]
  %s60 = scalar_lea.smem %s0, 30
  %s61 = sld [smem:[%s60]]
  %s62 = scalar_lea.smem %s0, 31
  %s63 = sld [smem:[%s62]]
  %s64 = scalar_lea.smem %s0, 32
  %s65 = sld [smem:[%s64]]
  %s66 = scalar_lea.smem %s0, 33
  %s67 = sld [smem:[%s66]]
  %s68 = scalar_lea.smem %s0, 34
  %s69 = sld [smem:[%s68]]
  %s70 = scalar_lea.smem %s0, 35
  %s71 = sld [smem:[%s70]]
  %s72 = scalar_lea.smem %s0, 36
  %s73 = sld [smem:[%s72]]
  %s74 = scalar_lea.smem %s0, 37
  %s75 = sld [smem:[%s74]]
  %s76 = scalar_lea.smem %s0, 38
  %s77 = sld [smem:[%s76]]
  %s78 = scalar_lea.smem %s0, 39
  %s79 = sld [smem:[%s78]]
  %s80 = scalar_lea.smem %s0, 40
  %s81 = sld [smem:[%s80]]
  %s82 = scalar_lea.smem %s0, 41
  %s83 = sld [smem:[%s82]]
  %s84 = scalar_lea.smem %s0, 42
  %s85 = sld [smem:[%s84]]
  %s86 = scalar_lea.smem %s0, 43
  %s87 = sld [smem:[%s86]]
  %s88 = scalar_lea.smem %s0, 44
  %s89 = sld [smem:[%s88]]
  %s90 = scalar_lea.smem %s0, 45
  %s91 = sld [smem:[%s90]]
  %s92 = scalar_lea.smem %s0, 46
  %s93 = sld [smem:[%s92]]
  %s94 = scalar_lea.smem %s0, 47
  %s95 = sld [smem:[%s94]]
  %s96 = sld [smem:[#allocation0]]
  $region286: #{superpixel_scconv.1} parent=0
    _
  %s98 = ssub.s32 1, %s96
  %s99 = scalar_select 0, %s98, %s96
  $region1: #{superpixel_scconv.1} parent=0
    #allocation2 [shape = 'u8[4096]{0}', space=vmem, size = 0x1000, scoped, tag = 'input window, operand 5, single buffered']
    #allocation3 [shape = 's32[1]{0}', space=sflag, size = 0x4, scoped, tag = 'scoped memory for superpixel_scconv.1']
    #allocation4 [shape = 's32[1]{0}', space=sflag, size = 0x4, scoped, tag = 'scoped memory for superpixel_scconv.1']
    #allocation5 [shape = 'u8[4096]{0}', space=vmem, size = 0x1000, scoped, tag = 'input window, operand 9, single buffered']
    #allocation6 [shape = 's32[1]{0}', space=sflag, size = 0x4, scoped, tag = 'scoped memory for superpixel_scconv.1']
    #allocation7 [shape = 'u8[4096]{0}', space=vmem, size = 0x1000, scoped, tag = 'input window, operand 13, single buffered']
    #allocation8 [shape = 'u8[1024]{0}', space=vmem, size = 0x400, scoped, tag = 'input window, operand 14, single buffered']
    #allocation9 [shape = 's32[1]{0}', space=sflag, size = 0x4, scoped, tag = 'scoped memory for superpixel_scconv.1']
    #allocation10 [shape = 'u8[6144]{0}', space=vmem, size = 0x1800, scoped, tag = 'input window, operand 15, single buffered']
    #allocation11 [shape = 'u8[1536]{0}', space=vmem, size = 0x800, scoped, tag = 'input window, operand 16, single buffered']
    #allocation12 [shape = 's32[1]{0}', space=sflag, size = 0x4, scoped, tag = 'scoped memory for superpixel_scconv.1']
    #allocation13 [shape = 'u8[8192]{0}', space=vmem, size = 0x2000, scoped, tag = 'input window, operand 17, single buffered']
    #allocation14 [shape = 'u8[1024]{0}', space=vmem, size = 0x400, scoped, tag = 'input window, operand 18, single buffered']
    #allocation15 [shape = 's32[1]{0}', space=sflag, size = 0x4, scoped, tag = 'scoped memory for superpixel_scconv.1']
    #allocation16 [shape = 'u8[1024]{0}', space=vmem, size = 0x400, scoped, tag = 'input window, operand 20, single buffered']
    #allocation17 [shape = 'u8[1536]{0}', space=vmem, size = 0x800, scoped, tag = 'input window, operand 22, single buffered']
    #allocation18 [shape = 's32[1]{0}', space=sflag, size = 0x4, scoped, tag = 'scoped memory for superpixel_scconv.1']
    #allocation19 [shape = 'u8[1024]{0}', space=vmem, size = 0x400, scoped, tag = 'input window, operand 24, single buffered']
    #allocation20 [shape = 'u8[131072]{0}', space=vmem, size = 0x20000, scoped, tag = 'input window, operand 25, single buffered']
    #allocation21 [shape = 's32[1]{0}', space=sflag, size = 0x4, scoped, tag = 'scoped memory for superpixel_scconv.1']
    #allocation22 [shape = 'u8[1024]{0}', space=vmem, size = 0x400, scoped, tag = 'input window, operand 26, single buffered']
    #allocation23 [shape = 'u8[1536]{0}', space=vmem, size = 0x800, scoped, tag = 'input window, operand 28, single buffered']
    #allocation24 [shape = 's32[1]{0}', space=sflag, size = 0x4, scoped, tag = 'scoped memory for superpixel_scconv.1']
    #allocation25 [shape = 'u8[1024]{0}', space=vmem, size = 0x400, scoped, tag = 'input window, operand 30, single buffered']
    #allocation26 [shape = 'u8[512]{0}', space=vmem, size = 0x400, scoped, tag = 'input window, operand 34, single buffered']
    #allocation27 [shape = 's32[1]{0}', space=sflag, size = 0x4, scoped, tag = 'scoped memory for superpixel_scconv.1']
    #allocation28 [shape = 'u8[512]{0}', space=vmem, size = 0x400, scoped, tag = 'input window, operand 38, single buffered']
    #allocation29 [shape = 'u8[512]{0}', space=vmem, size = 0x400, scoped, tag = 'input window, operand 42, single buffered']
    #allocation30 [shape = 's32[1]{0}', space=sflag, size = 0x4, scoped, tag = 'scoped memory for superpixel_scconv.1']
    #allocation31 [shape = 'u8[8192]{0}', space=vmem, size = 0x2000, scoped, tag = 'input window, operand 43, single buffered']
    #allocation32 [shape = 'u8[8192]{0}', space=vmem, size = 0x2000, scoped, tag = 'input window, operand 44, single buffered']
    #allocation33 [shape = 's32[1]{0}', space=sflag, size = 0x4, scoped, tag = 'scoped memory for superpixel_scconv.1']
    #allocation34 [shape = 'u8[8192]{0}', space=vmem, size = 0x2000, scoped, tag = 'input window, operand 45, single buffered']
    #allocation35 [shape = 'u8[512]{0}', space=vmem, size = 0x400, scoped, tag = 'input window, operand 46, single buffered']
    #allocation36 [shape = 's32[1]{0}', space=sflag, size = 0x4, scoped, tag = 'scoped memory for superpixel_scconv.1']
    #allocation37 [shape = 'u8[1024]{0}', space=vmem, size = 0x400, scoped, tag = 'output window, operand 0, single buffered']
    %100 = vsyncpa [#allocation3], 0
    %101 = vsyncpa [#allocation6], 0
    %102 = vsyncpa [#allocation9], 0
    %103 = vsyncpa [#allocation12], 0
    %104 = vsyncpa [#allocation15], 0
    %105 = vsyncpa [#allocation18], 0
    %106 = vsyncpa [#allocation21], 0
    %107 = vsyncpa [#allocation24], 0
    %108 = vsyncpa [#allocation27], 0
    %109 = vsyncpa [#allocation30], 0
    %110 = vsyncpa [#allocation33], 0
    %111 = vsyncpa [#allocation36], 0
    %112 = vsyncpa [#allocation4], 0
    // Predicated region
    $region2: #{superpixel_scconv.1} parent=1 // pred_check
      _
    $region3: #{superpixel_scconv.1} parent=1 // pred_check_branch
      %114 = sbr.rel (0) target = $region5
    $region4: #{superpixel_scconv.1} parent=1 // pred_region
      _
    $region5: #{superpixel_scconv.1} parent=1 // pred_fallthru
      _
    // Predicated region
    $region6: #{superpixel_scconv.1} parent=1 // pred_check
      _
    $region7: #{superpixel_scconv.1} parent=1 // pred_check_branch
      %116 = sbr.rel (0) target = $region9
    $region8: #{superpixel_scconv.1} parent=1 // pred_region
      _
    $region9: #{superpixel_scconv.1} parent=1 // pred_fallthru
      _
    // Predicated region
    $region10: #{superpixel_scconv.1} parent=1 // pred_check
      _
    $region11: #{superpixel_scconv.1} parent=1 // pred_check_branch
      %118 = sbr.rel (0) target = $region13
    $region12: #{superpixel_scconv.1} parent=1 // pred_region
      _
    $region13: #{superpixel_scconv.1} parent=1 // pred_fallthru
      _
    // Predicated region
    $region14: #{superpixel_scconv.1} parent=1 // pred_check
      _
    $region15: #{superpixel_scconv.1} parent=1 // pred_check_branch
      %120 = sbr.rel (0) target = $region17
    $region16: #{superpixel_scconv.1} parent=1 // pred_region
      _
    $region17: #{superpixel_scconv.1} parent=1 // pred_fallthru
      _
    // Predicated region
    $region18: #{superpixel_scconv.1} parent=1 // pred_check
      _
    $region19: #{superpixel_scconv.1} parent=1 // pred_check_branch
      %122 = sbr.rel (0) target = $region21
    $region20: #{superpixel_scconv.1} parent=1 // pred_region
      _
    $region21: #{superpixel_scconv.1} parent=1 // pred_fallthru
      _
    // Predicated region
    $region22: #{superpixel_scconv.1} parent=1 // pred_check
      _
    $region23: #{superpixel_scconv.1} parent=1 // pred_check_branch
      %124 = sbr.rel (0) target = $region25
    $region24: #{superpixel_scconv.1} parent=1 // pred_region
      %s126 = ssub.s32 128, 128
      %127 = vsyncadd [#allocation3], %s126
      %s129 = sshll.u32 [#allocation2], 4
      %s130 = int_to_ptr.vmem [resolvable:$true] %s129
      %132 = dma.hbm_to_vmem [thread:$0]  %s11, 128, %s130, [#allocation3]
    $region25: #{superpixel_scconv.1} parent=1 // pred_fallthru
      _
    // Predicated region
    $region26: #{superpixel_scconv.1} parent=1 // pred_check
      _
    $region27: #{superpixel_scconv.1} parent=1 // pred_check_branch
      %134 = sbr.rel (0) target = $region29
    $region28: #{superpixel_scconv.1} parent=1 // pred_region
      _
    $region29: #{superpixel_scconv.1} parent=1 // pred_fallthru
      _
    // Predicated region
    $region30: #{superpixel_scconv.1} parent=1 // pred_check
      _
    $region31: #{superpixel_scconv.1} parent=1 // pred_check_branch
      %136 = sbr.rel (0) target = $region33
    $region32: #{superpixel_scconv.1} parent=1 // pred_region
      _
    $region33: #{superpixel_scconv.1} parent=1 // pred_fallthru
      _
    // Predicated region
    $region34: #{superpixel_scconv.1} parent=1 // pred_check
      _
    $region35: #{superpixel_scconv.1} parent=1 // pred_check_branch
      %138 = sbr.rel (0) target = $region37
    $region36: #{superpixel_scconv.1} parent=1 // pred_region
      _
    $region37: #{superpixel_scconv.1} parent=1 // pred_fallthru
      _
    // Predicated region
    $region38: #{superpixel_scconv.1} parent=1 // pred_check
      _
    $region39: #{superpixel_scconv.1} parent=1 // pred_check_branch
      %140 = sbr.rel (0) target = $region41
    $region40: #{superpixel_scconv.1} parent=1 // pred_region
      %s142 = ssub.s32 128, 128
      %143 = vsyncadd [#allocation6], %s142
      %s145 = sshll.u32 [#allocation5], 4
      %s146 = int_to_ptr.vmem [resolvable:$true] %s145
      %148 = dma.hbm_to_vmem [thread:$0]  %s19, 128, %s146, [#allocation6]
    $region41: #{superpixel_scconv.1} parent=1 // pred_fallthru
      _
    // Predicated region
    $region42: #{superpixel_scconv.1} parent=1 // pred_check
      _
    $region43: #{superpixel_scconv.1} parent=1 // pred_check_branch
      %150 = sbr.rel (0) target = $region45
    $region44: #{superpixel_scconv.1} parent=1 // pred_region
      _
    $region45: #{superpixel_scconv.1} parent=1 // pred_fallthru
      _
    // Predicated region
    $region46: #{superpixel_scconv.1} parent=1 // pred_check
      _
    $region47: #{superpixel_scconv.1} parent=1 // pred_check_branch
      %152 = sbr.rel (0) target = $region49
    $region48: #{superpixel_scconv.1} parent=1 // pred_region
      _
    $region49: #{superpixel_scconv.1} parent=1 // pred_fallthru
      _
    // Predicated region
    $region50: #{superpixel_scconv.1} parent=1 // pred_check
      _
    $region51: #{superpixel_scconv.1} parent=1 // pred_check_branch
      %154 = sbr.rel (0) target = $region53
    $region52: #{superpixel_scconv.1} parent=1 // pred_region
      _
    $region53: #{superpixel_scconv.1} parent=1 // pred_fallthru
      _
    // Predicated region
    $region54: #{superpixel_scconv.1} parent=1 // pred_check
      _
    $region55: #{superpixel_scconv.1} parent=1 // pred_check_branch
      %156 = sbr.rel (0) target = $region57
    $region56: #{superpixel_scconv.1} parent=1 // pred_region
      %s158 = ssub.s32 128, 128
      %159 = vsyncadd [#allocation6], %s158
      %s161 = sshll.u32 [#allocation7], 4
      %s162 = int_to_ptr.vmem [resolvable:$true] %s161
      %164 = dma.hbm_to_vmem [thread:$0]  %s27, 128, %s162, [#allocation6]
    $region57: #{superpixel_scconv.1} parent=1 // pred_fallthru
      _
    // Predicated region
    $region58: #{superpixel_scconv.1} parent=1 // pred_check
      _
    $region59: #{superpixel_scconv.1} parent=1 // pred_check_branch
      %166 = sbr.rel (0) target = $region61
    $region60: #{superpixel_scconv.1} parent=1 // pred_region
      %s168 = ssub.s32 32, 32
      %169 = vsyncadd [#allocation9], %s168
      %s171 = sshll.u32 [#allocation8], 4
      %s172 = int_to_ptr.vmem [resolvable:$true] %s171
      %174 = dma.hbm_to_vmem [thread:$0]  %s29, 32, %s172, [#allocation9]
    $region61: #{superpixel_scconv.1} parent=1 // pred_fallthru
      _
    // Predicated region
    $region62: #{superpixel_scconv.1} parent=1 // pred_check
      _
    $region63: #{superpixel_scconv.1} parent=1 // pred_check_branch
      %176 = sbr.rel (0) target = $region65
    $region64: #{superpixel_scconv.1} parent=1 // pred_region
      %s178 = ssub.s32 192, 192
      %179 = vsyncadd [#allocation9], %s178
      %s181 = sshll.u32 [#allocation10], 4
      %s182 = int_to_ptr.vmem [resolvable:$true] %s181
      %184 = dma.hbm_to_vmem [thread:$0]  %s31, 192, %s182, [#allocation9]
    $region65: #{superpixel_scconv.1} parent=1 // pred_fallthru
      _
    // Predicated region
    $region66: #{superpixel_scconv.1} parent=1 // pred_check
      _
    $region67: #{superpixel_scconv.1} parent=1 // pred_check_branch
      %186 = sbr.rel (0) target = $region69
    $region68: #{superpixel_scconv.1} parent=1 // pred_region
      %s188 = ssub.s32 48, 48
      %189 = vsyncadd [#allocation12], %s188
      %s191 = sshll.u32 [#allocation11], 4
      %s192 = int_to_ptr.vmem [resolvable:$true] %s191
      %194 = dma.hbm_to_vmem [thread:$0]  %s33, 48, %s192, [#allocation12]
    $region69: #{superpixel_scconv.1} parent=1 // pred_fallthru
      _
    // Predicated region
    $region70: #{superpixel_scconv.1} parent=1 // pred_check
      _
    $region71: #{superpixel_scconv.1} parent=1 // pred_check_branch
      %196 = sbr.rel (0) target = $region73
    $region72: #{superpixel_scconv.1} parent=1 // pred_region
      %s198 = ssub.s32 256, 256
      %199 = vsyncadd [#allocation12], %s198
      %s201 = sshll.u32 [#allocation13], 4
      %s202 = int_to_ptr.vmem [resolvable:$true] %s201
      %204 = dma.hbm_to_vmem [thread:$0]  %s35, 256, %s202, [#allocation12]
    $region73: #{superpixel_scconv.1} parent=1 // pred_fallthru
      _
    // Predicated region
    $region74: #{superpixel_scconv.1} parent=1 // pred_check
      _
    $region75: #{superpixel_scconv.1} parent=1 // pred_check_branch
      %206 = sbr.rel (0) target = $region77
    $region76: #{superpixel_scconv.1} parent=1 // pred_region
      %s208 = ssub.s32 32, 32
      %209 = vsyncadd [#allocation15], %s208
      %s211 = sshll.u32 [#allocation14], 4
      %s212 = int_to_ptr.vmem [resolvable:$true] %s211
      %214 = dma.hbm_to_vmem [thread:$0]  %s37, 32, %s212, [#allocation15]
    $region77: #{superpixel_scconv.1} parent=1 // pred_fallthru
      _
    // Predicated region
    $region78: #{superpixel_scconv.1} parent=1 // pred_check
      _
    $region79: #{superpixel_scconv.1} parent=1 // pred_check_branch
      %216 = sbr.rel (0) target = $region81
    $region80: #{superpixel_scconv.1} parent=1 // pred_region
      _
    $region81: #{superpixel_scconv.1} parent=1 // pred_fallthru
      _
    // Predicated region
    $region82: #{superpixel_scconv.1} parent=1 // pred_check
      _
    $region83: #{superpixel_scconv.1} parent=1 // pred_check_branch
      %218 = sbr.rel (0) target = $region85
    $region84: #{superpixel_scconv.1} parent=1 // pred_region
      %s220 = ssub.s32 32, 32
      %221 = vsyncadd [#allocation15], %s220
      %s223 = sshll.u32 [#allocation16], 4
      %s224 = int_to_ptr.vmem [resolvable:$true] %s223
      %226 = dma.hbm_to_vmem [thread:$0]  %s41, 32, %s224, [#allocation15]
    $region85: #{superpixel_scconv.1} parent=1 // pred_fallthru
      _
    // Predicated region
    $region86: #{superpixel_scconv.1} parent=1 // pred_check
      _
    $region87: #{superpixel_scconv.1} parent=1 // pred_check_branch
      %228 = sbr.rel (0) target = $region89
    $region88: #{superpixel_scconv.1} parent=1 // pred_region
      _
    $region89: #{superpixel_scconv.1} parent=1 // pred_fallthru
      _
    // Predicated region
    $region90: #{superpixel_scconv.1} parent=1 // pred_check
      _
    $region91: #{superpixel_scconv.1} parent=1 // pred_check_branch
      %230 = sbr.rel (0) target = $region93
    $region92: #{superpixel_scconv.1} parent=1 // pred_region
      %s232 = ssub.s32 48, 48
      %233 = vsyncadd [#allocation18], %s232
      %s235 = sshll.u32 [#allocation17], 4
      %s236 = int_to_ptr.vmem [resolvable:$true] %s235
      %238 = dma.hbm_to_vmem [thread:$0]  %s45, 48, %s236, [#allocation18]
    $region93: #{superpixel_scconv.1} parent=1 // pred_fallthru
      _
    // Predicated region
    $region94: #{superpixel_scconv.1} parent=1 // pred_check
      _
    $region95: #{superpixel_scconv.1} parent=1 // pred_check_branch
      %240 = sbr.rel (0) target = $region97
    $region96: #{superpixel_scconv.1} parent=1 // pred_region
      _
    $region97: #{superpixel_scconv.1} parent=1 // pred_fallthru
      _
    // Predicated region
    $region98: #{superpixel_scconv.1} parent=1 // pred_check
      _
    $region99: #{superpixel_scconv.1} parent=1 // pred_check_branch
      %242 = sbr.rel (0) target = $region101
    $region100: #{superpixel_scconv.1} parent=1 // pred_region
      %s244 = ssub.s32 32, 32
      %245 = vsyncadd [#allocation18], %s244
      %s247 = sshll.u32 [#allocation19], 4
      %s248 = int_to_ptr.vmem [resolvable:$true] %s247
      %250 = dma.hbm_to_vmem [thread:$0]  %s49, 32, %s248, [#allocation18]
    $region101: #{superpixel_scconv.1} parent=1 // pred_fallthru
      _
    // Predicated region
    $region102: #{superpixel_scconv.1} parent=1 // pred_check
      _
    $region103: #{superpixel_scconv.1} parent=1 // pred_check_branch
      %252 = sbr.rel (0) target = $region105
    $region104: #{superpixel_scconv.1} parent=1 // pred_region
      %s254 = ssub.s32 4096, 4096
      %255 = vsyncadd [#allocation21], %s254
      %s256 = sshll.u32 [#allocation20], 4
      %s257 = int_to_ptr.vmem [resolvable:$true] %s256
      %262 = dma.hbm_to_vmem [thread:$0]  %s51, 4096, %s257, [#allocation21], 256, 256, 16
    $region105: #{superpixel_scconv.1} parent=1 // pred_fallthru
      _
    // Predicated region
    $region106: #{superpixel_scconv.1} parent=1 // pred_check
      _
    $region107: #{superpixel_scconv.1} parent=1 // pred_check_branch
      %264 = sbr.rel (0) target = $region109
    $region108: #{superpixel_scconv.1} parent=1 // pred_region
      %s266 = ssub.s32 32, 32
      %267 = vsyncadd [#allocation21], %s266
      %s269 = sshll.u32 [#allocation22], 4
      %s270 = int_to_ptr.vmem [resolvable:$true] %s269
      %272 = dma.hbm_to_vmem [thread:$0]  %s53, 32, %s270, [#allocation21]
    $region109: #{superpixel_scconv.1} parent=1 // pred_fallthru
      _
    // Predicated region
    $region110: #{superpixel_scconv.1} parent=1 // pred_check
      _
    $region111: #{superpixel_scconv.1} parent=1 // pred_check_branch
      %274 = sbr.rel (0) target = $region113
    $region112: #{superpixel_scconv.1} parent=1 // pred_region
      _
    $region113: #{superpixel_scconv.1} parent=1 // pred_fallthru
      _
    // Predicated region
    $region114: #{superpixel_scconv.1} parent=1 // pred_check
      _
    $region115: #{superpixel_scconv.1} parent=1 // pred_check_branch
      %276 = sbr.rel (0) target = $region117
    $region116: #{superpixel_scconv.1} parent=1 // pred_region
      %s278 = ssub.s32 48, 48
      %279 = vsyncadd [#allocation24], %s278
      %s281 = sshll.u32 [#allocation23], 4
      %s282 = int_to_ptr.vmem [resolvable:$true] %s281
      %284 = dma.hbm_to_vmem [thread:$0]  %s57, 48, %s282, [#allocation24]
    $region117: #{superpixel_scconv.1} parent=1 // pred_fallthru
      _
    // Predicated region
    $region118: #{superpixel_scconv.1} parent=1 // pred_check
      _
    $region119: #{superpixel_scconv.1} parent=1 // pred_check_branch
      %286 = sbr.rel (0) target = $region121
    $region120: #{superpixel_scconv.1} parent=1 // pred_region
      _
    $region121: #{superpixel_scconv.1} parent=1 // pred_fallthru
      _
    // Predicated region
    $region122: #{superpixel_scconv.1} parent=1 // pred_check
      _
    $region123: #{superpixel_scconv.1} parent=1 // pred_check_branch
      %288 = sbr.rel (0) target = $region125
    $region124: #{superpixel_scconv.1} parent=1 // pred_region
      %s290 = ssub.s32 32, 32
      %291 = vsyncadd [#allocation24], %s290
      %s293 = sshll.u32 [#allocation25], 4
      %s294 = int_to_ptr.vmem [resolvable:$true] %s293
      %296 = dma.hbm_to_vmem [thread:$0]  %s61, 32, %s294, [#allocation24]
    $region125: #{superpixel_scconv.1} parent=1 // pred_fallthru
      _
    // Predicated region
    $region126: #{superpixel_scconv.1} parent=1 // pred_check
      _
    $region127: #{superpixel_scconv.1} parent=1 // pred_check_branch
      %298 = sbr.rel (0) target = $region129
    $region128: #{superpixel_scconv.1} parent=1 // pred_region
      _
    $region129: #{superpixel_scconv.1} parent=1 // pred_fallthru
      _
    // Predicated region
    $region130: #{superpixel_scconv.1} parent=1 // pred_check
      _
    $region131: #{superpixel_scconv.1} parent=1 // pred_check_branch
      %300 = sbr.rel (0) target = $region133
    $region132: #{superpixel_scconv.1} parent=1 // pred_region
      _
    $region133: #{superpixel_scconv.1} parent=1 // pred_fallthru
      _
    // Predicated region
    $region134: #{superpixel_scconv.1} parent=1 // pred_check
      _
    $region135: #{superpixel_scconv.1} parent=1 // pred_check_branch
      %302 = sbr.rel (0) target = $region137
    $region136: #{superpixel_scconv.1} parent=1 // pred_region
      _
    $region137: #{superpixel_scconv.1} parent=1 // pred_fallthru
      _
    // Predicated region
    $region138: #{superpixel_scconv.1} parent=1 // pred_check
      _
    $region139: #{superpixel_scconv.1} parent=1 // pred_check_branch
      %304 = sbr.rel (0) target = $region141
    $region140: #{superpixel_scconv.1} parent=1 // pred_region
      %s306 = ssub.s32 16, 16
      %307 = vsyncadd [#allocation27], %s306
      %s309 = sshll.u32 [#allocation26], 4
      %s310 = int_to_ptr.vmem [resolvable:$true] %s309
      %312 = dma.hbm_to_vmem [thread:$0]  %s69, 16, %s310, [#allocation27]
    $region141: #{superpixel_scconv.1} parent=1 // pred_fallthru
      _
    // Predicated region
    $region142: #{superpixel_scconv.1} parent=1 // pred_check
      _
    $region143: #{superpixel_scconv.1} parent=1 // pred_check_branch
      %314 = sbr.rel (0) target = $region145
    $region144: #{superpixel_scconv.1} parent=1 // pred_region
      _
    $region145: #{superpixel_scconv.1} parent=1 // pred_fallthru
      _
    // Predicated region
    $region146: #{superpixel_scconv.1} parent=1 // pred_check
      _
    $region147: #{superpixel_scconv.1} parent=1 // pred_check_branch
      %316 = sbr.rel (0) target = $region149
    $region148: #{superpixel_scconv.1} parent=1 // pred_region
      _
    $region149: #{superpixel_scconv.1} parent=1 // pred_fallthru
      _
    // Predicated region
    $region150: #{superpixel_scconv.1} parent=1 // pred_check
      _
    $region151: #{superpixel_scconv.1} parent=1 // pred_check_branch
      %318 = sbr.rel (0) target = $region153
    $region152: #{superpixel_scconv.1} parent=1 // pred_region
      _
    $region153: #{superpixel_scconv.1} parent=1 // pred_fallthru
      _
    // Predicated region
    $region154: #{superpixel_scconv.1} parent=1 // pred_check
      _
    $region155: #{superpixel_scconv.1} parent=1 // pred_check_branch
      %320 = sbr.rel (0) target = $region157
    $region156: #{superpixel_scconv.1} parent=1 // pred_region
      %s322 = ssub.s32 16, 16
      %323 = vsyncadd [#allocation27], %s322
      %s325 = sshll.u32 [#allocation28], 4
      %s326 = int_to_ptr.vmem [resolvable:$true] %s325
      %328 = dma.hbm_to_vmem [thread:$0]  %s77, 16, %s326, [#allocation27]
    $region157: #{superpixel_scconv.1} parent=1 // pred_fallthru
      _
    // Predicated region
    $region158: #{superpixel_scconv.1} parent=1 // pred_check
      _
    $region159: #{superpixel_scconv.1} parent=1 // pred_check_branch
      %330 = sbr.rel (0) target = $region161
    $region160: #{superpixel_scconv.1} parent=1 // pred_region
      _
    $region161: #{superpixel_scconv.1} parent=1 // pred_fallthru
      _
    // Predicated region
    $region162: #{superpixel_scconv.1} parent=1 // pred_check
      _
    $region163: #{superpixel_scconv.1} parent=1 // pred_check_branch
      %332 = sbr.rel (0) target = $region165
    $region164: #{superpixel_scconv.1} parent=1 // pred_region
      _
    $region165: #{superpixel_scconv.1} parent=1 // pred_fallthru
      _
    // Predicated region
    $region166: #{superpixel_scconv.1} parent=1 // pred_check
      _
    $region167: #{superpixel_scconv.1} parent=1 // pred_check_branch
      %334 = sbr.rel (0) target = $region169
    $region168: #{superpixel_scconv.1} parent=1 // pred_region
      _
    $region169: #{superpixel_scconv.1} parent=1 // pred_fallthru
      _
    // Predicated region
    $region170: #{superpixel_scconv.1} parent=1 // pred_check
      _
    $region171: #{superpixel_scconv.1} parent=1 // pred_check_branch
      %336 = sbr.rel (0) target = $region173
    $region172: #{superpixel_scconv.1} parent=1 // pred_region
      %s338 = ssub.s32 16, 16
      %339 = vsyncadd [#allocation30], %s338
      %s341 = sshll.u32 [#allocation29], 4
      %s342 = int_to_ptr.vmem [resolvable:$true] %s341
      %344 = dma.hbm_to_vmem [thread:$0]  %s85, 16, %s342, [#allocation30]
    $region173: #{superpixel_scconv.1} parent=1 // pred_fallthru
      _
    // Predicated region
    $region174: #{superpixel_scconv.1} parent=1 // pred_check
      _
    $region175: #{superpixel_scconv.1} parent=1 // pred_check_branch
      %346 = sbr.rel (0) target = $region177
    $region176: #{superpixel_scconv.1} parent=1 // pred_region
      %s348 = ssub.s32 256, 256
      %349 = vsyncadd [#allocation30], %s348
      %s350 = sshll.u32 [#allocation31], 4
      %s351 = int_to_ptr.vmem [resolvable:$true] %s350
      %356 = dma.hbm_to_vmem [thread:$0]  %s87, 256, %s351, [#allocation30], 128, 128, 8
    $region177: #{superpixel_scconv.1} parent=1 // pred_fallthru
      _
    // Predicated region
    $region178: #{superpixel_scconv.1} parent=1 // pred_check
      _
    $region179: #{superpixel_scconv.1} parent=1 // pred_check_branch
      %358 = sbr.rel (0) target = $region181
    $region180: #{superpixel_scconv.1} parent=1 // pred_region
      %s360 = ssub.s32 256, 256
      %361 = vsyncadd [#allocation33], %s360
      %s362 = sshll.u32 [#allocation32], 4
      %s363 = int_to_ptr.vmem [resolvable:$true] %s362
      %368 = dma.hbm_to_vmem [thread:$0]  %s89, 256, %s363, [#allocation33], 128, 128, 8
    $region181: #{superpixel_scconv.1} parent=1 // pred_fallthru
      _
    // Predicated region
    $region182: #{superpixel_scconv.1} parent=1 // pred_check
      _
    $region183: #{superpixel_scconv.1} parent=1 // pred_check_branch
      %370 = sbr.rel (0) target = $region185
    $region184: #{superpixel_scconv.1} parent=1 // pred_region
      %s372 = ssub.s32 256, 256
      %373 = vsyncadd [#allocation33], %s372
      %s374 = sshll.u32 [#allocation34], 4
      %s375 = int_to_ptr.vmem [resolvable:$true] %s374
      %380 = dma.hbm_to_vmem [thread:$0]  %s91, 256, %s375, [#allocation33], 128, 128, 8
    $region185: #{superpixel_scconv.1} parent=1 // pred_fallthru
      _
    // Predicated region
    $region186: #{superpixel_scconv.1} parent=1 // pred_check
      _
    $region187: #{superpixel_scconv.1} parent=1 // pred_check_branch
      %382 = sbr.rel (0) target = $region189
    $region188: #{superpixel_scconv.1} parent=1 // pred_region
      %s384 = ssub.s32 16, 16
      %385 = vsyncadd [#allocation36], %s384
      %s387 = sshll.u32 [#allocation35], 4
      %s388 = int_to_ptr.vmem [resolvable:$true] %s387
      %390 = dma.hbm_to_vmem [thread:$0]  %s93, 16, %s388, [#allocation36]
    $region189: #{superpixel_scconv.1} parent=1 // pred_fallthru
      _
    // Predicated region
    $region190: #{superpixel_scconv.1} parent=1 // pred_check
      _
    $region191: #{superpixel_scconv.1} parent=1 // pred_check_branch
      %392 = sbr.rel (0) target = $region193
    $region192: #{superpixel_scconv.1} parent=1 // pred_region
      %393 = dma.done [#allocation3], 128
    $region193: #{superpixel_scconv.1} parent=1 // pred_fallthru
      _
    // Predicated region
    $region194: #{superpixel_scconv.1} parent=1 // pred_check
      _
    $region195: #{superpixel_scconv.1} parent=1 // pred_check_branch
      %395 = sbr.rel (0) target = $region197
    $region196: #{superpixel_scconv.1} parent=1 // pred_region
      %396 = dma.done [#allocation6], 128
    $region197: #{superpixel_scconv.1} parent=1 // pred_fallthru
      _
    // Predicated region
    $region198: #{superpixel_scconv.1} parent=1 // pred_check
      _
    $region199: #{superpixel_scconv.1} parent=1 // pred_check_branch
      %398 = sbr.rel (0) target = $region201
    $region200: #{superpixel_scconv.1} parent=1 // pred_region
      %399 = dma.done [#allocation6], 128
    $region201: #{superpixel_scconv.1} parent=1 // pred_fallthru
      _
    // Predicated region
    $region202: #{superpixel_scconv.1} parent=1 // pred_check
      _
    $region203: #{superpixel_scconv.1} parent=1 // pred_check_branch
      %401 = sbr.rel (0) target = $region205
    $region204: #{superpixel_scconv.1} parent=1 // pred_region
      %402 = dma.done [#allocation9], 32
    $region205: #{superpixel_scconv.1} parent=1 // pred_fallthru
      _
    // Predicated region
    $region206: #{superpixel_scconv.1} parent=1 // pred_check
      _
    $region207: #{superpixel_scconv.1} parent=1 // pred_check_branch
      %404 = sbr.rel (0) target = $region209
    $region208: #{superpixel_scconv.1} parent=1 // pred_region
      %405 = dma.done [#allocation9], 192
    $region209: #{superpixel_scconv.1} parent=1 // pred_fallthru
      _
    // Predicated region
    $region210: #{superpixel_scconv.1} parent=1 // pred_check
      _
    $region211: #{superpixel_scconv.1} parent=1 // pred_check_branch
      %407 = sbr.rel (0) target = $region213
    $region212: #{superpixel_scconv.1} parent=1 // pred_region
      %408 = dma.done [#allocation12], 48
    $region213: #{superpixel_scconv.1} parent=1 // pred_fallthru
      _
    // Predicated region
    $region214: #{superpixel_scconv.1} parent=1 // pred_check
      _
    $region215: #{superpixel_scconv.1} parent=1 // pred_check_branch
      %410 = sbr.rel (0) target = $region217
    $region216: #{superpixel_scconv.1} parent=1 // pred_region
      %411 = dma.done [#allocation12], 256
    $region217: #{superpixel_scconv.1} parent=1 // pred_fallthru
      _
    // Predicated region
    $region218: #{superpixel_scconv.1} parent=1 // pred_check
      _
    $region219: #{superpixel_scconv.1} parent=1 // pred_check_branch
      %413 = sbr.rel (0) target = $region221
    $region220: #{superpixel_scconv.1} parent=1 // pred_region
      %414 = dma.done [#allocation15], 32
    $region221: #{superpixel_scconv.1} parent=1 // pred_fallthru
      _
    // Predicated region
    $region222: #{superpixel_scconv.1} parent=1 // pred_check
      _
    $region223: #{superpixel_scconv.1} parent=1 // pred_check_branch
      %416 = sbr.rel (0) target = $region225
    $region224: #{superpixel_scconv.1} parent=1 // pred_region
      %417 = dma.done [#allocation15], 32
    $region225: #{superpixel_scconv.1} parent=1 // pred_fallthru
      _
    // Predicated region
    $region226: #{superpixel_scconv.1} parent=1 // pred_check
      _
    $region227: #{superpixel_scconv.1} parent=1 // pred_check_branch
      %419 = sbr.rel (0) target = $region229
    $region228: #{superpixel_scconv.1} parent=1 // pred_region
      %420 = dma.done [#allocation18], 48
    $region229: #{superpixel_scconv.1} parent=1 // pred_fallthru
      _
    // Predicated region
    $region230: #{superpixel_scconv.1} parent=1 // pred_check
      _
    $region231: #{superpixel_scconv.1} parent=1 // pred_check_branch
      %422 = sbr.rel (0) target = $region233
    $region232: #{superpixel_scconv.1} parent=1 // pred_region
      %423 = dma.done [#allocation18], 32
    $region233: #{superpixel_scconv.1} parent=1 // pred_fallthru
      _
    // Predicated region
    $region234: #{superpixel_scconv.1} parent=1 // pred_check
      _
    $region235: #{superpixel_scconv.1} parent=1 // pred_check_branch
      %425 = sbr.rel (0) target = $region237
    $region236: #{superpixel_scconv.1} parent=1 // pred_region
      %426 = dma.done [#allocation21], 4096
    $region237: #{superpixel_scconv.1} parent=1 // pred_fallthru
      _
    // Predicated region
    $region238: #{superpixel_scconv.1} parent=1 // pred_check
      _
    $region239: #{superpixel_scconv.1} parent=1 // pred_check_branch
      %428 = sbr.rel (0) target = $region241
    $region240: #{superpixel_scconv.1} parent=1 // pred_region
      %429 = dma.done [#allocation21], 32
    $region241: #{superpixel_scconv.1} parent=1 // pred_fallthru
      _
    // Predicated region
    $region242: #{superpixel_scconv.1} parent=1 // pred_check
      _
    $region243: #{superpixel_scconv.1} parent=1 // pred_check_branch
      %431 = sbr.rel (0) target = $region245
    $region244: #{superpixel_scconv.1} parent=1 // pred_region
      %432 = dma.done [#allocation24], 48
    $region245: #{superpixel_scconv.1} parent=1 // pred_fallthru
      _
    // Predicated region
    $region246: #{superpixel_scconv.1} parent=1 // pred_check
      _
    $region247: #{superpixel_scconv.1} parent=1 // pred_check_branch
      %434 = sbr.rel (0) target = $region249
    $region248: #{superpixel_scconv.1} parent=1 // pred_region
      %435 = dma.done [#allocation24], 32
    $region249: #{superpixel_scconv.1} parent=1 // pred_fallthru
      _
    // Predicated region
    $region250: #{superpixel_scconv.1} parent=1 // pred_check
      _
    $region251: #{superpixel_scconv.1} parent=1 // pred_check_branch
      %437 = sbr.rel (0) target = $region253
    $region252: #{superpixel_scconv.1} parent=1 // pred_region
      %438 = dma.done [#allocation27], 16
    $region253: #{superpixel_scconv.1} parent=1 // pred_fallthru
      _
    // Predicated region
    $region254: #{superpixel_scconv.1} parent=1 // pred_check
      _
    $region255: #{superpixel_scconv.1} parent=1 // pred_check_branch
      %440 = sbr.rel (0) target = $region257
    $region256: #{superpixel_scconv.1} parent=1 // pred_region
      %441 = dma.done [#allocation27], 16
    $region257: #{superpixel_scconv.1} parent=1 // pred_fallthru
      _
    // Predicated region
    $region258: #{superpixel_scconv.1} parent=1 // pred_check
      _
    $region259: #{superpixel_scconv.1} parent=1 // pred_check_branch
      %443 = sbr.rel (0) target = $region261
    $region260: #{superpixel_scconv.1} parent=1 // pred_region
      %444 = dma.done [#allocation30], 16
    $region261: #{superpixel_scconv.1} parent=1 // pred_fallthru
      _
    // Predicated region
    $region262: #{superpixel_scconv.1} parent=1 // pred_check
      _
    $region263: #{superpixel_scconv.1} parent=1 // pred_check_branch
      %446 = sbr.rel (0) target = $region265
    $region264: #{superpixel_scconv.1} parent=1 // pred_region
      %447 = dma.done [#allocation30], 256
    $region265: #{superpixel_scconv.1} parent=1 // pred_fallthru
      _
    // Predicated region
    $region266: #{superpixel_scconv.1} parent=1 // pred_check
      _
    $region267: #{superpixel_scconv.1} parent=1 // pred_check_branch
      %449 = sbr.rel (0) target = $region269
    $region268: #{superpixel_scconv.1} parent=1 // pred_region
      %450 = dma.done [#allocation33], 256
    $region269: #{superpixel_scconv.1} parent=1 // pred_fallthru
      _
    // Predicated region
    $region270: #{superpixel_scconv.1} parent=1 // pred_check
      _
    $region271: #{superpixel_scconv.1} parent=1 // pred_check_branch
      %452 = sbr.rel (0) target = $region273
    $region272: #{superpixel_scconv.1} parent=1 // pred_region
      %453 = dma.done [#allocation33], 256
    $region273: #{superpixel_scconv.1} parent=1 // pred_fallthru
      _
    // Predicated region
    $region274: #{superpixel_scconv.1} parent=1 // pred_check
      _
    $region275: #{superpixel_scconv.1} parent=1 // pred_check_branch
      %455 = sbr.rel (0) target = $region277
    $region276: #{superpixel_scconv.1} parent=1 // pred_region
      %456 = dma.done [#allocation36], 16
    $region277: #{superpixel_scconv.1} parent=1 // pred_fallthru
      _
    %v457 = vld [vmem:[%s7] sm:$0xff]
    %v458 = vld [vmem:[%s7 + $0x8] sm:$0xff]
    %v459 = vld [vmem:[%s9] sm:$0xff]
    %v460 = vld [vmem:[%s9 + $0x8] sm:$0xff]
    %v461 = vld [vmem:[%s9 + $0x10] sm:$0xff]
    %v462 = vld [vmem:[#allocation2] sm:$0xff]
    %v463 = vld [vmem:[%s13] sm:$0xff]
    %v464 = vld [vmem:[%s13 + $0x8] sm:$0xff]
    %v465 = vld [vmem:[%s13 + $0x10] sm:$0xff]
    %v466 = vld [vmem:[%s15] sm:$0xff]
    %v467 = vld [vmem:[%s15 + $0x8] sm:$0xff]
    %v468 = vld [vmem:[%s15 + $0x10] sm:$0xff]
    %v469 = vld [vmem:[%s17] sm:$0xff]
    %v470 = vld [vmem:[%s17 + $0x8] sm:$0xff]
    %v471 = vld [vmem:[#allocation5] sm:$0xff]
    %v472 = vld [vmem:[%s1] sm:$0xff]
    %v473 = vld [vmem:[%s1 + $0x8] sm:$0xff]
    %v474 = vld [vmem:[%s3] sm:$0xff]
    %v475 = vld [vmem:[%s3 + $0x8] sm:$0xff]
    %v476 = vld [vmem:[%s3 + $0x10] sm:$0xff]
    %v477 = vld [vmem:[%s5] sm:$0xff]
    %v478 = vld [vmem:[#allocation7] sm:$0x77]
    %v479 = vld [vmem:[#allocation8] sm:$0x3]
    %v481 = vlaneseq
    %v482 = vshrl.u32 %v481, 7
    %v483 = vsub.s32 0, %v482
    %v484 = vrot.slane %v479, %v483
    %v485 = vlaneseq
    %v486 = vshrl.u32 %v485, 7
    %v487 = vsub.s32 1, %v486
    %v488 = vrot.slane %v479, %v487
    %v492 = vcombine.high %v478, %v478
    %vm493 = vcmask 23552
    %v495 = vsel %vm493, %v472, 0
    %v498 = vsel %vm493, %v473, 0
    %vm500 = vcmask 1042432
    %v501 = vsel %vm500, %v478, 0
    %v503 = vsel %vm500, %v492, 0
    %505 = vmatprep.subr.mxu0 %v503
    %506 = vmatpush1.msra.mxu0 %v501
    %507 = vmatprep.subr.mxu0 0.0
    %508 = vmatpush1.msra.mxu0 0.0
    %509 = vmatprep.subr.mxu0 0.0
    %510 = vmatpush1.msra.mxu0 0.0
    %511 = vmatprep.subr.mxu0 0.0
    %512 = vmatpush1.msra.mxu0 0.0
    %513 = vmatprep.subr.mxu0 0.0
    %514 = vmatpush1.msra.mxu0 0.0
    %515 = vmatprep.subr.mxu0 0.0
    %516 = vmatpush1.msra.mxu0 0.0
    %517 = vmatprep.subr.mxu0 0.0
    %518 = vmatpush1.msra.mxu0 0.0
    %519 = vmatprep.subr.mxu0 0.0
    %520 = vmatpush1.msra.mxu0 0.0
    %521 = vmatprep.subr.mxu0 0.0
    %522 = vmatpush1.msra.mxu0 0.0
    %523 = vmatprep.subr.mxu0 0.0
    %524 = vmatpush1.msra.mxu0 0.0
    %525 = vmatprep.subr.mxu0 0.0
    %526 = vmatpush1.msra.mxu0 0.0
    %527 = vmatprep.subr.mxu0 0.0
    %528 = vmatpush1.msra.mxu0 0.0
    %529 = vmatprep.subr.mxu0 0.0
    %530 = vmatpush1.msra.mxu0 0.0
    %531 = vmatprep.subr.mxu0 0.0
    %532 = vmatpush1.msra.mxu0 0.0
    %533 = vmatprep.subr.mxu0 0.0
    %534 = vmatpush1.msra.mxu0 0.0
    %535 = vmatprep.subr.mxu0 0.0
    %536 = vmatpush1.msra.mxu0 0.0
    %537 = vmatprep.subr.mxu0 0.0
    %538 = vmatpush1.msra.mxu0 0.0
    %539 = vmatprep.subr.mxu0 0.0
    %540 = vmatpush1.msra.mxu0 0.0
    %541 = vmatprep.subr.mxu0 0.0
    %542 = vmatpush1.msra.mxu0 0.0
    %543 = vmatprep.subr.mxu0 0.0
    %544 = vmatpush1.msra.mxu0 0.0
    %545 = vmatprep.subr.mxu0 0.0
    %546 = vmatpush1.msra.mxu0 0.0
    %547 = vmatprep.subr.mxu0 0.0
    %548 = vmatpush1.msra.mxu0 0.0
    %549 = vmatprep.subr.mxu0 0.0
    %550 = vmatpush1.msra.mxu0 0.0
    %551 = vmatprep.subr.mxu0 0.0
    %552 = vmatpush1.msra.mxu0 0.0
    %553 = vmatprep.subr.mxu0 0.0
    %554 = vmatpush1.msra.mxu0 0.0
    %555 = vmatprep.subr.mxu0 0.0
    %556 = vmatpush1.msra.mxu0 0.0
    %557 = vmatprep.subr.mxu0 0.0
    %558 = vmatpush1.msra.mxu0 0.0
    %559 = vmatprep.subr.mxu0 0.0
    %560 = vmatpush1.msra.mxu0 0.0
    %561 = vmatprep.subr.mxu0 0.0
    %562 = vmatpush1.msra.mxu0 0.0
    %563 = vmatprep.subr.mxu0 0.0
    %564 = vmatpush1.msra.mxu0 0.0
    %565 = vmatprep.subr.mxu0 0.0
    %566 = vmatpush1.msra.mxu0 0.0
    %567 = vmatprep.subr.mxu0 0.0
    %568 = vmatpush1.msra.mxu0 0.0
    %569 = vmatprep.mubr.f32.mxu0 0.0
    %570 = vmatmul.mubr.f32.gmra.mrb[0].mxu0 %v495
    %v571 = vpop.f32.mrb[0].mxu0
    %v572 = vadd.f32 %v484, %v571
    %v573 = vpop.f32.mrb[0].mxu0
    %v574 = vadd.f32 %v488, %v573
    %575 = vmatprep.mubr.f32.mxu0 0.0
    %576 = vmatmul.mubr.f32.gmra.mrb[0].mxu0 %v498
    %v577 = vpop.f32.mrb[0].mxu0
    %v578 = vadd.f32 %v484, %v577
    %v579 = vpop.f32.mrb[0].mxu0
    %v580 = vadd.f32 %v488, %v579
    %581 = vdwg.mxu0
    %v582 = vld [vmem:[#allocation10] sm:$0xff]
    %v583 = vld [vmem:[#allocation10 + $0x8] sm:$0xf]
    %v584 = vld [vmem:[#allocation11] sm:$0x7]
    %v586 = vlaneseq
    %v587 = vshrl.u32 %v586, 7
    %v588 = vsub.s32 0, %v587
    %v589 = vrot.slane %v584, %v588
    %v590 = vlaneseq
    %v591 = vshrl.u32 %v590, 7
    %v592 = vsub.s32 1, %v591
    %v593 = vrot.slane %v584, %v592
    %v594 = vlaneseq
    %v595 = vshrl.u32 %v594, 7
    %v596 = vsub.s32 2, %v595
    %v597 = vrot.slane %v584, %v596
    %v603 = vcombine.high %v582, %v582
    %vm604 = vcmask 31744
    %v606 = vsel %vm604, %v474, 0
    %v609 = vsel %vm604, %v475, 0
    %v612 = vsel %vm604, %v476, 0
    %vm614 = vcmask 1043456
    %v615 = vsel %vm614, %v582, 0
    %v617 = vsel %vm614, %v603, 0
    %v619 = vsel %vm614, %v583, 0
    %621 = vmatprep.subr.mxu0 %v617
    %622 = vmatpush1.msra.mxu0 %v615
    %623 = vmatprep.subr.mxu0 0.0
    %624 = vmatpush1.msra.mxu0 0.0
    %625 = vmatprep.subr.mxu0 0.0
    %626 = vmatpush1.msra.mxu0 0.0
    %627 = vmatprep.subr.mxu0 0.0
    %628 = vmatpush1.msra.mxu0 0.0
    %629 = vmatprep.subr.mxu0 0.0
    %630 = vmatpush1.msra.mxu0 0.0
    %631 = vmatprep.subr.mxu0 0.0
    %632 = vmatpush1.msra.mxu0 0.0
    %633 = vmatprep.subr.mxu0 0.0
    %634 = vmatpush1.msra.mxu0 0.0
    %635 = vmatprep.subr.mxu0 0.0
    %636 = vmatpush1.msra.mxu0 0.0
    %637 = vmatprep.subr.mxu0 0.0
    %638 = vmatpush1.msra.mxu0 0.0
    %639 = vmatprep.subr.mxu0 0.0
    %640 = vmatpush1.msra.mxu0 0.0
    %641 = vmatprep.subr.mxu0 0.0
    %642 = vmatpush1.msra.mxu0 0.0
    %643 = vmatprep.subr.mxu0 0.0
    %644 = vmatpush1.msra.mxu0 0.0
    %645 = vmatprep.subr.mxu0 0.0
    %646 = vmatpush1.msra.mxu0 0.0
    %647 = vmatprep.subr.mxu0 0.0
    %648 = vmatpush1.msra.mxu0 0.0
    %649 = vmatprep.subr.mxu0 0.0
    %650 = vmatpush1.msra.mxu0 0.0
    %651 = vmatprep.subr.mxu0 0.0
    %652 = vmatpush1.msra.mxu0 0.0
    %653 = vmatprep.subr.mxu0 0.0
    %654 = vmatpush1.msra.mxu0 0.0
    %655 = vmatprep.subr.mxu0 0.0
    %656 = vmatpush1.msra.mxu0 0.0
    %657 = vmatprep.subr.mxu0 0.0
    %658 = vmatpush1.msra.mxu0 0.0
    %659 = vmatprep.subr.mxu0 0.0
    %660 = vmatpush1.msra.mxu0 0.0
    %661 = vmatprep.subr.mxu0 0.0
    %662 = vmatpush1.msra.mxu0 0.0
    %663 = vmatprep.subr.mxu0 0.0
    %664 = vmatpush1.msra.mxu0 0.0
    %665 = vmatprep.subr.mxu0 0.0
    %666 = vmatpush1.msra.mxu0 0.0
    %667 = vmatprep.subr.mxu0 0.0
    %668 = vmatpush1.msra.mxu0 0.0
    %669 = vmatprep.subr.mxu0 0.0
    %670 = vmatpush1.msra.mxu0 0.0
    %671 = vmatprep.subr.mxu0 0.0
    %672 = vmatpush1.msra.mxu0 0.0
    %673 = vmatprep.subr.mxu0 0.0
    %674 = vmatpush1.msra.mxu0 0.0
    %675 = vmatprep.subr.mxu0 0.0
    %676 = vmatpush1.msra.mxu0 0.0
    %677 = vmatprep.subr.mxu0 0.0
    %678 = vmatpush1.msra.mxu0 0.0
    %679 = vmatprep.subr.mxu0 0.0
    %680 = vmatpush1.msra.mxu0 0.0
    %681 = vmatprep.subr.mxu0 0.0
    %682 = vmatpush1.msra.mxu0 0.0
    %683 = vmatprep.subr.mxu0 0.0
    %684 = vmatpush1.msra.mxu0 0.0
    %685 = vmatprep.mubr.f32.mxu0 0.0
    %686 = vmatmul.mubr.f32.gmra.mrb[0].mxu0 %v606
    %v687 = vpop.f32.mrb[0].mxu0
    %v688 = vadd.f32 %v589, %v687
    %v689 = vpop.f32.mrb[0].mxu0
    %v690 = vadd.f32 %v593, %v689
    %691 = vmatprep.mubr.f32.mxu0 0.0
    %692 = vmatmul.mubr.f32.gmra.mrb[0].mxu0 %v609
    %v693 = vpop.f32.mrb[0].mxu0
    %v694 = vadd.f32 %v589, %v693
    %v695 = vpop.f32.mrb[0].mxu0
    %v696 = vadd.f32 %v593, %v695
    %697 = vmatprep.mubr.f32.mxu0 0.0
    %698 = vmatmul.mubr.f32.gmra.mrb[0].mxu0 %v612
    %v699 = vpop.f32.mrb[0].mxu0
    %v700 = vadd.f32 %v589, %v699
    %v701 = vpop.f32.mrb[0].mxu0
    %v702 = vadd.f32 %v593, %v701
    %703 = vdwg.mxu0
    %704 = vmatprep.subr.mxu0 0.0
    %705 = vmatpush1.msra.mxu0 %v619
    %706 = vmatprep.subr.mxu0 0.0
    %707 = vmatpush1.msra.mxu0 0.0
    %708 = vmatprep.subr.mxu0 0.0
    %709 = vmatpush1.msra.mxu0 0.0
    %710 = vmatprep.subr.mxu0 0.0
    %711 = vmatpush1.msra.mxu0 0.0
    %712 = vmatprep.subr.mxu0 0.0
    %713 = vmatpush1.msra.mxu0 0.0
    %714 = vmatprep.subr.mxu0 0.0
    %715 = vmatpush1.msra.mxu0 0.0
    %716 = vmatprep.subr.mxu0 0.0
    %717 = vmatpush1.msra.mxu0 0.0
    %718 = vmatprep.subr.mxu0 0.0
    %719 = vmatpush1.msra.mxu0 0.0
    %720 = vmatprep.subr.mxu0 0.0
    %721 = vmatpush1.msra.mxu0 0.0
    %722 = vmatprep.subr.mxu0 0.0
    %723 = vmatpush1.msra.mxu0 0.0
    %724 = vmatprep.subr.mxu0 0.0
    %725 = vmatpush1.msra.mxu0 0.0
    %726 = vmatprep.subr.mxu0 0.0
    %727 = vmatpush1.msra.mxu0 0.0
    %728 = vmatprep.subr.mxu0 0.0
    %729 = vmatpush1.msra.mxu0 0.0
    %730 = vmatprep.subr.mxu0 0.0
    %731 = vmatpush1.msra.mxu0 0.0
    %732 = vmatprep.subr.mxu0 0.0
    %733 = vmatpush1.msra.mxu0 0.0
    %734 = vmatprep.subr.mxu0 0.0
    %735 = vmatpush1.msra.mxu0 0.0
    %736 = vmatprep.subr.mxu0 0.0
    %737 = vmatpush1.msra.mxu0 0.0
    %738 = vmatprep.subr.mxu0 0.0
    %739 = vmatpush1.msra.mxu0 0.0
    %740 = vmatprep.subr.mxu0 0.0
    %741 = vmatpush1.msra.mxu0 0.0
    %742 = vmatprep.subr.mxu0 0.0
    %743 = vmatpush1.msra.mxu0 0.0
    %744 = vmatprep.subr.mxu0 0.0
    %745 = vmatpush1.msra.mxu0 0.0
    %746 = vmatprep.subr.mxu0 0.0
    %747 = vmatpush1.msra.mxu0 0.0
    %748 = vmatprep.subr.mxu0 0.0
    %749 = vmatpush1.msra.mxu0 0.0
    %750 = vmatprep.subr.mxu0 0.0
    %751 = vmatpush1.msra.mxu0 0.0
    %752 = vmatprep.subr.mxu0 0.0
    %753 = vmatpush1.msra.mxu0 0.0
    %754 = vmatprep.subr.mxu0 0.0
    %755 = vmatpush1.msra.mxu0 0.0
    %756 = vmatprep.subr.mxu0 0.0
    %757 = vmatpush1.msra.mxu0 0.0
    %758 = vmatprep.subr.mxu0 0.0
    %759 = vmatpush1.msra.mxu0 0.0
    %760 = vmatprep.subr.mxu0 0.0
    %761 = vmatpush1.msra.mxu0 0.0
    %762 = vmatprep.subr.mxu0 0.0
    %763 = vmatpush1.msra.mxu0 0.0
    %764 = vmatprep.subr.mxu0 0.0
    %765 = vmatpush1.msra.mxu0 0.0
    %766 = vmatprep.subr.mxu0 0.0
    %767 = vmatpush1.msra.mxu0 0.0
    %768 = vmatprep.mubr.f32.mxu0 0.0
    %769 = vmatmul.mubr.f32.gmra.mrb[0].mxu0 %v606
    %v770 = vpop.f32.mrb[0].mxu0
    %v771 = vadd.f32 %v597, %v770
    %v772 = vpop.f32.mrb[0].mxu0
    %773 = vmatprep.mubr.f32.mxu0 0.0
    %774 = vmatmul.mubr.f32.gmra.mrb[0].mxu0 %v609
    %v775 = vpop.f32.mrb[0].mxu0
    %v776 = vadd.f32 %v597, %v775
    %v777 = vpop.f32.mrb[0].mxu0
    %778 = vmatprep.mubr.f32.mxu0 0.0
    %779 = vmatmul.mubr.f32.gmra.mrb[0].mxu0 %v612
    %v780 = vpop.f32.mrb[0].mxu0
    %v781 = vadd.f32 %v597, %v780
    %v782 = vpop.f32.mrb[0].mxu0
    %783 = vdwg.mxu0
    %v784 = vld [vmem:[#allocation13] sm:$0x1f]
    %v785 = vld [vmem:[#allocation13 + $0x8] sm:$0x1f]
    %v786 = vld [vmem:[#allocation14] sm:$0x3]
    %v788 = vlaneseq
    %v789 = vshrl.u32 %v788, 7
    %v790 = vsub.s32 0, %v789
    %v791 = vrot.slane %v786, %v790
    %v792 = vlaneseq
    %v793 = vshrl.u32 %v792, 7
    %v794 = vsub.s32 1, %v793
    %v795 = vrot.slane %v786, %v794
    %vm798 = vcmask 39936
    %v800 = vsel %vm798, %v477, 0
    %vm802 = vcmask 1044480
    %v804 = vsel %vm802, %v784, 0
    %v807 = vsel %vm802, %v785, 0
    %809 = vmatprep.subr.mxu0 %v807
    %810 = vmatpush1.msra.mxu0 %v804
    %811 = vmatprep.subr.mxu0 0.0
    %812 = vmatpush1.msra.mxu0 0.0
    %813 = vmatprep.subr.mxu0 0.0
    %814 = vmatpush1.msra.mxu0 0.0
    %815 = vmatprep.subr.mxu0 0.0
    %816 = vmatpush1.msra.mxu0 0.0
    %817 = vmatprep.subr.mxu0 0.0
    %818 = vmatpush1.msra.mxu0 0.0
    %819 = vmatprep.subr.mxu0 0.0
    %820 = vmatpush1.msra.mxu0 0.0
    %821 = vmatprep.subr.mxu0 0.0
    %822 = vmatpush1.msra.mxu0 0.0
    %823 = vmatprep.subr.mxu0 0.0
    %824 = vmatpush1.msra.mxu0 0.0
    %825 = vmatprep.subr.mxu0 0.0
    %826 = vmatpush1.msra.mxu0 0.0
    %827 = vmatprep.subr.mxu0 0.0
    %828 = vmatpush1.msra.mxu0 0.0
    %829 = vmatprep.subr.mxu0 0.0
    %830 = vmatpush1.msra.mxu0 0.0
    %831 = vmatprep.subr.mxu0 0.0
    %832 = vmatpush1.msra.mxu0 0.0
    %833 = vmatprep.subr.mxu0 0.0
    %834 = vmatpush1.msra.mxu0 0.0
    %835 = vmatprep.subr.mxu0 0.0
    %836 = vmatpush1.msra.mxu0 0.0
    %837 = vmatprep.subr.mxu0 0.0
    %838 = vmatpush1.msra.mxu0 0.0
    %839 = vmatprep.subr.mxu0 0.0
    %840 = vmatpush1.msra.mxu0 0.0
    %841 = vmatprep.subr.mxu0 0.0
    %842 = vmatpush1.msra.mxu0 0.0
    %843 = vmatprep.subr.mxu0 0.0
    %844 = vmatpush1.msra.mxu0 0.0
    %845 = vmatprep.subr.mxu0 0.0
    %846 = vmatpush1.msra.mxu0 0.0
    %847 = vmatprep.subr.mxu0 0.0
    %848 = vmatpush1.msra.mxu0 0.0
    %849 = vmatprep.subr.mxu0 0.0
    %850 = vmatpush1.msra.mxu0 0.0
    %851 = vmatprep.subr.mxu0 0.0
    %852 = vmatpush1.msra.mxu0 0.0
    %853 = vmatprep.subr.mxu0 0.0
    %854 = vmatpush1.msra.mxu0 0.0
    %855 = vmatprep.subr.mxu0 0.0
    %856 = vmatpush1.msra.mxu0 0.0
    %857 = vmatprep.subr.mxu0 0.0
    %858 = vmatpush1.msra.mxu0 0.0
    %859 = vmatprep.subr.mxu0 0.0
    %860 = vmatpush1.msra.mxu0 0.0
    %861 = vmatprep.subr.mxu0 0.0
    %862 = vmatpush1.msra.mxu0 0.0
    %863 = vmatprep.subr.mxu0 0.0
    %864 = vmatpush1.msra.mxu0 0.0
    %865 = vmatprep.subr.mxu0 0.0
    %866 = vmatpush1.msra.mxu0 0.0
    %867 = vmatprep.subr.mxu0 0.0
    %868 = vmatpush1.msra.mxu0 0.0
    %869 = vmatprep.subr.mxu0 0.0
    %870 = vmatpush1.msra.mxu0 0.0
    %871 = vmatprep.subr.mxu0 0.0
    %872 = vmatpush1.msra.mxu0 0.0
    %873 = vmatprep.mubr.f32.mxu0 0.0
    %874 = vmatmul.mubr.f32.gmra.mrb[0].mxu0 %v800
    %v875 = vpop.f32.mrb[0].mxu0
    %v876 = vadd.f32 %v791, %v875
    %v877 = vpop.f32.mrb[0].mxu0
    %v878 = vadd.f32 %v795, %v877
    %879 = vdwg.mxu0
    %vm880 = vcmask 195584
    %v882 = vsel %vm880, %v469, 0
    %v885 = vsel %vm880, %v470, 0
    %887 = vmatprep.subr.mxu0 0.0
    %888 = vmatpush1.msra.mxu0 %v688
    %889 = vmatprep.subr.mxu0 0.0
    %890 = vmatpush1.msra.mxu0 %v694
    %891 = vmatprep.subr.mxu0 0.0
    %892 = vmatpush1.msra.mxu0 %v700
    %893 = vmatprep.subr.mxu0 0.0
    %894 = vmatpush1.msra.mxu0 0.0
    %895 = vmatprep.subr.mxu0 0.0
    %896 = vmatpush1.msra.mxu0 0.0
    %897 = vmatprep.subr.mxu0 0.0
    %898 = vmatpush1.msra.mxu0 0.0
    %899 = vmatprep.subr.mxu0 0.0
    %900 = vmatpush1.msra.mxu0 0.0
    %901 = vmatprep.subr.mxu0 0.0
    %902 = vmatpush1.msra.mxu0 0.0
    %903 = vmatprep.subr.mxu0 0.0
    %904 = vmatpush1.msra.mxu0 0.0
    %905 = vmatprep.subr.mxu0 0.0
    %906 = vmatpush1.msra.mxu0 0.0
    %907 = vmatprep.subr.mxu0 0.0
    %908 = vmatpush1.msra.mxu0 0.0
    %909 = vmatprep.subr.mxu0 0.0
    %910 = vmatpush1.msra.mxu0 0.0
    %911 = vmatprep.subr.mxu0 0.0
    %912 = vmatpush1.msra.mxu0 0.0
    %913 = vmatprep.subr.mxu0 0.0
    %914 = vmatpush1.msra.mxu0 0.0
    %915 = vmatprep.subr.mxu0 0.0
    %916 = vmatpush1.msra.mxu0 0.0
    %917 = vmatprep.subr.mxu0 0.0
    %918 = vmatpush1.msra.mxu0 0.0
    %919 = vmatprep.subr.mxu0 0.0
    %920 = vmatpush1.msra.mxu0 0.0
    %921 = vmatprep.subr.mxu0 0.0
    %922 = vmatpush1.msra.mxu0 0.0
    %923 = vmatprep.subr.mxu0 0.0
    %924 = vmatpush1.msra.mxu0 0.0
    %925 = vmatprep.subr.mxu0 0.0
    %926 = vmatpush1.msra.mxu0 0.0
    %927 = vmatprep.subr.mxu0 0.0
    %928 = vmatpush1.msra.mxu0 0.0
    %929 = vmatprep.subr.mxu0 0.0
    %930 = vmatpush1.msra.mxu0 0.0
    %931 = vmatprep.subr.mxu0 0.0
    %932 = vmatpush1.msra.mxu0 0.0
    %933 = vmatprep.subr.mxu0 0.0
    %934 = vmatpush1.msra.mxu0 0.0
    %935 = vmatprep.subr.mxu0 0.0
    %936 = vmatpush1.msra.mxu0 0.0
    %937 = vmatprep.subr.mxu0 0.0
    %938 = vmatpush1.msra.mxu0 0.0
    %939 = vmatprep.subr.mxu0 0.0
    %940 = vmatpush1.msra.mxu0 0.0
    %941 = vmatprep.subr.mxu0 0.0
    %942 = vmatpush1.msra.mxu0 0.0
    %943 = vmatprep.subr.mxu0 0.0
    %944 = vmatpush1.msra.mxu0 0.0
    %945 = vmatprep.subr.mxu0 0.0
    %946 = vmatpush1.msra.mxu0 0.0
    %947 = vmatprep.subr.mxu0 0.0
    %948 = vmatpush1.msra.mxu0 0.0
    %949 = vmatprep.subr.mxu0 0.0
    %950 = vmatpush1.msra.mxu0 0.0
    %951 = vmatprep.mubr.f32.mxu0 0.0
    %952 = vmatmul.mubr.f32.gmra.mrb[0].mxu0 %v882
    %v953 = vpop.f32.mrb[0].mxu0
    %v954 = vadd.f32 0.0, %v953
    %v955 = vpop.f32.mrb[0].mxu0
    %956 = vmatprep.mubr.f32.mxu0 0.0
    %957 = vmatmul.mubr.f32.gmra.mrb[0].mxu0 %v885
    %v958 = vpop.f32.mrb[0].mxu0
    %v959 = vadd.f32 0.0, %v958
    %v960 = vpop.f32.mrb[0].mxu0
    %961 = vdwg.mxu0
    %vm962 = vcmask 130048
    %v964 = vsel %vm962, %v457, 0
    %v967 = vsel %vm962, %v458, 0
    %969 = vmatprep.subr.mxu0 0.0
    %970 = vmatpush1.msra.mxu0 %v572
    %971 = vmatprep.subr.mxu0 0.0
    %972 = vmatpush1.msra.mxu0 %v578
    %973 = vmatprep.subr.mxu0 0.0
    %974 = vmatpush1.msra.mxu0 0.0
    %975 = vmatprep.subr.mxu0 0.0
    %976 = vmatpush1.msra.mxu0 0.0
    %977 = vmatprep.subr.mxu0 0.0
    %978 = vmatpush1.msra.mxu0 0.0
    %979 = vmatprep.subr.mxu0 0.0
    %980 = vmatpush1.msra.mxu0 0.0
    %981 = vmatprep.subr.mxu0 0.0
    %982 = vmatpush1.msra.mxu0 0.0
    %983 = vmatprep.subr.mxu0 0.0
    %984 = vmatpush1.msra.mxu0 0.0
    %985 = vmatprep.subr.mxu0 0.0
    %986 = vmatpush1.msra.mxu0 0.0
    %987 = vmatprep.subr.mxu0 0.0
    %988 = vmatpush1.msra.mxu0 0.0
    %989 = vmatprep.subr.mxu0 0.0
    %990 = vmatpush1.msra.mxu0 0.0
    %991 = vmatprep.subr.mxu0 0.0
    %992 = vmatpush1.msra.mxu0 0.0
    %993 = vmatprep.subr.mxu0 0.0
    %994 = vmatpush1.msra.mxu0 0.0
    %995 = vmatprep.subr.mxu0 0.0
    %996 = vmatpush1.msra.mxu0 0.0
    %997 = vmatprep.subr.mxu0 0.0
    %998 = vmatpush1.msra.mxu0 0.0
    %999 = vmatprep.subr.mxu0 0.0
    %1000 = vmatpush1.msra.mxu0 0.0
    %1001 = vmatprep.subr.mxu0 0.0
    %1002 = vmatpush1.msra.mxu0 0.0
    %1003 = vmatprep.subr.mxu0 0.0
    %1004 = vmatpush1.msra.mxu0 0.0
    %1005 = vmatprep.subr.mxu0 0.0
    %1006 = vmatpush1.msra.mxu0 0.0
    %1007 = vmatprep.subr.mxu0 0.0
    %1008 = vmatpush1.msra.mxu0 0.0
    %1009 = vmatprep.subr.mxu0 0.0
    %1010 = vmatpush1.msra.mxu0 0.0
    %1011 = vmatprep.subr.mxu0 0.0
    %1012 = vmatpush1.msra.mxu0 0.0
    %1013 = vmatprep.subr.mxu0 0.0
    %1014 = vmatpush1.msra.mxu0 0.0
    %1015 = vmatprep.subr.mxu0 0.0
    %1016 = vmatpush1.msra.mxu0 0.0
    %1017 = vmatprep.subr.mxu0 0.0
    %1018 = vmatpush1.msra.mxu0 0.0
    %1019 = vmatprep.subr.mxu0 0.0
    %1020 = vmatpush1.msra.mxu0 0.0
    %1021 = vmatprep.subr.mxu0 0.0
    %1022 = vmatpush1.msra.mxu0 0.0
    %1023 = vmatprep.subr.mxu0 0.0
    %1024 = vmatpush1.msra.mxu0 0.0
    %1025 = vmatprep.subr.mxu0 0.0
    %1026 = vmatpush1.msra.mxu0 0.0
    %1027 = vmatprep.subr.mxu0 0.0
    %1028 = vmatpush1.msra.mxu0 0.0
    %1029 = vmatprep.subr.mxu0 0.0
    %1030 = vmatpush1.msra.mxu0 0.0
    %1031 = vmatprep.subr.mxu0 0.0
    %1032 = vmatpush1.msra.mxu0 0.0
    %1033 = vmatprep.mubr.f32.mxu0 0.0
    %1034 = vmatmul.mubr.f32.gmra.mrb[0].mxu0 %v964
    %v1035 = vpop.f32.mrb[0].mxu0
    %v1036 = vadd.f32 %v954, %v1035
    %v1037 = vpop.f32.mrb[0].mxu0
    %1038 = vmatprep.mubr.f32.mxu0 0.0
    %1039 = vmatmul.mubr.f32.gmra.mrb[0].mxu0 %v967
    %v1040 = vpop.f32.mrb[0].mxu0
    %v1041 = vadd.f32 %v959, %v1040
    %v1042 = vpop.f32.mrb[0].mxu0
    %1043 = vdwg.mxu0
    %v1044 = vmax.f32 %v1036, 0.0
    %v1045 = vmax.f32 %v1041, 0.0
    %v1046 = vmul.f32 %v1044, 0.5
    %v1047 = vmul.f32 %v1045, 0.5
    %v1049 = vsel %vm962, %v466, 0
    %v1052 = vsel %vm962, %v467, 0
    %v1055 = vsel %vm962, %v468, 0
    %1057 = vmatprep.subr.mxu0 0.0
    %1058 = vmatpush1.msra.mxu0 %v574
    %1059 = vmatprep.subr.mxu0 0.0
    %1060 = vmatpush1.msra.mxu0 %v580
    %1061 = vmatprep.subr.mxu0 0.0
    %1062 = vmatpush1.msra.mxu0 0.0
    %1063 = vmatprep.subr.mxu0 0.0
    %1064 = vmatpush1.msra.mxu0 0.0
    %1065 = vmatprep.subr.mxu0 0.0
    %1066 = vmatpush1.msra.mxu0 0.0
    %1067 = vmatprep.subr.mxu0 0.0
    %1068 = vmatpush1.msra.mxu0 0.0
    %1069 = vmatprep.subr.mxu0 0.0
    %1070 = vmatpush1.msra.mxu0 0.0
    %1071 = vmatprep.subr.mxu0 0.0
    %1072 = vmatpush1.msra.mxu0 0.0
    %1073 = vmatprep.subr.mxu0 0.0
    %1074 = vmatpush1.msra.mxu0 0.0
    %1075 = vmatprep.subr.mxu0 0.0
    %1076 = vmatpush1.msra.mxu0 0.0
    %1077 = vmatprep.subr.mxu0 0.0
    %1078 = vmatpush1.msra.mxu0 0.0
    %1079 = vmatprep.subr.mxu0 0.0
    %1080 = vmatpush1.msra.mxu0 0.0
    %1081 = vmatprep.subr.mxu0 0.0
    %1082 = vmatpush1.msra.mxu0 0.0
    %1083 = vmatprep.subr.mxu0 0.0
    %1084 = vmatpush1.msra.mxu0 0.0
    %1085 = vmatprep.subr.mxu0 0.0
    %1086 = vmatpush1.msra.mxu0 0.0
    %1087 = vmatprep.subr.mxu0 0.0
    %1088 = vmatpush1.msra.mxu0 0.0
    %1089 = vmatprep.subr.mxu0 0.0
    %1090 = vmatpush1.msra.mxu0 0.0
    %1091 = vmatprep.subr.mxu0 0.0
    %1092 = vmatpush1.msra.mxu0 0.0
    %1093 = vmatprep.subr.mxu0 0.0
    %1094 = vmatpush1.msra.mxu0 0.0
    %1095 = vmatprep.subr.mxu0 0.0
    %1096 = vmatpush1.msra.mxu0 0.0
    %1097 = vmatprep.subr.mxu0 0.0
    %1098 = vmatpush1.msra.mxu0 0.0
    %1099 = vmatprep.subr.mxu0 0.0
    %1100 = vmatpush1.msra.mxu0 0.0
    %1101 = vmatprep.subr.mxu0 0.0
    %1102 = vmatpush1.msra.mxu0 0.0
    %1103 = vmatprep.subr.mxu0 0.0
    %1104 = vmatpush1.msra.mxu0 0.0
    %1105 = vmatprep.subr.mxu0 0.0
    %1106 = vmatpush1.msra.mxu0 0.0
    %1107 = vmatprep.subr.mxu0 0.0
    %1108 = vmatpush1.msra.mxu0 0.0
    %1109 = vmatprep.subr.mxu0 0.0
    %1110 = vmatpush1.msra.mxu0 0.0
    %1111 = vmatprep.subr.mxu0 0.0
    %1112 = vmatpush1.msra.mxu0 0.0
    %1113 = vmatprep.subr.mxu0 0.0
    %1114 = vmatpush1.msra.mxu0 0.0
    %1115 = vmatprep.subr.mxu0 0.0
    %1116 = vmatpush1.msra.mxu0 0.0
    %1117 = vmatprep.subr.mxu0 0.0
    %1118 = vmatpush1.msra.mxu0 0.0
    %1119 = vmatprep.subr.mxu0 0.0
    %1120 = vmatpush1.msra.mxu0 0.0
    %1121 = vmatprep.mubr.f32.mxu0 0.0
    %1122 = vmatmul.mubr.f32.gmra.mrb[0].mxu0 %v1049
    %v1123 = vpop.f32.mrb[0].mxu0
    %v1124 = vadd.f32 0.0, %v1123
    %v1125 = vpop.f32.mrb[0].mxu0
    %1126 = vmatprep.mubr.f32.mxu0 0.0
    %1127 = vmatmul.mubr.f32.gmra.mrb[0].mxu0 %v1052
    %v1128 = vpop.f32.mrb[0].mxu0
    %v1129 = vadd.f32 0.0, %v1128
    %v1130 = vpop.f32.mrb[0].mxu0
    %1131 = vmatprep.mubr.f32.mxu0 0.0
    %1132 = vmatmul.mubr.f32.gmra.mrb[0].mxu0 %v1055
    %v1133 = vpop.f32.mrb[0].mxu0
    %v1134 = vadd.f32 0.0, %v1133
    %v1135 = vpop.f32.mrb[0].mxu0
    %1136 = vdwg.mxu0
    %v1138 = vsel %vm880, %v459, 0
    %v1141 = vsel %vm880, %v460, 0
    %v1144 = vsel %vm880, %v461, 0
    %1146 = vmatprep.subr.mxu0 0.0
    %1147 = vmatpush1.msra.mxu0 %v690
    %1148 = vmatprep.subr.mxu0 0.0
    %1149 = vmatpush1.msra.mxu0 %v696
    %1150 = vmatprep.subr.mxu0 0.0
    %1151 = vmatpush1.msra.mxu0 %v702
    %1152 = vmatprep.subr.mxu0 0.0
    %1153 = vmatpush1.msra.mxu0 0.0
    %1154 = vmatprep.subr.mxu0 0.0
    %1155 = vmatpush1.msra.mxu0 0.0
    %1156 = vmatprep.subr.mxu0 0.0
    %1157 = vmatpush1.msra.mxu0 0.0
    %1158 = vmatprep.subr.mxu0 0.0
    %1159 = vmatpush1.msra.mxu0 0.0
    %1160 = vmatprep.subr.mxu0 0.0
    %1161 = vmatpush1.msra.mxu0 0.0
    %1162 = vmatprep.subr.mxu0 0.0
    %1163 = vmatpush1.msra.mxu0 0.0
    %1164 = vmatprep.subr.mxu0 0.0
    %1165 = vmatpush1.msra.mxu0 0.0
    %1166 = vmatprep.subr.mxu0 0.0
    %1167 = vmatpush1.msra.mxu0 0.0
    %1168 = vmatprep.subr.mxu0 0.0
    %1169 = vmatpush1.msra.mxu0 0.0
    %1170 = vmatprep.subr.mxu0 0.0
    %1171 = vmatpush1.msra.mxu0 0.0
    %1172 = vmatprep.subr.mxu0 0.0
    %1173 = vmatpush1.msra.mxu0 0.0
    %1174 = vmatprep.subr.mxu0 0.0
    %1175 = vmatpush1.msra.mxu0 0.0
    %1176 = vmatprep.subr.mxu0 0.0
    %1177 = vmatpush1.msra.mxu0 0.0
    %1178 = vmatprep.subr.mxu0 0.0
    %1179 = vmatpush1.msra.mxu0 0.0
    %1180 = vmatprep.subr.mxu0 0.0
    %1181 = vmatpush1.msra.mxu0 0.0
    %1182 = vmatprep.subr.mxu0 0.0
    %1183 = vmatpush1.msra.mxu0 0.0
    %1184 = vmatprep.subr.mxu0 0.0
    %1185 = vmatpush1.msra.mxu0 0.0
    %1186 = vmatprep.subr.mxu0 0.0
    %1187 = vmatpush1.msra.mxu0 0.0
    %1188 = vmatprep.subr.mxu0 0.0
    %1189 = vmatpush1.msra.mxu0 0.0
    %1190 = vmatprep.subr.mxu0 0.0
    %1191 = vmatpush1.msra.mxu0 0.0
    %1192 = vmatprep.subr.mxu0 0.0
    %1193 = vmatpush1.msra.mxu0 0.0
    %1194 = vmatprep.subr.mxu0 0.0
    %1195 = vmatpush1.msra.mxu0 0.0
    %1196 = vmatprep.subr.mxu0 0.0
    %1197 = vmatpush1.msra.mxu0 0.0
    %1198 = vmatprep.subr.mxu0 0.0
    %1199 = vmatpush1.msra.mxu0 0.0
    %1200 = vmatprep.subr.mxu0 0.0
    %1201 = vmatpush1.msra.mxu0 0.0
    %1202 = vmatprep.subr.mxu0 0.0
    %1203 = vmatpush1.msra.mxu0 0.0
    %1204 = vmatprep.subr.mxu0 0.0
    %1205 = vmatpush1.msra.mxu0 0.0
    %1206 = vmatprep.subr.mxu0 0.0
    %1207 = vmatpush1.msra.mxu0 0.0
    %1208 = vmatprep.subr.mxu0 0.0
    %1209 = vmatpush1.msra.mxu0 0.0
    %1210 = vmatprep.mubr.f32.mxu0 0.0
    %1211 = vmatmul.mubr.f32.gmra.mrb[0].mxu0 %v1138
    %v1212 = vpop.f32.mrb[0].mxu0
    %v1213 = vadd.f32 %v1124, %v1212
    %v1214 = vpop.f32.mrb[0].mxu0
    %1215 = vmatprep.mubr.f32.mxu0 0.0
    %1216 = vmatmul.mubr.f32.gmra.mrb[0].mxu0 %v1141
    %v1217 = vpop.f32.mrb[0].mxu0
    %v1218 = vadd.f32 %v1129, %v1217
    %v1219 = vpop.f32.mrb[0].mxu0
    %1220 = vmatprep.mubr.f32.mxu0 0.0
    %1221 = vmatmul.mubr.f32.gmra.mrb[0].mxu0 %v1144
    %v1222 = vpop.f32.mrb[0].mxu0
    %v1223 = vadd.f32 %v1134, %v1222
    %v1224 = vpop.f32.mrb[0].mxu0
    %1225 = vdwg.mxu0
    %vm1226 = vcmask 64512
    %v1228 = vsel %vm1226, %v463, 0
    %v1231 = vsel %vm1226, %v464, 0
    %v1234 = vsel %vm1226, %v465, 0
    %1236 = vmatprep.subr.mxu0 0.0
    %1237 = vmatpush1.msra.mxu0 %v878
    %1238 = vmatprep.subr.mxu0 0.0
    %1239 = vmatpush1.msra.mxu0 0.0
    %1240 = vmatprep.subr.mxu0 0.0
    %1241 = vmatpush1.msra.mxu0 0.0
    %1242 = vmatprep.subr.mxu0 0.0
    %1243 = vmatpush1.msra.mxu0 0.0
    %1244 = vmatprep.subr.mxu0 0.0
    %1245 = vmatpush1.msra.mxu0 0.0
    %1246 = vmatprep.subr.mxu0 0.0
    %1247 = vmatpush1.msra.mxu0 0.0
    %1248 = vmatprep.subr.mxu0 0.0
    %1249 = vmatpush1.msra.mxu0 0.0
    %1250 = vmatprep.subr.mxu0 0.0
    %1251 = vmatpush1.msra.mxu0 0.0
    %1252 = vmatprep.subr.mxu0 0.0
    %1253 = vmatpush1.msra.mxu0 0.0
    %1254 = vmatprep.subr.mxu0 0.0
    %1255 = vmatpush1.msra.mxu0 0.0
    %1256 = vmatprep.subr.mxu0 0.0
    %1257 = vmatpush1.msra.mxu0 0.0
    %1258 = vmatprep.subr.mxu0 0.0
    %1259 = vmatpush1.msra.mxu0 0.0
    %1260 = vmatprep.subr.mxu0 0.0
    %1261 = vmatpush1.msra.mxu0 0.0
    %1262 = vmatprep.subr.mxu0 0.0
    %1263 = vmatpush1.msra.mxu0 0.0
    %1264 = vmatprep.subr.mxu0 0.0
    %1265 = vmatpush1.msra.mxu0 0.0
    %1266 = vmatprep.subr.mxu0 0.0
    %1267 = vmatpush1.msra.mxu0 0.0
    %1268 = vmatprep.subr.mxu0 0.0
    %1269 = vmatpush1.msra.mxu0 0.0
    %1270 = vmatprep.subr.mxu0 0.0
    %1271 = vmatpush1.msra.mxu0 0.0
    %1272 = vmatprep.subr.mxu0 0.0
    %1273 = vmatpush1.msra.mxu0 0.0
    %1274 = vmatprep.subr.mxu0 0.0
    %1275 = vmatpush1.msra.mxu0 0.0
    %1276 = vmatprep.subr.mxu0 0.0
    %1277 = vmatpush1.msra.mxu0 0.0
    %1278 = vmatprep.subr.mxu0 0.0
    %1279 = vmatpush1.msra.mxu0 0.0
    %1280 = vmatprep.subr.mxu0 0.0
    %1281 = vmatpush1.msra.mxu0 0.0
    %1282 = vmatprep.subr.mxu0 0.0
    %1283 = vmatpush1.msra.mxu0 0.0
    %1284 = vmatprep.subr.mxu0 0.0
    %1285 = vmatpush1.msra.mxu0 0.0
    %1286 = vmatprep.subr.mxu0 0.0
    %1287 = vmatpush1.msra.mxu0 0.0
    %1288 = vmatprep.subr.mxu0 0.0
    %1289 = vmatpush1.msra.mxu0 0.0
    %1290 = vmatprep.subr.mxu0 0.0
    %1291 = vmatpush1.msra.mxu0 0.0
    %1292 = vmatprep.subr.mxu0 0.0
    %1293 = vmatpush1.msra.mxu0 0.0
    %1294 = vmatprep.subr.mxu0 0.0
    %1295 = vmatpush1.msra.mxu0 0.0
    %1296 = vmatprep.subr.mxu0 0.0
    %1297 = vmatpush1.msra.mxu0 0.0
    %1298 = vmatprep.subr.mxu0 0.0
    %1299 = vmatpush1.msra.mxu0 0.0
    %1300 = vmatprep.mubr.f32.mxu0 0.0
    %1301 = vmatmul.mubr.f32.gmra.mrb[0].mxu0 %v1228
    %v1302 = vpop.f32.mrb[0].mxu0
    %v1303 = vadd.f32 0.0, %v1302
    %v1304 = vpop.f32.mrb[0].mxu0
    %1305 = vmatprep.mubr.f32.mxu0 0.0
    %1306 = vmatmul.mubr.f32.gmra.mrb[0].mxu0 %v1231
    %v1307 = vpop.f32.mrb[0].mxu0
    %v1308 = vadd.f32 0.0, %v1307
    %v1309 = vpop.f32.mrb[0].mxu0
    %1310 = vmatprep.mubr.f32.mxu0 0.0
    %1311 = vmatmul.mubr.f32.gmra.mrb[0].mxu0 %v1234
    %v1312 = vpop.f32.mrb[0].mxu0
    %v1313 = vadd.f32 0.0, %v1312
    %v1314 = vpop.f32.mrb[0].mxu0
    %1315 = vdwg.mxu0
    %v1316 = vadd.f32 %v1213, %v1303
    %v1317 = vadd.f32 %v1218, %v1308
    %v1318 = vadd.f32 %v1223, %v1313
    %v1319 = vmax.f32 %v1316, 0.0
    %v1320 = vmax.f32 %v1317, 0.0
    %v1321 = vmax.f32 %v1318, 0.0
    %v1322 = vmul.f32 %v1319, 0.33333334
    %v1323 = vmul.f32 %v1320, 0.33333334
    %v1324 = vmul.f32 %v1321, 0.33333334
    %v1326 = vsel %vm880, %v471, 0
    %1328 = vmatprep.subr.mxu0 0.0
    %1329 = vmatpush1.msra.mxu0 %v771
    %1330 = vmatprep.subr.mxu0 0.0
    %1331 = vmatpush1.msra.mxu0 %v776
    %1332 = vmatprep.subr.mxu0 0.0
    %1333 = vmatpush1.msra.mxu0 %v781
    %1334 = vmatprep.subr.mxu0 0.0
    %1335 = vmatpush1.msra.mxu0 0.0
    %1336 = vmatprep.subr.mxu0 0.0
    %1337 = vmatpush1.msra.mxu0 0.0
    %1338 = vmatprep.subr.mxu0 0.0
    %1339 = vmatpush1.msra.mxu0 0.0
    %1340 = vmatprep.subr.mxu0 0.0
    %1341 = vmatpush1.msra.mxu0 0.0
    %1342 = vmatprep.subr.mxu0 0.0
    %1343 = vmatpush1.msra.mxu0 0.0
    %1344 = vmatprep.subr.mxu0 0.0
    %1345 = vmatpush1.msra.mxu0 0.0
    %1346 = vmatprep.subr.mxu0 0.0
    %1347 = vmatpush1.msra.mxu0 0.0
    %1348 = vmatprep.subr.mxu0 0.0
    %1349 = vmatpush1.msra.mxu0 0.0
    %1350 = vmatprep.subr.mxu0 0.0
    %1351 = vmatpush1.msra.mxu0 0.0
    %1352 = vmatprep.subr.mxu0 0.0
    %1353 = vmatpush1.msra.mxu0 0.0
    %1354 = vmatprep.subr.mxu0 0.0
    %1355 = vmatpush1.msra.mxu0 0.0
    %1356 = vmatprep.subr.mxu0 0.0
    %1357 = vmatpush1.msra.mxu0 0.0
    %1358 = vmatprep.subr.mxu0 0.0
    %1359 = vmatpush1.msra.mxu0 0.0
    %1360 = vmatprep.subr.mxu0 0.0
    %1361 = vmatpush1.msra.mxu0 0.0
    %1362 = vmatprep.subr.mxu0 0.0
    %1363 = vmatpush1.msra.mxu0 0.0
    %1364 = vmatprep.subr.mxu0 0.0
    %1365 = vmatpush1.msra.mxu0 0.0
    %1366 = vmatprep.subr.mxu0 0.0
    %1367 = vmatpush1.msra.mxu0 0.0
    %1368 = vmatprep.subr.mxu0 0.0
    %1369 = vmatpush1.msra.mxu0 0.0
    %1370 = vmatprep.subr.mxu0 0.0
    %1371 = vmatpush1.msra.mxu0 0.0
    %1372 = vmatprep.subr.mxu0 0.0
    %1373 = vmatpush1.msra.mxu0 0.0
    %1374 = vmatprep.subr.mxu0 0.0
    %1375 = vmatpush1.msra.mxu0 0.0
    %1376 = vmatprep.subr.mxu0 0.0
    %1377 = vmatpush1.msra.mxu0 0.0
    %1378 = vmatprep.subr.mxu0 0.0
    %1379 = vmatpush1.msra.mxu0 0.0
    %1380 = vmatprep.subr.mxu0 0.0
    %1381 = vmatpush1.msra.mxu0 0.0
    %1382 = vmatprep.subr.mxu0 0.0
    %1383 = vmatpush1.msra.mxu0 0.0
    %1384 = vmatprep.subr.mxu0 0.0
    %1385 = vmatpush1.msra.mxu0 0.0
    %1386 = vmatprep.subr.mxu0 0.0
    %1387 = vmatpush1.msra.mxu0 0.0
    %1388 = vmatprep.subr.mxu0 0.0
    %1389 = vmatpush1.msra.mxu0 0.0
    %1390 = vmatprep.subr.mxu0 0.0
    %1391 = vmatpush1.msra.mxu0 0.0
    %1392 = vmatprep.mubr.f32.mxu0 0.0
    %1393 = vmatmul.mubr.f32.gmra.mrb[0].mxu0 %v1326
    %v1394 = vpop.f32.mrb[0].mxu0
    %v1395 = vadd.f32 0.0, %v1394
    %v1396 = vpop.f32.mrb[0].mxu0
    %1397 = vdwg.mxu0
    %v1399 = vsel %vm1226, %v462, 0
    %1401 = vmatprep.subr.mxu0 0.0
    %1402 = vmatpush1.msra.mxu0 %v876
    %1403 = vmatprep.subr.mxu0 0.0
    %1404 = vmatpush1.msra.mxu0 0.0
    %1405 = vmatprep.subr.mxu0 0.0
    %1406 = vmatpush1.msra.mxu0 0.0
    %1407 = vmatprep.subr.mxu0 0.0
    %1408 = vmatpush1.msra.mxu0 0.0
    %1409 = vmatprep.subr.mxu0 0.0
    %1410 = vmatpush1.msra.mxu0 0.0
    %1411 = vmatprep.subr.mxu0 0.0
    %1412 = vmatpush1.msra.mxu0 0.0
    %1413 = vmatprep.subr.mxu0 0.0
    %1414 = vmatpush1.msra.mxu0 0.0
    %1415 = vmatprep.subr.mxu0 0.0
    %1416 = vmatpush1.msra.mxu0 0.0
    %1417 = vmatprep.subr.mxu0 0.0
    %1418 = vmatpush1.msra.mxu0 0.0
    %1419 = vmatprep.subr.mxu0 0.0
    %1420 = vmatpush1.msra.mxu0 0.0
    %1421 = vmatprep.subr.mxu0 0.0
    %1422 = vmatpush1.msra.mxu0 0.0
    %1423 = vmatprep.subr.mxu0 0.0
    %1424 = vmatpush1.msra.mxu0 0.0
    %1425 = vmatprep.subr.mxu0 0.0
    %1426 = vmatpush1.msra.mxu0 0.0
    %1427 = vmatprep.subr.mxu0 0.0
    %1428 = vmatpush1.msra.mxu0 0.0
    %1429 = vmatprep.subr.mxu0 0.0
    %1430 = vmatpush1.msra.mxu0 0.0
    %1431 = vmatprep.subr.mxu0 0.0
    %1432 = vmatpush1.msra.mxu0 0.0
    %1433 = vmatprep.subr.mxu0 0.0
    %1434 = vmatpush1.msra.mxu0 0.0
    %1435 = vmatprep.subr.mxu0 0.0
    %1436 = vmatpush1.msra.mxu0 0.0
    %1437 = vmatprep.subr.mxu0 0.0
    %1438 = vmatpush1.msra.mxu0 0.0
    %1439 = vmatprep.subr.mxu0 0.0
    %1440 = vmatpush1.msra.mxu0 0.0
    %1441 = vmatprep.subr.mxu0 0.0
    %1442 = vmatpush1.msra.mxu0 0.0
    %1443 = vmatprep.subr.mxu0 0.0
    %1444 = vmatpush1.msra.mxu0 0.0
    %1445 = vmatprep.subr.mxu0 0.0
    %1446 = vmatpush1.msra.mxu0 0.0
    %1447 = vmatprep.subr.mxu0 0.0
    %1448 = vmatpush1.msra.mxu0 0.0
    %1449 = vmatprep.subr.mxu0 0.0
    %1450 = vmatpush1.msra.mxu0 0.0
    %1451 = vmatprep.subr.mxu0 0.0
    %1452 = vmatpush1.msra.mxu0 0.0
    %1453 = vmatprep.subr.mxu0 0.0
    %1454 = vmatpush1.msra.mxu0 0.0
    %1455 = vmatprep.subr.mxu0 0.0
    %1456 = vmatpush1.msra.mxu0 0.0
    %1457 = vmatprep.subr.mxu0 0.0
    %1458 = vmatpush1.msra.mxu0 0.0
    %1459 = vmatprep.subr.mxu0 0.0
    %1460 = vmatpush1.msra.mxu0 0.0
    %1461 = vmatprep.subr.mxu0 0.0
    %1462 = vmatpush1.msra.mxu0 0.0
    %1463 = vmatprep.subr.mxu0 0.0
    %1464 = vmatpush1.msra.mxu0 0.0
    %1465 = vmatprep.mubr.f32.mxu0 0.0
    %1466 = vmatmul.mubr.f32.gmra.mrb[0].mxu0 %v1399
    %v1467 = vpop.f32.mrb[0].mxu0
    %v1468 = vadd.f32 %v1395, %v1467
    %v1469 = vpop.f32.mrb[0].mxu0
    %1470 = vdwg.mxu0
    %v1471 = vmax.f32 %v1468, 0.0
    %v1472 = vmul.f32 %v1471, 0.5
    %v1473 = vld [vmem:[%s39] sm:$0xff]
    %v1474 = vld [vmem:[%s39 + $0x8] sm:$0xff]
    %v1475 = vld [vmem:[%s39 + $0x10] sm:$0xff]
    %v1476 = vld [vmem:[%s39 + $0x18] sm:$0xff]
    %v1477 = vld [vmem:[%s39 + $0x20] sm:$0xff]
    %v1478 = vld [vmem:[%s39 + $0x28] sm:$0xff]
    %v1479 = vld [vmem:[%s39 + $0x30] sm:$0xff]
    %v1480 = vld [vmem:[%s39 + $0x38] sm:$0xff]
    %v1481 = vld [vmem:[%s39 + $0x40] sm:$0xff]
    %v1482 = vld [vmem:[%s39 + $0x48] sm:$0xff]
    %v1483 = vld [vmem:[%s39 + $0x50] sm:$0xff]
    %v1484 = vld [vmem:[%s39 + $0x58] sm:$0xff]
    %v1485 = vld [vmem:[%s39 + $0x60] sm:$0xff]
    %v1486 = vld [vmem:[%s39 + $0x68] sm:$0xff]
    %v1487 = vld [vmem:[%s39 + $0x70] sm:$0xff]
    %v1488 = vld [vmem:[%s39 + $0x78] sm:$0xff]
    %v1489 = vld [vmem:[%s39 + $0x80] sm:$0xff]
    %v1490 = vld [vmem:[%s39 + $0x88] sm:$0xff]
    %v1491 = vld [vmem:[%s39 + $0x90] sm:$0xff]
    %v1492 = vld [vmem:[%s39 + $0x98] sm:$0xff]
    %v1493 = vld [vmem:[%s39 + $0xa0] sm:$0xff]
    %v1494 = vld [vmem:[%s39 + $0xa8] sm:$0xff]
    %v1495 = vld [vmem:[%s39 + $0xb0] sm:$0xff]
    %v1496 = vld [vmem:[%s39 + $0xb8] sm:$0xff]
    %v1497 = vld [vmem:[%s39 + $0xc0] sm:$0xff]
    %v1498 = vld [vmem:[%s39 + $0xc8] sm:$0xff]
    %v1499 = vld [vmem:[%s39 + $0xd0] sm:$0xff]
    %v1500 = vld [vmem:[%s39 + $0xd8] sm:$0xff]
    %v1501 = vld [vmem:[%s39 + $0xe0] sm:$0xff]
    %v1502 = vld [vmem:[%s39 + $0xe8] sm:$0xff]
    %v1503 = vld [vmem:[%s39 + $0xf0] sm:$0xff]
    %v1504 = vld [vmem:[%s39 + $0xf8] sm:$0xff]
    %v1505 = vld [vmem:[#allocation16] sm:$0x3]
    %v1507 = vlaneseq
    %v1508 = vshrl.u32 %v1507, 7
    %v1509 = vsub.s32 0, %v1508
    %v1510 = vrot.slane %v1505, %v1509
    %v1511 = vlaneseq
    %v1512 = vshrl.u32 %v1511, 7
    %v1513 = vsub.s32 1, %v1512
    %v1514 = vrot.slane %v1505, %v1513
    %1517 = vmatprep.subr.mxu0 %v1474
    %1518 = vmatpush1.msra.mxu0 %v1473
    %1519 = vmatprep.subr.mxu0 %v1476
    %1520 = vmatpush1.msra.mxu0 %v1475
    %1521 = vmatprep.subr.mxu0 %v1478
    %1522 = vmatpush1.msra.mxu0 %v1477
    %1523 = vmatprep.subr.mxu0 %v1480
    %1524 = vmatpush1.msra.mxu0 %v1479
    %1525 = vmatprep.subr.mxu0 %v1482
    %1526 = vmatpush1.msra.mxu0 %v1481
    %1527 = vmatprep.subr.mxu0 %v1484
    %1528 = vmatpush1.msra.mxu0 %v1483
    %1529 = vmatprep.subr.mxu0 %v1486
    %1530 = vmatpush1.msra.mxu0 %v1485
    %1531 = vmatprep.subr.mxu0 %v1488
    %1532 = vmatpush1.msra.mxu0 %v1487
    %1533 = vmatprep.subr.mxu0 %v1490
    %1534 = vmatpush1.msra.mxu0 %v1489
    %1535 = vmatprep.subr.mxu0 %v1492
    %1536 = vmatpush1.msra.mxu0 %v1491
    %1537 = vmatprep.subr.mxu0 %v1494
    %1538 = vmatpush1.msra.mxu0 %v1493
    %1539 = vmatprep.subr.mxu0 %v1496
    %1540 = vmatpush1.msra.mxu0 %v1495
    %1541 = vmatprep.subr.mxu0 %v1498
    %1542 = vmatpush1.msra.mxu0 %v1497
    %1543 = vmatprep.subr.mxu0 %v1500
    %1544 = vmatpush1.msra.mxu0 %v1499
    %1545 = vmatprep.subr.mxu0 %v1502
    %1546 = vmatpush1.msra.mxu0 %v1501
    %1547 = vmatprep.subr.mxu0 %v1504
    %1548 = vmatpush1.msra.mxu0 %v1503
    %1549 = vmatprep.subr.mxu0 0.0
    %1550 = vmatpush1.msra.mxu0 0.0
    %1551 = vmatprep.subr.mxu0 0.0
    %1552 = vmatpush1.msra.mxu0 0.0
    %1553 = vmatprep.subr.mxu0 0.0
    %1554 = vmatpush1.msra.mxu0 0.0
    %1555 = vmatprep.subr.mxu0 0.0
    %1556 = vmatpush1.msra.mxu0 0.0
    %1557 = vmatprep.subr.mxu0 0.0
    %1558 = vmatpush1.msra.mxu0 0.0
    %1559 = vmatprep.subr.mxu0 0.0
    %1560 = vmatpush1.msra.mxu0 0.0
    %1561 = vmatprep.subr.mxu0 0.0
    %1562 = vmatpush1.msra.mxu0 0.0
    %1563 = vmatprep.subr.mxu0 0.0
    %1564 = vmatpush1.msra.mxu0 0.0
    %1565 = vmatprep.subr.mxu0 0.0
    %1566 = vmatpush1.msra.mxu0 0.0
    %1567 = vmatprep.subr.mxu0 0.0
    %1568 = vmatpush1.msra.mxu0 0.0
    %1569 = vmatprep.subr.mxu0 0.0
    %1570 = vmatpush1.msra.mxu0 0.0
    %1571 = vmatprep.subr.mxu0 0.0
    %1572 = vmatpush1.msra.mxu0 0.0
    %1573 = vmatprep.subr.mxu0 0.0
    %1574 = vmatpush1.msra.mxu0 0.0
    %1575 = vmatprep.subr.mxu0 0.0
    %1576 = vmatpush1.msra.mxu0 0.0
    %1577 = vmatprep.subr.mxu0 0.0
    %1578 = vmatpush1.msra.mxu0 0.0
    %1579 = vmatprep.subr.mxu0 0.0
    %1580 = vmatpush1.msra.mxu0 0.0
    %1581 = vmatprep.mubr.f32.mxu0 0.0
    %1582 = vmatmul.mubr.f32.gmra.mrb[0].mxu0 %v1046
    %v1583 = vpop.f32.mrb[0].mxu0
    %v1584 = vadd.f32 %v1510, %v1583
    %v1585 = vpop.f32.mrb[0].mxu0
    %v1586 = vadd.f32 %v1514, %v1585
    %1587 = vmatprep.mubr.f32.mxu0 0.0
    %1588 = vmatmul.mubr.f32.gmra.mrb[0].mxu0 %v1047
    %v1589 = vpop.f32.mrb[0].mxu0
    %v1590 = vadd.f32 %v1510, %v1589
    %v1591 = vpop.f32.mrb[0].mxu0
    %v1592 = vadd.f32 %v1514, %v1591
    %1593 = vdwg.mxu0
    %v1594 = vld [vmem:[%s43] sm:$0xff]
    %v1595 = vld [vmem:[%s43 + $0x8] sm:$0xff]
    %v1596 = vld [vmem:[%s43 + $0x10] sm:$0xff]
    %v1597 = vld [vmem:[%s43 + $0x18] sm:$0xff]
    %v1598 = vld [vmem:[%s43 + $0x20] sm:$0xff]
    %v1599 = vld [vmem:[%s43 + $0x28] sm:$0xff]
    %v1600 = vld [vmem:[%s43 + $0x30] sm:$0xff]
    %v1601 = vld [vmem:[%s43 + $0x38] sm:$0xff]
    %v1602 = vld [vmem:[%s43 + $0x40] sm:$0xff]
    %v1603 = vld [vmem:[%s43 + $0x48] sm:$0xff]
    %v1604 = vld [vmem:[%s43 + $0x50] sm:$0xff]
    %v1605 = vld [vmem:[%s43 + $0x58] sm:$0xff]
    %v1606 = vld [vmem:[%s43 + $0x60] sm:$0xff]
    %v1607 = vld [vmem:[%s43 + $0x68] sm:$0xff]
    %v1608 = vld [vmem:[%s43 + $0x70] sm:$0xff]
    %v1609 = vld [vmem:[%s43 + $0x78] sm:$0xff]
    %v1610 = vld [vmem:[%s43 + $0x80] sm:$0xff]
    %v1611 = vld [vmem:[%s43 + $0x88] sm:$0xff]
    %v1612 = vld [vmem:[%s43 + $0x90] sm:$0xff]
    %v1613 = vld [vmem:[%s43 + $0x98] sm:$0xff]
    %v1614 = vld [vmem:[%s43 + $0xa0] sm:$0xff]
    %v1615 = vld [vmem:[%s43 + $0xa8] sm:$0xff]
    %v1616 = vld [vmem:[%s43 + $0xb0] sm:$0xff]
    %v1617 = vld [vmem:[%s43 + $0xb8] sm:$0xff]
    %v1618 = vld [vmem:[%s43 + $0xc0] sm:$0xff]
    %v1619 = vld [vmem:[%s43 + $0xc8] sm:$0xff]
    %v1620 = vld [vmem:[%s43 + $0xd0] sm:$0xff]
    %v1621 = vld [vmem:[%s43 + $0xd8] sm:$0xff]
    %v1622 = vld [vmem:[%s43 + $0xe0] sm:$0xff]
    %v1623 = vld [vmem:[%s43 + $0xe8] sm:$0xff]
    %v1624 = vld [vmem:[%s43 + $0xf0] sm:$0xff]
    %v1625 = vld [vmem:[%s43 + $0xf8] sm:$0xff]
    %v1626 = vld [vmem:[%s43 + $0x100] sm:$0xff]
    %v1627 = vld [vmem:[%s43 + $0x108] sm:$0xff]
    %v1628 = vld [vmem:[%s43 + $0x110] sm:$0xff]
    %v1629 = vld [vmem:[%s43 + $0x118] sm:$0xff]
    %v1630 = vld [vmem:[%s43 + $0x120] sm:$0xff]
    %v1631 = vld [vmem:[%s43 + $0x128] sm:$0xff]
    %v1632 = vld [vmem:[%s43 + $0x130] sm:$0xff]
    %v1633 = vld [vmem:[%s43 + $0x138] sm:$0xff]
    %v1634 = vld [vmem:[%s43 + $0x140] sm:$0xff]
    %v1635 = vld [vmem:[%s43 + $0x148] sm:$0xff]
    %v1636 = vld [vmem:[%s43 + $0x150] sm:$0xff]
    %v1637 = vld [vmem:[%s43 + $0x158] sm:$0xff]
    %v1638 = vld [vmem:[%s43 + $0x160] sm:$0xff]
    %v1639 = vld [vmem:[%s43 + $0x168] sm:$0xff]
    %v1640 = vld [vmem:[%s43 + $0x170] sm:$0xff]
    %v1641 = vld [vmem:[%s43 + $0x178] sm:$0xff]
    %v1642 = vld [vmem:[#allocation17] sm:$0x7]
    %v1644 = vlaneseq
    %v1645 = vshrl.u32 %v1644, 7
    %v1646 = vsub.s32 0, %v1645
    %v1647 = vrot.slane %v1642, %v1646
    %v1648 = vlaneseq
    %v1649 = vshrl.u32 %v1648, 7
    %v1650 = vsub.s32 1, %v1649
    %v1651 = vrot.slane %v1642, %v1650
    %v1652 = vlaneseq
    %v1653 = vshrl.u32 %v1652, 7
    %v1654 = vsub.s32 2, %v1653
    %v1655 = vrot.slane %v1642, %v1654
    %1659 = vmatprep.subr.mxu0 %v1595
    %1660 = vmatpush1.msra.mxu0 %v1594
    %1661 = vmatprep.subr.mxu0 %v1598
    %1662 = vmatpush1.msra.mxu0 %v1597
    %1663 = vmatprep.subr.mxu0 %v1601
    %1664 = vmatpush1.msra.mxu0 %v1600
    %1665 = vmatprep.subr.mxu0 %v1604
    %1666 = vmatpush1.msra.mxu0 %v1603
    %1667 = vmatprep.subr.mxu0 %v1607
    %1668 = vmatpush1.msra.mxu0 %v1606
    %1669 = vmatprep.subr.mxu0 %v1610
    %1670 = vmatpush1.msra.mxu0 %v1609
    %1671 = vmatprep.subr.mxu0 %v1613
    %1672 = vmatpush1.msra.mxu0 %v1612
    %1673 = vmatprep.subr.mxu0 %v1616
    %1674 = vmatpush1.msra.mxu0 %v1615
    %1675 = vmatprep.subr.mxu0 %v1619
    %1676 = vmatpush1.msra.mxu0 %v1618
    %1677 = vmatprep.subr.mxu0 %v1622
    %1678 = vmatpush1.msra.mxu0 %v1621
    %1679 = vmatprep.subr.mxu0 %v1625
    %1680 = vmatpush1.msra.mxu0 %v1624
    %1681 = vmatprep.subr.mxu0 %v1628
    %1682 = vmatpush1.msra.mxu0 %v1627
    %1683 = vmatprep.subr.mxu0 %v1631
    %1684 = vmatpush1.msra.mxu0 %v1630
    %1685 = vmatprep.subr.mxu0 %v1634
    %1686 = vmatpush1.msra.mxu0 %v1633
    %1687 = vmatprep.subr.mxu0 %v1637
    %1688 = vmatpush1.msra.mxu0 %v1636
    %1689 = vmatprep.subr.mxu0 %v1640
    %1690 = vmatpush1.msra.mxu0 %v1639
    %1691 = vmatprep.subr.mxu0 0.0
    %1692 = vmatpush1.msra.mxu0 0.0
    %1693 = vmatprep.subr.mxu0 0.0
    %1694 = vmatpush1.msra.mxu0 0.0
    %1695 = vmatprep.subr.mxu0 0.0
    %1696 = vmatpush1.msra.mxu0 0.0
    %1697 = vmatprep.subr.mxu0 0.0
    %1698 = vmatpush1.msra.mxu0 0.0
    %1699 = vmatprep.subr.mxu0 0.0
    %1700 = vmatpush1.msra.mxu0 0.0
    %1701 = vmatprep.subr.mxu0 0.0
    %1702 = vmatpush1.msra.mxu0 0.0
    %1703 = vmatprep.subr.mxu0 0.0
    %1704 = vmatpush1.msra.mxu0 0.0
    %1705 = vmatprep.subr.mxu0 0.0
    %1706 = vmatpush1.msra.mxu0 0.0
    %1707 = vmatprep.subr.mxu0 0.0
    %1708 = vmatpush1.msra.mxu0 0.0
    %1709 = vmatprep.subr.mxu0 0.0
    %1710 = vmatpush1.msra.mxu0 0.0
    %1711 = vmatprep.subr.mxu0 0.0
    %1712 = vmatpush1.msra.mxu0 0.0
    %1713 = vmatprep.subr.mxu0 0.0
    %1714 = vmatpush1.msra.mxu0 0.0
    %1715 = vmatprep.subr.mxu0 0.0
    %1716 = vmatpush1.msra.mxu0 0.0
    %1717 = vmatprep.subr.mxu0 0.0
    %1718 = vmatpush1.msra.mxu0 0.0
    %1719 = vmatprep.subr.mxu0 0.0
    %1720 = vmatpush1.msra.mxu0 0.0
    %1721 = vmatprep.subr.mxu0 0.0
    %1722 = vmatpush1.msra.mxu0 0.0
    %1723 = vmatprep.mubr.f32.mxu0 0.0
    %1724 = vmatmul.mubr.f32.gmra.mrb[0].mxu0 %v1322
    %v1725 = vpop.f32.mrb[0].mxu0
    %v1726 = vadd.f32 %v1647, %v1725
    %v1727 = vpop.f32.mrb[0].mxu0
    %v1728 = vadd.f32 %v1651, %v1727
    %1729 = vmatprep.mubr.f32.mxu0 0.0
    %1730 = vmatmul.mubr.f32.gmra.mrb[0].mxu0 %v1323
    %v1731 = vpop.f32.mrb[0].mxu0
    %v1732 = vadd.f32 %v1647, %v1731
    %v1733 = vpop.f32.mrb[0].mxu0
    %v1734 = vadd.f32 %v1651, %v1733
    %1735 = vmatprep.mubr.f32.mxu0 0.0
    %1736 = vmatmul.mubr.f32.gmra.mrb[0].mxu0 %v1324
    %v1737 = vpop.f32.mrb[0].mxu0
    %v1738 = vadd.f32 %v1647, %v1737
    %v1739 = vpop.f32.mrb[0].mxu0
    %v1740 = vadd.f32 %v1651, %v1739
    %1741 = vdwg.mxu0
    %1742 = vmatprep.subr.mxu0 0.0
    %1743 = vmatpush1.msra.mxu0 %v1596
    %1744 = vmatprep.subr.mxu0 0.0
    %1745 = vmatpush1.msra.mxu0 %v1599
    %1746 = vmatprep.subr.mxu0 0.0
    %1747 = vmatpush1.msra.mxu0 %v1602
    %1748 = vmatprep.subr.mxu0 0.0
    %1749 = vmatpush1.msra.mxu0 %v1605
    %1750 = vmatprep.subr.mxu0 0.0
    %1751 = vmatpush1.msra.mxu0 %v1608
    %1752 = vmatprep.subr.mxu0 0.0
    %1753 = vmatpush1.msra.mxu0 %v1611
    %1754 = vmatprep.subr.mxu0 0.0
    %1755 = vmatpush1.msra.mxu0 %v1614
    %1756 = vmatprep.subr.mxu0 0.0
    %1757 = vmatpush1.msra.mxu0 %v1617
    %1758 = vmatprep.subr.mxu0 0.0
    %1759 = vmatpush1.msra.mxu0 %v1620
    %1760 = vmatprep.subr.mxu0 0.0
    %1761 = vmatpush1.msra.mxu0 %v1623
    %1762 = vmatprep.subr.mxu0 0.0
    %1763 = vmatpush1.msra.mxu0 %v1626
    %1764 = vmatprep.subr.mxu0 0.0
    %1765 = vmatpush1.msra.mxu0 %v1629
    %1766 = vmatprep.subr.mxu0 0.0
    %1767 = vmatpush1.msra.mxu0 %v1632
    %1768 = vmatprep.subr.mxu0 0.0
    %1769 = vmatpush1.msra.mxu0 %v1635
    %1770 = vmatprep.subr.mxu0 0.0
    %1771 = vmatpush1.msra.mxu0 %v1638
    %1772 = vmatprep.subr.mxu0 0.0
    %1773 = vmatpush1.msra.mxu0 %v1641
    %1774 = vmatprep.subr.mxu0 0.0
    %1775 = vmatpush1.msra.mxu0 0.0
    %1776 = vmatprep.subr.mxu0 0.0
    %1777 = vmatpush1.msra.mxu0 0.0
    %1778 = vmatprep.subr.mxu0 0.0
    %1779 = vmatpush1.msra.mxu0 0.0
    %1780 = vmatprep.subr.mxu0 0.0
    %1781 = vmatpush1.msra.mxu0 0.0
    %1782 = vmatprep.subr.mxu0 0.0
    %1783 = vmatpush1.msra.mxu0 0.0
    %1784 = vmatprep.subr.mxu0 0.0
    %1785 = vmatpush1.msra.mxu0 0.0
    %1786 = vmatprep.subr.mxu0 0.0
    %1787 = vmatpush1.msra.mxu0 0.0
    %1788 = vmatprep.subr.mxu0 0.0
    %1789 = vmatpush1.msra.mxu0 0.0
    %1790 = vmatprep.subr.mxu0 0.0
    %1791 = vmatpush1.msra.mxu0 0.0
    %1792 = vmatprep.subr.mxu0 0.0
    %1793 = vmatpush1.msra.mxu0 0.0
    %1794 = vmatprep.subr.mxu0 0.0
    %1795 = vmatpush1.msra.mxu0 0.0
    %1796 = vmatprep.subr.mxu0 0.0
    %1797 = vmatpush1.msra.mxu0 0.0
    %1798 = vmatprep.subr.mxu0 0.0
    %1799 = vmatpush1.msra.mxu0 0.0
    %1800 = vmatprep.subr.mxu0 0.0
    %1801 = vmatpush1.msra.mxu0 0.0
    %1802 = vmatprep.subr.mxu0 0.0
    %1803 = vmatpush1.msra.mxu0 0.0
    %1804 = vmatprep.subr.mxu0 0.0
    %1805 = vmatpush1.msra.mxu0 0.0
    %1806 = vmatprep.mubr.f32.mxu0 0.0
    %1807 = vmatmul.mubr.f32.gmra.mrb[0].mxu0 %v1322
    %v1808 = vpop.f32.mrb[0].mxu0
    %v1809 = vadd.f32 %v1655, %v1808
    %v1810 = vpop.f32.mrb[0].mxu0
    %1811 = vmatprep.mubr.f32.mxu0 0.0
    %1812 = vmatmul.mubr.f32.gmra.mrb[0].mxu0 %v1323
    %v1813 = vpop.f32.mrb[0].mxu0
    %v1814 = vadd.f32 %v1655, %v1813
    %v1815 = vpop.f32.mrb[0].mxu0
    %1816 = vmatprep.mubr.f32.mxu0 0.0
    %1817 = vmatmul.mubr.f32.gmra.mrb[0].mxu0 %v1324
    %v1818 = vpop.f32.mrb[0].mxu0
    %v1819 = vadd.f32 %v1655, %v1818
    %v1820 = vpop.f32.mrb[0].mxu0
    %1821 = vdwg.mxu0
    %v1822 = vld [vmem:[%s47] sm:$0xff]
    %v1823 = vld [vmem:[%s47 + $0x8] sm:$0xff]
    %v1824 = vld [vmem:[%s47 + $0x10] sm:$0xff]
    %v1825 = vld [vmem:[%s47 + $0x18] sm:$0xff]
    %v1826 = vld [vmem:[%s47 + $0x20] sm:$0xff]
    %v1827 = vld [vmem:[%s47 + $0x28] sm:$0xff]
    %v1828 = vld [vmem:[%s47 + $0x30] sm:$0xff]
    %v1829 = vld [vmem:[%s47 + $0x38] sm:$0xff]
    %v1830 = vld [vmem:[%s47 + $0x40] sm:$0xff]
    %v1831 = vld [vmem:[%s47 + $0x48] sm:$0xff]
    %v1832 = vld [vmem:[%s47 + $0x50] sm:$0xff]
    %v1833 = vld [vmem:[%s47 + $0x58] sm:$0xff]
    %v1834 = vld [vmem:[%s47 + $0x60] sm:$0xff]
    %v1835 = vld [vmem:[%s47 + $0x68] sm:$0xff]
    %v1836 = vld [vmem:[%s47 + $0x70] sm:$0xff]
    %v1837 = vld [vmem:[%s47 + $0x78] sm:$0xff]
    %v1838 = vld [vmem:[%s47 + $0x80] sm:$0xff]
    %v1839 = vld [vmem:[%s47 + $0x88] sm:$0xff]
    %v1840 = vld [vmem:[%s47 + $0x90] sm:$0xff]
    %v1841 = vld [vmem:[%s47 + $0x98] sm:$0xff]
    %v1842 = vld [vmem:[%s47 + $0xa0] sm:$0xff]
    %v1843 = vld [vmem:[%s47 + $0xa8] sm:$0xff]
    %v1844 = vld [vmem:[%s47 + $0xb0] sm:$0xff]
    %v1845 = vld [vmem:[%s47 + $0xb8] sm:$0xff]
    %v1846 = vld [vmem:[%s47 + $0xc0] sm:$0xff]
    %v1847 = vld [vmem:[%s47 + $0xc8] sm:$0xff]
    %v1848 = vld [vmem:[%s47 + $0xd0] sm:$0xff]
    %v1849 = vld [vmem:[%s47 + $0xd8] sm:$0xff]
    %v1850 = vld [vmem:[%s47 + $0xe0] sm:$0xff]
    %v1851 = vld [vmem:[%s47 + $0xe8] sm:$0xff]
    %v1852 = vld [vmem:[%s47 + $0xf0] sm:$0xff]
    %v1853 = vld [vmem:[%s47 + $0xf8] sm:$0xff]
    %v1854 = vld [vmem:[#allocation19] sm:$0x3]
    %v1856 = vlaneseq
    %v1857 = vshrl.u32 %v1856, 7
    %v1858 = vsub.s32 0, %v1857
    %v1859 = vrot.slane %v1854, %v1858
    %v1860 = vlaneseq
    %v1861 = vshrl.u32 %v1860, 7
    %v1862 = vsub.s32 1, %v1861
    %v1863 = vrot.slane %v1854, %v1862
    %1866 = vmatprep.subr.mxu0 %v1823
    %1867 = vmatpush1.msra.mxu0 %v1822
    %1868 = vmatprep.subr.mxu0 %v1825
    %1869 = vmatpush1.msra.mxu0 %v1824
    %1870 = vmatprep.subr.mxu0 %v1827
    %1871 = vmatpush1.msra.mxu0 %v1826
    %1872 = vmatprep.subr.mxu0 %v1829
    %1873 = vmatpush1.msra.mxu0 %v1828
    %1874 = vmatprep.subr.mxu0 %v1831
    %1875 = vmatpush1.msra.mxu0 %v1830
    %1876 = vmatprep.subr.mxu0 %v1833
    %1877 = vmatpush1.msra.mxu0 %v1832
    %1878 = vmatprep.subr.mxu0 %v1835
    %1879 = vmatpush1.msra.mxu0 %v1834
    %1880 = vmatprep.subr.mxu0 %v1837
    %1881 = vmatpush1.msra.mxu0 %v1836
    %1882 = vmatprep.subr.mxu0 %v1839
    %1883 = vmatpush1.msra.mxu0 %v1838
    %1884 = vmatprep.subr.mxu0 %v1841
    %1885 = vmatpush1.msra.mxu0 %v1840
    %1886 = vmatprep.subr.mxu0 %v1843
    %1887 = vmatpush1.msra.mxu0 %v1842
    %1888 = vmatprep.subr.mxu0 %v1845
    %1889 = vmatpush1.msra.mxu0 %v1844
    %1890 = vmatprep.subr.mxu0 %v1847
    %1891 = vmatpush1.msra.mxu0 %v1846
    %1892 = vmatprep.subr.mxu0 %v1849
    %1893 = vmatpush1.msra.mxu0 %v1848
    %1894 = vmatprep.subr.mxu0 %v1851
    %1895 = vmatpush1.msra.mxu0 %v1850
    %1896 = vmatprep.subr.mxu0 %v1853
    %1897 = vmatpush1.msra.mxu0 %v1852
    %1898 = vmatprep.subr.mxu0 0.0
    %1899 = vmatpush1.msra.mxu0 0.0
    %1900 = vmatprep.subr.mxu0 0.0
    %1901 = vmatpush1.msra.mxu0 0.0
    %1902 = vmatprep.subr.mxu0 0.0
    %1903 = vmatpush1.msra.mxu0 0.0
    %1904 = vmatprep.subr.mxu0 0.0
    %1905 = vmatpush1.msra.mxu0 0.0
    %1906 = vmatprep.subr.mxu0 0.0
    %1907 = vmatpush1.msra.mxu0 0.0
    %1908 = vmatprep.subr.mxu0 0.0
    %1909 = vmatpush1.msra.mxu0 0.0
    %1910 = vmatprep.subr.mxu0 0.0
    %1911 = vmatpush1.msra.mxu0 0.0
    %1912 = vmatprep.subr.mxu0 0.0
    %1913 = vmatpush1.msra.mxu0 0.0
    %1914 = vmatprep.subr.mxu0 0.0
    %1915 = vmatpush1.msra.mxu0 0.0
    %1916 = vmatprep.subr.mxu0 0.0
    %1917 = vmatpush1.msra.mxu0 0.0
    %1918 = vmatprep.subr.mxu0 0.0
    %1919 = vmatpush1.msra.mxu0 0.0
    %1920 = vmatprep.subr.mxu0 0.0
    %1921 = vmatpush1.msra.mxu0 0.0
    %1922 = vmatprep.subr.mxu0 0.0
    %1923 = vmatpush1.msra.mxu0 0.0
    %1924 = vmatprep.subr.mxu0 0.0
    %1925 = vmatpush1.msra.mxu0 0.0
    %1926 = vmatprep.subr.mxu0 0.0
    %1927 = vmatpush1.msra.mxu0 0.0
    %1928 = vmatprep.subr.mxu0 0.0
    %1929 = vmatpush1.msra.mxu0 0.0
    %1930 = vmatprep.mubr.f32.mxu0 0.0
    %1931 = vmatmul.mubr.f32.gmra.mrb[0].mxu0 %v1472
    %v1932 = vpop.f32.mrb[0].mxu0
    %v1933 = vadd.f32 %v1859, %v1932
    %v1934 = vpop.f32.mrb[0].mxu0
    %v1935 = vadd.f32 %v1863, %v1934
    %1936 = vdwg.mxu0
    %1937 = vmatprep.subr.mxu0 0.0
    %1938 = vmatpush1.msra.mxu0 %v1726
    %1939 = vmatprep.subr.mxu0 0.0
    %1940 = vmatpush1.msra.mxu0 %v1732
    %1941 = vmatprep.subr.mxu0 0.0
    %1942 = vmatpush1.msra.mxu0 %v1738
    %1943 = vmatprep.subr.mxu0 0.0
    %1944 = vmatpush1.msra.mxu0 0.0
    %1945 = vmatprep.subr.mxu0 0.0
    %1946 = vmatpush1.msra.mxu0 0.0
    %1947 = vmatprep.subr.mxu0 0.0
    %1948 = vmatpush1.msra.mxu0 0.0
    %1949 = vmatprep.subr.mxu0 0.0
    %1950 = vmatpush1.msra.mxu0 0.0
    %1951 = vmatprep.subr.mxu0 0.0
    %1952 = vmatpush1.msra.mxu0 0.0
    %1953 = vmatprep.subr.mxu0 0.0
    %1954 = vmatpush1.msra.mxu0 0.0
    %1955 = vmatprep.subr.mxu0 0.0
    %1956 = vmatpush1.msra.mxu0 0.0
    %1957 = vmatprep.subr.mxu0 0.0
    %1958 = vmatpush1.msra.mxu0 0.0
    %1959 = vmatprep.subr.mxu0 0.0
    %1960 = vmatpush1.msra.mxu0 0.0
    %1961 = vmatprep.subr.mxu0 0.0
    %1962 = vmatpush1.msra.mxu0 0.0
    %1963 = vmatprep.subr.mxu0 0.0
    %1964 = vmatpush1.msra.mxu0 0.0
    %1965 = vmatprep.subr.mxu0 0.0
    %1966 = vmatpush1.msra.mxu0 0.0
    %1967 = vmatprep.subr.mxu0 0.0
    %1968 = vmatpush1.msra.mxu0 0.0
    %1969 = vmatprep.subr.mxu0 0.0
    %1970 = vmatpush1.msra.mxu0 0.0
    %1971 = vmatprep.subr.mxu0 0.0
    %1972 = vmatpush1.msra.mxu0 0.0
    %1973 = vmatprep.subr.mxu0 0.0
    %1974 = vmatpush1.msra.mxu0 0.0
    %1975 = vmatprep.subr.mxu0 0.0
    %1976 = vmatpush1.msra.mxu0 0.0
    %1977 = vmatprep.subr.mxu0 0.0
    %1978 = vmatpush1.msra.mxu0 0.0
    %1979 = vmatprep.subr.mxu0 0.0
    %1980 = vmatpush1.msra.mxu0 0.0
    %1981 = vmatprep.subr.mxu0 0.0
    %1982 = vmatpush1.msra.mxu0 0.0
    %1983 = vmatprep.subr.mxu0 0.0
    %1984 = vmatpush1.msra.mxu0 0.0
    %1985 = vmatprep.subr.mxu0 0.0
    %1986 = vmatpush1.msra.mxu0 0.0
    %1987 = vmatprep.subr.mxu0 0.0
    %1988 = vmatpush1.msra.mxu0 0.0
    %1989 = vmatprep.subr.mxu0 0.0
    %1990 = vmatpush1.msra.mxu0 0.0
    %1991 = vmatprep.subr.mxu0 0.0
    %1992 = vmatpush1.msra.mxu0 0.0
    %1993 = vmatprep.subr.mxu0 0.0
    %1994 = vmatpush1.msra.mxu0 0.0
    %1995 = vmatprep.subr.mxu0 0.0
    %1996 = vmatpush1.msra.mxu0 0.0
    %1997 = vmatprep.subr.mxu0 0.0
    %1998 = vmatpush1.msra.mxu0 0.0
    %1999 = vmatprep.subr.mxu0 0.0
    %2000 = vmatpush1.msra.mxu0 0.0
    %2001 = vmatprep.mubr.f32.mxu0 0.0
    %2002 = vmatmul.mubr.f32.gmra.mrb[0].mxu0 %v882
    %v2003 = vpop.f32.mrb[0].mxu0
    %v2004 = vadd.f32 0.0, %v2003
    %v2005 = vpop.f32.mrb[0].mxu0
    %2006 = vmatprep.mubr.f32.mxu0 0.0
    %2007 = vmatmul.mubr.f32.gmra.mrb[0].mxu0 %v885
    %v2008 = vpop.f32.mrb[0].mxu0
    %v2009 = vadd.f32 0.0, %v2008
    %v2010 = vpop.f32.mrb[0].mxu0
    %2011 = vdwg.mxu0
    %2012 = vmatprep.subr.mxu0 0.0
    %2013 = vmatpush1.msra.mxu0 %v1584
    %2014 = vmatprep.subr.mxu0 0.0
    %2015 = vmatpush1.msra.mxu0 %v1590
    %2016 = vmatprep.subr.mxu0 0.0
    %2017 = vmatpush1.msra.mxu0 0.0
    %2018 = vmatprep.subr.mxu0 0.0
    %2019 = vmatpush1.msra.mxu0 0.0
    %2020 = vmatprep.subr.mxu0 0.0
    %2021 = vmatpush1.msra.mxu0 0.0
    %2022 = vmatprep.subr.mxu0 0.0
    %2023 = vmatpush1.msra.mxu0 0.0
    %2024 = vmatprep.subr.mxu0 0.0
    %2025 = vmatpush1.msra.mxu0 0.0
    %2026 = vmatprep.subr.mxu0 0.0
    %2027 = vmatpush1.msra.mxu0 0.0
    %2028 = vmatprep.subr.mxu0 0.0
    %2029 = vmatpush1.msra.mxu0 0.0
    %2030 = vmatprep.subr.mxu0 0.0
    %2031 = vmatpush1.msra.mxu0 0.0
    %2032 = vmatprep.subr.mxu0 0.0
    %2033 = vmatpush1.msra.mxu0 0.0
    %2034 = vmatprep.subr.mxu0 0.0
    %2035 = vmatpush1.msra.mxu0 0.0
    %2036 = vmatprep.subr.mxu0 0.0
    %2037 = vmatpush1.msra.mxu0 0.0
    %2038 = vmatprep.subr.mxu0 0.0
    %2039 = vmatpush1.msra.mxu0 0.0
    %2040 = vmatprep.subr.mxu0 0.0
    %2041 = vmatpush1.msra.mxu0 0.0
    %2042 = vmatprep.subr.mxu0 0.0
    %2043 = vmatpush1.msra.mxu0 0.0
    %2044 = vmatprep.subr.mxu0 0.0
    %2045 = vmatpush1.msra.mxu0 0.0
    %2046 = vmatprep.subr.mxu0 0.0
    %2047 = vmatpush1.msra.mxu0 0.0
    %2048 = vmatprep.subr.mxu0 0.0
    %2049 = vmatpush1.msra.mxu0 0.0
    %2050 = vmatprep.subr.mxu0 0.0
    %2051 = vmatpush1.msra.mxu0 0.0
    %2052 = vmatprep.subr.mxu0 0.0
    %2053 = vmatpush1.msra.mxu0 0.0
    %2054 = vmatprep.subr.mxu0 0.0
    %2055 = vmatpush1.msra.mxu0 0.0
    %2056 = vmatprep.subr.mxu0 0.0
    %2057 = vmatpush1.msra.mxu0 0.0
    %2058 = vmatprep.subr.mxu0 0.0
    %2059 = vmatpush1.msra.mxu0 0.0
    %2060 = vmatprep.subr.mxu0 0.0
    %2061 = vmatpush1.msra.mxu0 0.0
    %2062 = vmatprep.subr.mxu0 0.0
    %2063 = vmatpush1.msra.mxu0 0.0
    %2064 = vmatprep.subr.mxu0 0.0
    %2065 = vmatpush1.msra.mxu0 0.0
    %2066 = vmatprep.subr.mxu0 0.0
    %2067 = vmatpush1.msra.mxu0 0.0
    %2068 = vmatprep.subr.mxu0 0.0
    %2069 = vmatpush1.msra.mxu0 0.0
    %2070 = vmatprep.subr.mxu0 0.0
    %2071 = vmatpush1.msra.mxu0 0.0
    %2072 = vmatprep.subr.mxu0 0.0
    %2073 = vmatpush1.msra.mxu0 0.0
    %2074 = vmatprep.subr.mxu0 0.0
    %2075 = vmatpush1.msra.mxu0 0.0
    %2076 = vmatprep.mubr.f32.mxu0 0.0
    %2077 = vmatmul.mubr.f32.gmra.mrb[0].mxu0 %v964
    %v2078 = vpop.f32.mrb[0].mxu0
    %v2079 = vadd.f32 %v2004, %v2078
    %v2080 = vpop.f32.mrb[0].mxu0
    %2081 = vmatprep.mubr.f32.mxu0 0.0
    %2082 = vmatmul.mubr.f32.gmra.mrb[0].mxu0 %v967
    %v2083 = vpop.f32.mrb[0].mxu0
    %v2084 = vadd.f32 %v2009, %v2083
    %v2085 = vpop.f32.mrb[0].mxu0
    %2086 = vdwg.mxu0
    %v2087 = vmax.f32 %v2079, 0.0
    %v2088 = vmax.f32 %v2084, 0.0
    %v2089 = vmul.f32 %v2087, 0.5
    %v2090 = vmul.f32 %v2088, 0.5
    %2091 = vmatprep.subr.mxu0 0.0
    %2092 = vmatpush1.msra.mxu0 %v1586
    %2093 = vmatprep.subr.mxu0 0.0
    %2094 = vmatpush1.msra.mxu0 %v1592
    %2095 = vmatprep.subr.mxu0 0.0
    %2096 = vmatpush1.msra.mxu0 0.0
    %2097 = vmatprep.subr.mxu0 0.0
    %2098 = vmatpush1.msra.mxu0 0.0
    %2099 = vmatprep.subr.mxu0 0.0
    %2100 = vmatpush1.msra.mxu0 0.0
    %2101 = vmatprep.subr.mxu0 0.0
    %2102 = vmatpush1.msra.mxu0 0.0
    %2103 = vmatprep.subr.mxu0 0.0
    %2104 = vmatpush1.msra.mxu0 0.0
    %2105 = vmatprep.subr.mxu0 0.0
    %2106 = vmatpush1.msra.mxu0 0.0
    %2107 = vmatprep.subr.mxu0 0.0
    %2108 = vmatpush1.msra.mxu0 0.0
    %2109 = vmatprep.subr.mxu0 0.0
    %2110 = vmatpush1.msra.mxu0 0.0
    %2111 = vmatprep.subr.mxu0 0.0
    %2112 = vmatpush1.msra.mxu0 0.0
    %2113 = vmatprep.subr.mxu0 0.0
    %2114 = vmatpush1.msra.mxu0 0.0
    %2115 = vmatprep.subr.mxu0 0.0
    %2116 = vmatpush1.msra.mxu0 0.0
    %2117 = vmatprep.subr.mxu0 0.0
    %2118 = vmatpush1.msra.mxu0 0.0
    %2119 = vmatprep.subr.mxu0 0.0
    %2120 = vmatpush1.msra.mxu0 0.0
    %2121 = vmatprep.subr.mxu0 0.0
    %2122 = vmatpush1.msra.mxu0 0.0
    %2123 = vmatprep.subr.mxu0 0.0
    %2124 = vmatpush1.msra.mxu0 0.0
    %2125 = vmatprep.subr.mxu0 0.0
    %2126 = vmatpush1.msra.mxu0 0.0
    %2127 = vmatprep.subr.mxu0 0.0
    %2128 = vmatpush1.msra.mxu0 0.0
    %2129 = vmatprep.subr.mxu0 0.0
    %2130 = vmatpush1.msra.mxu0 0.0
    %2131 = vmatprep.subr.mxu0 0.0
    %2132 = vmatpush1.msra.mxu0 0.0
    %2133 = vmatprep.subr.mxu0 0.0
    %2134 = vmatpush1.msra.mxu0 0.0
    %2135 = vmatprep.subr.mxu0 0.0
    %2136 = vmatpush1.msra.mxu0 0.0
    %2137 = vmatprep.subr.mxu0 0.0
    %2138 = vmatpush1.msra.mxu0 0.0
    %2139 = vmatprep.subr.mxu0 0.0
    %2140 = vmatpush1.msra.mxu0 0.0
    %2141 = vmatprep.subr.mxu0 0.0
    %2142 = vmatpush1.msra.mxu0 0.0
    %2143 = vmatprep.subr.mxu0 0.0
    %2144 = vmatpush1.msra.mxu0 0.0
    %2145 = vmatprep.subr.mxu0 0.0
    %2146 = vmatpush1.msra.mxu0 0.0
    %2147 = vmatprep.subr.mxu0 0.0
    %2148 = vmatpush1.msra.mxu0 0.0
    %2149 = vmatprep.subr.mxu0 0.0
    %2150 = vmatpush1.msra.mxu0 0.0
    %2151 = vmatprep.subr.mxu0 0.0
    %2152 = vmatpush1.msra.mxu0 0.0
    %2153 = vmatprep.subr.mxu0 0.0
    %2154 = vmatpush1.msra.mxu0 0.0
    %2155 = vmatprep.mubr.f32.mxu0 0.0
    %2156 = vmatmul.mubr.f32.gmra.mrb[0].mxu0 %v1049
    %v2157 = vpop.f32.mrb[0].mxu0
    %v2158 = vadd.f32 0.0, %v2157
    %v2159 = vpop.f32.mrb[0].mxu0
    %2160 = vmatprep.mubr.f32.mxu0 0.0
    %2161 = vmatmul.mubr.f32.gmra.mrb[0].mxu0 %v1052
    %v2162 = vpop.f32.mrb[0].mxu0
    %v2163 = vadd.f32 0.0, %v2162
    %v2164 = vpop.f32.mrb[0].mxu0
    %2165 = vmatprep.mubr.f32.mxu0 0.0
    %2166 = vmatmul.mubr.f32.gmra.mrb[0].mxu0 %v1055
    %v2167 = vpop.f32.mrb[0].mxu0
    %v2168 = vadd.f32 0.0, %v2167
    %v2169 = vpop.f32.mrb[0].mxu0
    %2170 = vdwg.mxu0
    %2171 = vmatprep.subr.mxu0 0.0
    %2172 = vmatpush1.msra.mxu0 %v1728
    %2173 = vmatprep.subr.mxu0 0.0
    %2174 = vmatpush1.msra.mxu0 %v1734
    %2175 = vmatprep.subr.mxu0 0.0
    %2176 = vmatpush1.msra.mxu0 %v1740
    %2177 = vmatprep.subr.mxu0 0.0
    %2178 = vmatpush1.msra.mxu0 0.0
    %2179 = vmatprep.subr.mxu0 0.0
    %2180 = vmatpush1.msra.mxu0 0.0
    %2181 = vmatprep.subr.mxu0 0.0
    %2182 = vmatpush1.msra.mxu0 0.0
    %2183 = vmatprep.subr.mxu0 0.0
    %2184 = vmatpush1.msra.mxu0 0.0
    %2185 = vmatprep.subr.mxu0 0.0
    %2186 = vmatpush1.msra.mxu0 0.0
    %2187 = vmatprep.subr.mxu0 0.0
    %2188 = vmatpush1.msra.mxu0 0.0
    %2189 = vmatprep.subr.mxu0 0.0
    %2190 = vmatpush1.msra.mxu0 0.0
    %2191 = vmatprep.subr.mxu0 0.0
    %2192 = vmatpush1.msra.mxu0 0.0
    %2193 = vmatprep.subr.mxu0 0.0
    %2194 = vmatpush1.msra.mxu0 0.0
    %2195 = vmatprep.subr.mxu0 0.0
    %2196 = vmatpush1.msra.mxu0 0.0
    %2197 = vmatprep.subr.mxu0 0.0
    %2198 = vmatpush1.msra.mxu0 0.0
    %2199 = vmatprep.subr.mxu0 0.0
    %2200 = vmatpush1.msra.mxu0 0.0
    %2201 = vmatprep.subr.mxu0 0.0
    %2202 = vmatpush1.msra.mxu0 0.0
    %2203 = vmatprep.subr.mxu0 0.0
    %2204 = vmatpush1.msra.mxu0 0.0
    %2205 = vmatprep.subr.mxu0 0.0
    %2206 = vmatpush1.msra.mxu0 0.0
    %2207 = vmatprep.subr.mxu0 0.0
    %2208 = vmatpush1.msra.mxu0 0.0
    %2209 = vmatprep.subr.mxu0 0.0
    %2210 = vmatpush1.msra.mxu0 0.0
    %2211 = vmatprep.subr.mxu0 0.0
    %2212 = vmatpush1.msra.mxu0 0.0
    %2213 = vmatprep.subr.mxu0 0.0
    %2214 = vmatpush1.msra.mxu0 0.0
    %2215 = vmatprep.subr.mxu0 0.0
    %2216 = vmatpush1.msra.mxu0 0.0
    %2217 = vmatprep.subr.mxu0 0.0
    %2218 = vmatpush1.msra.mxu0 0.0
    %2219 = vmatprep.subr.mxu0 0.0
    %2220 = vmatpush1.msra.mxu0 0.0
    %2221 = vmatprep.subr.mxu0 0.0
    %2222 = vmatpush1.msra.mxu0 0.0
    %2223 = vmatprep.subr.mxu0 0.0
    %2224 = vmatpush1.msra.mxu0 0.0
    %2225 = vmatprep.subr.mxu0 0.0
    %2226 = vmatpush1.msra.mxu0 0.0
    %2227 = vmatprep.subr.mxu0 0.0
    %2228 = vmatpush1.msra.mxu0 0.0
    %2229 = vmatprep.subr.mxu0 0.0
    %2230 = vmatpush1.msra.mxu0 0.0
    %2231 = vmatprep.subr.mxu0 0.0
    %2232 = vmatpush1.msra.mxu0 0.0
    %2233 = vmatprep.subr.mxu0 0.0
    %2234 = vmatpush1.msra.mxu0 0.0
    %2235 = vmatprep.mubr.f32.mxu0 0.0
    %2236 = vmatmul.mubr.f32.gmra.mrb[0].mxu0 %v1138
    %v2237 = vpop.f32.mrb[0].mxu0
    %v2238 = vadd.f32 %v2158, %v2237
    %v2239 = vpop.f32.mrb[0].mxu0
    %2240 = vmatprep.mubr.f32.mxu0 0.0
    %2241 = vmatmul.mubr.f32.gmra.mrb[0].mxu0 %v1141
    %v2242 = vpop.f32.mrb[0].mxu0
    %v2243 = vadd.f32 %v2163, %v2242
    %v2244 = vpop.f32.mrb[0].mxu0
    %2245 = vmatprep.mubr.f32.mxu0 0.0
    %2246 = vmatmul.mubr.f32.gmra.mrb[0].mxu0 %v1144
    %v2247 = vpop.f32.mrb[0].mxu0
    %v2248 = vadd.f32 %v2168, %v2247
    %v2249 = vpop.f32.mrb[0].mxu0
    %2250 = vdwg.mxu0
    %2251 = vmatprep.subr.mxu0 0.0
    %2252 = vmatpush1.msra.mxu0 %v1935
    %2253 = vmatprep.subr.mxu0 0.0
    %2254 = vmatpush1.msra.mxu0 0.0
    %2255 = vmatprep.subr.mxu0 0.0
    %2256 = vmatpush1.msra.mxu0 0.0
    %2257 = vmatprep.subr.mxu0 0.0
    %2258 = vmatpush1.msra.mxu0 0.0
    %2259 = vmatprep.subr.mxu0 0.0
    %2260 = vmatpush1.msra.mxu0 0.0
    %2261 = vmatprep.subr.mxu0 0.0
    %2262 = vmatpush1.msra.mxu0 0.0
    %2263 = vmatprep.subr.mxu0 0.0
    %2264 = vmatpush1.msra.mxu0 0.0
    %2265 = vmatprep.subr.mxu0 0.0
    %2266 = vmatpush1.msra.mxu0 0.0
    %2267 = vmatprep.subr.mxu0 0.0
    %2268 = vmatpush1.msra.mxu0 0.0
    %2269 = vmatprep.subr.mxu0 0.0
    %2270 = vmatpush1.msra.mxu0 0.0
    %2271 = vmatprep.subr.mxu0 0.0
    %2272 = vmatpush1.msra.mxu0 0.0
    %2273 = vmatprep.subr.mxu0 0.0
    %2274 = vmatpush1.msra.mxu0 0.0
    %2275 = vmatprep.subr.mxu0 0.0
    %2276 = vmatpush1.msra.mxu0 0.0
    %2277 = vmatprep.subr.mxu0 0.0
    %2278 = vmatpush1.msra.mxu0 0.0
    %2279 = vmatprep.subr.mxu0 0.0
    %2280 = vmatpush1.msra.mxu0 0.0
    %2281 = vmatprep.subr.mxu0 0.0
    %2282 = vmatpush1.msra.mxu0 0.0
    %2283 = vmatprep.subr.mxu0 0.0
    %2284 = vmatpush1.msra.mxu0 0.0
    %2285 = vmatprep.subr.mxu0 0.0
    %2286 = vmatpush1.msra.mxu0 0.0
    %2287 = vmatprep.subr.mxu0 0.0
    %2288 = vmatpush1.msra.mxu0 0.0
    %2289 = vmatprep.subr.mxu0 0.0
    %2290 = vmatpush1.msra.mxu0 0.0
    %2291 = vmatprep.subr.mxu0 0.0
    %2292 = vmatpush1.msra.mxu0 0.0
    %2293 = vmatprep.subr.mxu0 0.0
    %2294 = vmatpush1.msra.mxu0 0.0
    %2295 = vmatprep.subr.mxu0 0.0
    %2296 = vmatpush1.msra.mxu0 0.0
    %2297 = vmatprep.subr.mxu0 0.0
    %2298 = vmatpush1.msra.mxu0 0.0
    %2299 = vmatprep.subr.mxu0 0.0
    %2300 = vmatpush1.msra.mxu0 0.0
    %2301 = vmatprep.subr.mxu0 0.0
    %2302 = vmatpush1.msra.mxu0 0.0
    %2303 = vmatprep.subr.mxu0 0.0
    %2304 = vmatpush1.msra.mxu0 0.0
    %2305 = vmatprep.subr.mxu0 0.0
    %2306 = vmatpush1.msra.mxu0 0.0
    %2307 = vmatprep.subr.mxu0 0.0
    %2308 = vmatpush1.msra.mxu0 0.0
    %2309 = vmatprep.subr.mxu0 0.0
    %2310 = vmatpush1.msra.mxu0 0.0
    %2311 = vmatprep.subr.mxu0 0.0
    %2312 = vmatpush1.msra.mxu0 0.0
    %2313 = vmatprep.subr.mxu0 0.0
    %2314 = vmatpush1.msra.mxu0 0.0
    %2315 = vmatprep.mubr.f32.mxu0 0.0
    %2316 = vmatmul.mubr.f32.gmra.mrb[0].mxu0 %v1228
    %v2317 = vpop.f32.mrb[0].mxu0
    %v2318 = vadd.f32 0.0, %v2317
    %v2319 = vpop.f32.mrb[0].mxu0
    %2320 = vmatprep.mubr.f32.mxu0 0.0
    %2321 = vmatmul.mubr.f32.gmra.mrb[0].mxu0 %v1231
    %v2322 = vpop.f32.mrb[0].mxu0
    %v2323 = vadd.f32 0.0, %v2322
    %v2324 = vpop.f32.mrb[0].mxu0
    %2325 = vmatprep.mubr.f32.mxu0 0.0
    %2326 = vmatmul.mubr.f32.gmra.mrb[0].mxu0 %v1234
    %v2327 = vpop.f32.mrb[0].mxu0
    %v2328 = vadd.f32 0.0, %v2327
    %v2329 = vpop.f32.mrb[0].mxu0
    %2330 = vdwg.mxu0
    %v2331 = vadd.f32 %v2238, %v2318
    %v2332 = vadd.f32 %v2243, %v2323
    %v2333 = vadd.f32 %v2248, %v2328
    %v2334 = vmax.f32 %v2331, 0.0
    %v2335 = vmax.f32 %v2332, 0.0
    %v2336 = vmax.f32 %v2333, 0.0
    %v2337 = vmul.f32 %v2334, 0.33333334
    %v2338 = vmul.f32 %v2335, 0.33333334
    %v2339 = vmul.f32 %v2336, 0.33333334
    %2340 = vmatprep.subr.mxu0 0.0
    %2341 = vmatpush1.msra.mxu0 %v1809
    %2342 = vmatprep.subr.mxu0 0.0
    %2343 = vmatpush1.msra.mxu0 %v1814
    %2344 = vmatprep.subr.mxu0 0.0
    %2345 = vmatpush1.msra.mxu0 %v1819
    %2346 = vmatprep.subr.mxu0 0.0
    %2347 = vmatpush1.msra.mxu0 0.0
    %2348 = vmatprep.subr.mxu0 0.0
    %2349 = vmatpush1.msra.mxu0 0.0
    %2350 = vmatprep.subr.mxu0 0.0
    %2351 = vmatpush1.msra.mxu0 0.0
    %2352 = vmatprep.subr.mxu0 0.0
    %2353 = vmatpush1.msra.mxu0 0.0
    %2354 = vmatprep.subr.mxu0 0.0
    %2355 = vmatpush1.msra.mxu0 0.0
    %2356 = vmatprep.subr.mxu0 0.0
    %2357 = vmatpush1.msra.mxu0 0.0
    %2358 = vmatprep.subr.mxu0 0.0
    %2359 = vmatpush1.msra.mxu0 0.0
    %2360 = vmatprep.subr.mxu0 0.0
    %2361 = vmatpush1.msra.mxu0 0.0
    %2362 = vmatprep.subr.mxu0 0.0
    %2363 = vmatpush1.msra.mxu0 0.0
    %2364 = vmatprep.subr.mxu0 0.0
    %2365 = vmatpush1.msra.mxu0 0.0
    %2366 = vmatprep.subr.mxu0 0.0
    %2367 = vmatpush1.msra.mxu0 0.0
    %2368 = vmatprep.subr.mxu0 0.0
    %2369 = vmatpush1.msra.mxu0 0.0
    %2370 = vmatprep.subr.mxu0 0.0
    %2371 = vmatpush1.msra.mxu0 0.0
    %2372 = vmatprep.subr.mxu0 0.0
    %2373 = vmatpush1.msra.mxu0 0.0
    %2374 = vmatprep.subr.mxu0 0.0
    %2375 = vmatpush1.msra.mxu0 0.0
    %2376 = vmatprep.subr.mxu0 0.0
    %2377 = vmatpush1.msra.mxu0 0.0
    %2378 = vmatprep.subr.mxu0 0.0
    %2379 = vmatpush1.msra.mxu0 0.0
    %2380 = vmatprep.subr.mxu0 0.0
    %2381 = vmatpush1.msra.mxu0 0.0
    %2382 = vmatprep.subr.mxu0 0.0
    %2383 = vmatpush1.msra.mxu0 0.0
    %2384 = vmatprep.subr.mxu0 0.0
    %2385 = vmatpush1.msra.mxu0 0.0
    %2386 = vmatprep.subr.mxu0 0.0
    %2387 = vmatpush1.msra.mxu0 0.0
    %2388 = vmatprep.subr.mxu0 0.0
    %2389 = vmatpush1.msra.mxu0 0.0
    %2390 = vmatprep.subr.mxu0 0.0
    %2391 = vmatpush1.msra.mxu0 0.0
    %2392 = vmatprep.subr.mxu0 0.0
    %2393 = vmatpush1.msra.mxu0 0.0
    %2394 = vmatprep.subr.mxu0 0.0
    %2395 = vmatpush1.msra.mxu0 0.0
    %2396 = vmatprep.subr.mxu0 0.0
    %2397 = vmatpush1.msra.mxu0 0.0
    %2398 = vmatprep.subr.mxu0 0.0
    %2399 = vmatpush1.msra.mxu0 0.0
    %2400 = vmatprep.subr.mxu0 0.0
    %2401 = vmatpush1.msra.mxu0 0.0
    %2402 = vmatprep.subr.mxu0 0.0
    %2403 = vmatpush1.msra.mxu0 0.0
    %2404 = vmatprep.mubr.f32.mxu0 0.0
    %2405 = vmatmul.mubr.f32.gmra.mrb[0].mxu0 %v1326
    %v2406 = vpop.f32.mrb[0].mxu0
    %v2407 = vadd.f32 0.0, %v2406
    %v2408 = vpop.f32.mrb[0].mxu0
    %2409 = vdwg.mxu0
    %2410 = vmatprep.subr.mxu0 0.0
    %2411 = vmatpush1.msra.mxu0 %v1933
    %2412 = vmatprep.subr.mxu0 0.0
    %2413 = vmatpush1.msra.mxu0 0.0
    %2414 = vmatprep.subr.mxu0 0.0
    %2415 = vmatpush1.msra.mxu0 0.0
    %2416 = vmatprep.subr.mxu0 0.0
    %2417 = vmatpush1.msra.mxu0 0.0
    %2418 = vmatprep.subr.mxu0 0.0
    %2419 = vmatpush1.msra.mxu0 0.0
    %2420 = vmatprep.subr.mxu0 0.0
    %2421 = vmatpush1.msra.mxu0 0.0
    %2422 = vmatprep.subr.mxu0 0.0
    %2423 = vmatpush1.msra.mxu0 0.0
    %2424 = vmatprep.subr.mxu0 0.0
    %2425 = vmatpush1.msra.mxu0 0.0
    %2426 = vmatprep.subr.mxu0 0.0
    %2427 = vmatpush1.msra.mxu0 0.0
    %2428 = vmatprep.subr.mxu0 0.0
    %2429 = vmatpush1.msra.mxu0 0.0
    %2430 = vmatprep.subr.mxu0 0.0
    %2431 = vmatpush1.msra.mxu0 0.0
    %2432 = vmatprep.subr.mxu0 0.0
    %2433 = vmatpush1.msra.mxu0 0.0
    %2434 = vmatprep.subr.mxu0 0.0
    %2435 = vmatpush1.msra.mxu0 0.0
    %2436 = vmatprep.subr.mxu0 0.0
    %2437 = vmatpush1.msra.mxu0 0.0
    %2438 = vmatprep.subr.mxu0 0.0
    %2439 = vmatpush1.msra.mxu0 0.0
    %2440 = vmatprep.subr.mxu0 0.0
    %2441 = vmatpush1.msra.mxu0 0.0
    %2442 = vmatprep.subr.mxu0 0.0
    %2443 = vmatpush1.msra.mxu0 0.0
    %2444 = vmatprep.subr.mxu0 0.0
    %2445 = vmatpush1.msra.mxu0 0.0
    %2446 = vmatprep.subr.mxu0 0.0
    %2447 = vmatpush1.msra.mxu0 0.0
    %2448 = vmatprep.subr.mxu0 0.0
    %2449 = vmatpush1.msra.mxu0 0.0
    %2450 = vmatprep.subr.mxu0 0.0
    %2451 = vmatpush1.msra.mxu0 0.0
    %2452 = vmatprep.subr.mxu0 0.0
    %2453 = vmatpush1.msra.mxu0 0.0
    %2454 = vmatprep.subr.mxu0 0.0
    %2455 = vmatpush1.msra.mxu0 0.0
    %2456 = vmatprep.subr.mxu0 0.0
    %2457 = vmatpush1.msra.mxu0 0.0
    %2458 = vmatprep.subr.mxu0 0.0
    %2459 = vmatpush1.msra.mxu0 0.0
    %2460 = vmatprep.subr.mxu0 0.0
    %2461 = vmatpush1.msra.mxu0 0.0
    %2462 = vmatprep.subr.mxu0 0.0
    %2463 = vmatpush1.msra.mxu0 0.0
    %2464 = vmatprep.subr.mxu0 0.0
    %2465 = vmatpush1.msra.mxu0 0.0
    %2466 = vmatprep.subr.mxu0 0.0
    %2467 = vmatpush1.msra.mxu0 0.0
    %2468 = vmatprep.subr.mxu0 0.0
    %2469 = vmatpush1.msra.mxu0 0.0
    %2470 = vmatprep.subr.mxu0 0.0
    %2471 = vmatpush1.msra.mxu0 0.0
    %2472 = vmatprep.subr.mxu0 0.0
    %2473 = vmatpush1.msra.mxu0 0.0
    %2474 = vmatprep.mubr.f32.mxu0 0.0
    %2475 = vmatmul.mubr.f32.gmra.mrb[0].mxu0 %v1399
    %v2476 = vpop.f32.mrb[0].mxu0
    %v2477 = vadd.f32 %v2407, %v2476
    %v2478 = vpop.f32.mrb[0].mxu0
    %2479 = vdwg.mxu0
    %v2480 = vmax.f32 %v2477, 0.0
    %v2481 = vmul.f32 %v2480, 0.5
    %v2482 = vld [vmem:[#allocation20] sm:$0xff]
    %v2483 = vld [vmem:[#allocation20 + $0x8] sm:$0xff]
    %v2484 = vld [vmem:[#allocation20 + $0x10] sm:$0xff]
    %v2485 = vld [vmem:[#allocation20 + $0x18] sm:$0xff]
    %v2486 = vld [vmem:[#allocation20 + $0x20] sm:$0xff]
    %v2487 = vld [vmem:[#allocation20 + $0x28] sm:$0xff]
    %v2488 = vld [vmem:[#allocation20 + $0x30] sm:$0xff]
    %v2489 = vld [vmem:[#allocation20 + $0x38] sm:$0xff]
    %v2490 = vld [vmem:[#allocation20 + $0x40] sm:$0xff]
    %v2491 = vld [vmem:[#allocation20 + $0x48] sm:$0xff]
    %v2492 = vld [vmem:[#allocation20 + $0x50] sm:$0xff]
    %v2493 = vld [vmem:[#allocation20 + $0x58] sm:$0xff]
    %v2494 = vld [vmem:[#allocation20 + $0x60] sm:$0xff]
    %v2495 = vld [vmem:[#allocation20 + $0x68] sm:$0xff]
    %v2496 = vld [vmem:[#allocation20 + $0x70] sm:$0xff]
    %v2497 = vld [vmem:[#allocation20 + $0x78] sm:$0xff]
    %v2498 = vld [vmem:[#allocation20 + $0x80] sm:$0xff]
    %v2499 = vld [vmem:[#allocation20 + $0x88] sm:$0xff]
    %v2500 = vld [vmem:[#allocation20 + $0x90] sm:$0xff]
    %v2501 = vld [vmem:[#allocation20 + $0x98] sm:$0xff]
    %v2502 = vld [vmem:[#allocation20 + $0xa0] sm:$0xff]
    %v2503 = vld [vmem:[#allocation20 + $0xa8] sm:$0xff]
    %v2504 = vld [vmem:[#allocation20 + $0xb0] sm:$0xff]
    %v2505 = vld [vmem:[#allocation20 + $0xb8] sm:$0xff]
    %v2506 = vld [vmem:[#allocation20 + $0xc0] sm:$0xff]
    %v2507 = vld [vmem:[#allocation20 + $0xc8] sm:$0xff]
    %v2508 = vld [vmem:[#allocation20 + $0xd0] sm:$0xff]
    %v2509 = vld [vmem:[#allocation20 + $0xd8] sm:$0xff]
    %v2510 = vld [vmem:[#allocation20 + $0xe0] sm:$0xff]
    %v2511 = vld [vmem:[#allocation20 + $0xe8] sm:$0xff]
    %v2512 = vld [vmem:[#allocation20 + $0xf0] sm:$0xff]
    %v2513 = vld [vmem:[#allocation20 + $0xf8] sm:$0xff]
    %v2514 = vld [vmem:[#allocation22] sm:$0x3]
    %v2516 = vlaneseq
    %v2517 = vshrl.u32 %v2516, 7
    %v2518 = vsub.s32 0, %v2517
    %v2519 = vrot.slane %v2514, %v2518
    %v2520 = vlaneseq
    %v2521 = vshrl.u32 %v2520, 7
    %v2522 = vsub.s32 1, %v2521
    %v2523 = vrot.slane %v2514, %v2522
    %2526 = vmatprep.subr.mxu0 %v2483
    %2527 = vmatpush1.msra.mxu0 %v2482
    %2528 = vmatprep.subr.mxu0 %v2485
    %2529 = vmatpush1.msra.mxu0 %v2484
    %2530 = vmatprep.subr.mxu0 %v2487
    %2531 = vmatpush1.msra.mxu0 %v2486
    %2532 = vmatprep.subr.mxu0 %v2489
    %2533 = vmatpush1.msra.mxu0 %v2488
    %2534 = vmatprep.subr.mxu0 %v2491
    %2535 = vmatpush1.msra.mxu0 %v2490
    %2536 = vmatprep.subr.mxu0 %v2493
    %2537 = vmatpush1.msra.mxu0 %v2492
    %2538 = vmatprep.subr.mxu0 %v2495
    %2539 = vmatpush1.msra.mxu0 %v2494
    %2540 = vmatprep.subr.mxu0 %v2497
    %2541 = vmatpush1.msra.mxu0 %v2496
    %2542 = vmatprep.subr.mxu0 %v2499
    %2543 = vmatpush1.msra.mxu0 %v2498
    %2544 = vmatprep.subr.mxu0 %v2501
    %2545 = vmatpush1.msra.mxu0 %v2500
    %2546 = vmatprep.subr.mxu0 %v2503
    %2547 = vmatpush1.msra.mxu0 %v2502
    %2548 = vmatprep.subr.mxu0 %v2505
    %2549 = vmatpush1.msra.mxu0 %v2504
    %2550 = vmatprep.subr.mxu0 %v2507
    %2551 = vmatpush1.msra.mxu0 %v2506
    %2552 = vmatprep.subr.mxu0 %v2509
    %2553 = vmatpush1.msra.mxu0 %v2508
    %2554 = vmatprep.subr.mxu0 %v2511
    %2555 = vmatpush1.msra.mxu0 %v2510
    %2556 = vmatprep.subr.mxu0 %v2513
    %2557 = vmatpush1.msra.mxu0 %v2512
    %2558 = vmatprep.subr.mxu0 0.0
    %2559 = vmatpush1.msra.mxu0 0.0
    %2560 = vmatprep.subr.mxu0 0.0
    %2561 = vmatpush1.msra.mxu0 0.0
    %2562 = vmatprep.subr.mxu0 0.0
    %2563 = vmatpush1.msra.mxu0 0.0
    %2564 = vmatprep.subr.mxu0 0.0
    %2565 = vmatpush1.msra.mxu0 0.0
    %2566 = vmatprep.subr.mxu0 0.0
    %2567 = vmatpush1.msra.mxu0 0.0
    %2568 = vmatprep.subr.mxu0 0.0
    %2569 = vmatpush1.msra.mxu0 0.0
    %2570 = vmatprep.subr.mxu0 0.0
    %2571 = vmatpush1.msra.mxu0 0.0
    %2572 = vmatprep.subr.mxu0 0.0
    %2573 = vmatpush1.msra.mxu0 0.0
    %2574 = vmatprep.subr.mxu0 0.0
    %2575 = vmatpush1.msra.mxu0 0.0
    %2576 = vmatprep.subr.mxu0 0.0
    %2577 = vmatpush1.msra.mxu0 0.0
    %2578 = vmatprep.subr.mxu0 0.0
    %2579 = vmatpush1.msra.mxu0 0.0
    %2580 = vmatprep.subr.mxu0 0.0
    %2581 = vmatpush1.msra.mxu0 0.0
    %2582 = vmatprep.subr.mxu0 0.0
    %2583 = vmatpush1.msra.mxu0 0.0
    %2584 = vmatprep.subr.mxu0 0.0
    %2585 = vmatpush1.msra.mxu0 0.0
    %2586 = vmatprep.subr.mxu0 0.0
    %2587 = vmatpush1.msra.mxu0 0.0
    %2588 = vmatprep.subr.mxu0 0.0
    %2589 = vmatpush1.msra.mxu0 0.0
    %2590 = vmatprep.mubr.f32.mxu0 0.0
    %2591 = vmatmul.mubr.f32.gmra.mrb[0].mxu0 %v2089
    %v2592 = vpop.f32.mrb[0].mxu0
    %v2593 = vadd.f32 %v2519, %v2592
    %v2594 = vpop.f32.mrb[0].mxu0
    %v2595 = vadd.f32 %v2523, %v2594
    %2596 = vmatprep.mubr.f32.mxu0 0.0
    %2597 = vmatmul.mubr.f32.gmra.mrb[0].mxu0 %v2090
    %v2598 = vpop.f32.mrb[0].mxu0
    %v2599 = vadd.f32 %v2519, %v2598
    %v2600 = vpop.f32.mrb[0].mxu0
    %v2601 = vadd.f32 %v2523, %v2600
    %2602 = vdwg.mxu0
    %v2603 = vld [vmem:[%s55] sm:$0xff]
    %v2604 = vld [vmem:[%s55 + $0x8] sm:$0xff]
    %v2605 = vld [vmem:[%s55 + $0x10] sm:$0xff]
    %v2606 = vld [vmem:[%s55 + $0x18] sm:$0xff]
    %v2607 = vld [vmem:[%s55 + $0x20] sm:$0xff]
    %v2608 = vld [vmem:[%s55 + $0x28] sm:$0xff]
    %v2609 = vld [vmem:[%s55 + $0x30] sm:$0xff]
    %v2610 = vld [vmem:[%s55 + $0x38] sm:$0xff]
    %v2611 = vld [vmem:[%s55 + $0x40] sm:$0xff]
    %v2612 = vld [vmem:[%s55 + $0x48] sm:$0xff]
    %v2613 = vld [vmem:[%s55 + $0x50] sm:$0xff]
    %v2614 = vld [vmem:[%s55 + $0x58] sm:$0xff]
    %v2615 = vld [vmem:[%s55 + $0x60] sm:$0xff]
    %v2616 = vld [vmem:[%s55 + $0x68] sm:$0xff]
    %v2617 = vld [vmem:[%s55 + $0x70] sm:$0xff]
    %v2618 = vld [vmem:[%s55 + $0x78] sm:$0xff]
    %v2619 = vld [vmem:[%s55 + $0x80] sm:$0xff]
    %v2620 = vld [vmem:[%s55 + $0x88] sm:$0xff]
    %v2621 = vld [vmem:[%s55 + $0x90] sm:$0xff]
    %v2622 = vld [vmem:[%s55 + $0x98] sm:$0xff]
    %v2623 = vld [vmem:[%s55 + $0xa0] sm:$0xff]
    %v2624 = vld [vmem:[%s55 + $0xa8] sm:$0xff]
    %v2625 = vld [vmem:[%s55 + $0xb0] sm:$0xff]
    %v2626 = vld [vmem:[%s55 + $0xb8] sm:$0xff]
    %v2627 = vld [vmem:[%s55 + $0xc0] sm:$0xff]
    %v2628 = vld [vmem:[%s55 + $0xc8] sm:$0xff]
    %v2629 = vld [vmem:[%s55 + $0xd0] sm:$0xff]
    %v2630 = vld [vmem:[%s55 + $0xd8] sm:$0xff]
    %v2631 = vld [vmem:[%s55 + $0xe0] sm:$0xff]
    %v2632 = vld [vmem:[%s55 + $0xe8] sm:$0xff]
    %v2633 = vld [vmem:[%s55 + $0xf0] sm:$0xff]
    %v2634 = vld [vmem:[%s55 + $0xf8] sm:$0xff]
    %v2635 = vld [vmem:[%s55 + $0x100] sm:$0xff]
    %v2636 = vld [vmem:[%s55 + $0x108] sm:$0xff]
    %v2637 = vld [vmem:[%s55 + $0x110] sm:$0xff]
    %v2638 = vld [vmem:[%s55 + $0x118] sm:$0xff]
    %v2639 = vld [vmem:[%s55 + $0x120] sm:$0xff]
    %v2640 = vld [vmem:[%s55 + $0x128] sm:$0xff]
    %v2641 = vld [vmem:[%s55 + $0x130] sm:$0xff]
    %v2642 = vld [vmem:[%s55 + $0x138] sm:$0xff]
    %v2643 = vld [vmem:[%s55 + $0x140] sm:$0xff]
    %v2644 = vld [vmem:[%s55 + $0x148] sm:$0xff]
    %v2645 = vld [vmem:[%s55 + $0x150] sm:$0xff]
    %v2646 = vld [vmem:[%s55 + $0x158] sm:$0xff]
    %v2647 = vld [vmem:[%s55 + $0x160] sm:$0xff]
    %v2648 = vld [vmem:[%s55 + $0x168] sm:$0xff]
    %v2649 = vld [vmem:[%s55 + $0x170] sm:$0xff]
    %v2650 = vld [vmem:[%s55 + $0x178] sm:$0xff]
    %v2651 = vld [vmem:[#allocation23] sm:$0x7]
    %v2653 = vlaneseq
    %v2654 = vshrl.u32 %v2653, 7
    %v2655 = vsub.s32 0, %v2654
    %v2656 = vrot.slane %v2651, %v2655
    %v2657 = vlaneseq
    %v2658 = vshrl.u32 %v2657, 7
    %v2659 = vsub.s32 1, %v2658
    %v2660 = vrot.slane %v2651, %v2659
    %v2661 = vlaneseq
    %v2662 = vshrl.u32 %v2661, 7
    %v2663 = vsub.s32 2, %v2662
    %v2664 = vrot.slane %v2651, %v2663
    %2668 = vmatprep.subr.mxu0 %v2604
    %2669 = vmatpush1.msra.mxu0 %v2603
    %2670 = vmatprep.subr.mxu0 %v2607
    %2671 = vmatpush1.msra.mxu0 %v2606
    %2672 = vmatprep.subr.mxu0 %v2610
    %2673 = vmatpush1.msra.mxu0 %v2609
    %2674 = vmatprep.subr.mxu0 %v2613
    %2675 = vmatpush1.msra.mxu0 %v2612
    %2676 = vmatprep.subr.mxu0 %v2616
    %2677 = vmatpush1.msra.mxu0 %v2615
    %2678 = vmatprep.subr.mxu0 %v2619
    %2679 = vmatpush1.msra.mxu0 %v2618
    %2680 = vmatprep.subr.mxu0 %v2622
    %2681 = vmatpush1.msra.mxu0 %v2621
    %2682 = vmatprep.subr.mxu0 %v2625
    %2683 = vmatpush1.msra.mxu0 %v2624
    %2684 = vmatprep.subr.mxu0 %v2628
    %2685 = vmatpush1.msra.mxu0 %v2627
    %2686 = vmatprep.subr.mxu0 %v2631
    %2687 = vmatpush1.msra.mxu0 %v2630
    %2688 = vmatprep.subr.mxu0 %v2634
    %2689 = vmatpush1.msra.mxu0 %v2633
    %2690 = vmatprep.subr.mxu0 %v2637
    %2691 = vmatpush1.msra.mxu0 %v2636
    %2692 = vmatprep.subr.mxu0 %v2640
    %2693 = vmatpush1.msra.mxu0 %v2639
    %2694 = vmatprep.subr.mxu0 %v2643
    %2695 = vmatpush1.msra.mxu0 %v2642
    %2696 = vmatprep.subr.mxu0 %v2646
    %2697 = vmatpush1.msra.mxu0 %v2645
    %2698 = vmatprep.subr.mxu0 %v2649
    %2699 = vmatpush1.msra.mxu0 %v2648
    %2700 = vmatprep.subr.mxu0 0.0
    %2701 = vmatpush1.msra.mxu0 0.0
    %2702 = vmatprep.subr.mxu0 0.0
    %2703 = vmatpush1.msra.mxu0 0.0
    %2704 = vmatprep.subr.mxu0 0.0
    %2705 = vmatpush1.msra.mxu0 0.0
    %2706 = vmatprep.subr.mxu0 0.0
    %2707 = vmatpush1.msra.mxu0 0.0
    %2708 = vmatprep.subr.mxu0 0.0
    %2709 = vmatpush1.msra.mxu0 0.0
    %2710 = vmatprep.subr.mxu0 0.0
    %2711 = vmatpush1.msra.mxu0 0.0
    %2712 = vmatprep.subr.mxu0 0.0
    %2713 = vmatpush1.msra.mxu0 0.0
    %2714 = vmatprep.subr.mxu0 0.0
    %2715 = vmatpush1.msra.mxu0 0.0
    %2716 = vmatprep.subr.mxu0 0.0
    %2717 = vmatpush1.msra.mxu0 0.0
    %2718 = vmatprep.subr.mxu0 0.0
    %2719 = vmatpush1.msra.mxu0 0.0
    %2720 = vmatprep.subr.mxu0 0.0
    %2721 = vmatpush1.msra.mxu0 0.0
    %2722 = vmatprep.subr.mxu0 0.0
    %2723 = vmatpush1.msra.mxu0 0.0
    %2724 = vmatprep.subr.mxu0 0.0
    %2725 = vmatpush1.msra.mxu0 0.0
    %2726 = vmatprep.subr.mxu0 0.0
    %2727 = vmatpush1.msra.mxu0 0.0
    %2728 = vmatprep.subr.mxu0 0.0
    %2729 = vmatpush1.msra.mxu0 0.0
    %2730 = vmatprep.subr.mxu0 0.0
    %2731 = vmatpush1.msra.mxu0 0.0
    %2732 = vmatprep.mubr.f32.mxu0 0.0
    %2733 = vmatmul.mubr.f32.gmra.mrb[0].mxu0 %v2337
    %v2734 = vpop.f32.mrb[0].mxu0
    %v2735 = vadd.f32 %v2656, %v2734
    %v2736 = vpop.f32.mrb[0].mxu0
    %v2737 = vadd.f32 %v2660, %v2736
    %2738 = vmatprep.mubr.f32.mxu0 0.0
    %2739 = vmatmul.mubr.f32.gmra.mrb[0].mxu0 %v2338
    %v2740 = vpop.f32.mrb[0].mxu0
    %v2741 = vadd.f32 %v2656, %v2740
    %v2742 = vpop.f32.mrb[0].mxu0
    %v2743 = vadd.f32 %v2660, %v2742
    %2744 = vmatprep.mubr.f32.mxu0 0.0
    %2745 = vmatmul.mubr.f32.gmra.mrb[0].mxu0 %v2339
    %v2746 = vpop.f32.mrb[0].mxu0
    %v2747 = vadd.f32 %v2656, %v2746
    %v2748 = vpop.f32.mrb[0].mxu0
    %v2749 = vadd.f32 %v2660, %v2748
    %2750 = vdwg.mxu0
    %2751 = vmatprep.subr.mxu0 0.0
    %2752 = vmatpush1.msra.mxu0 %v2605
    %2753 = vmatprep.subr.mxu0 0.0
    %2754 = vmatpush1.msra.mxu0 %v2608
    %2755 = vmatprep.subr.mxu0 0.0
    %2756 = vmatpush1.msra.mxu0 %v2611
    %2757 = vmatprep.subr.mxu0 0.0
    %2758 = vmatpush1.msra.mxu0 %v2614
    %2759 = vmatprep.subr.mxu0 0.0
    %2760 = vmatpush1.msra.mxu0 %v2617
    %2761 = vmatprep.subr.mxu0 0.0
    %2762 = vmatpush1.msra.mxu0 %v2620
    %2763 = vmatprep.subr.mxu0 0.0
    %2764 = vmatpush1.msra.mxu0 %v2623
    %2765 = vmatprep.subr.mxu0 0.0
    %2766 = vmatpush1.msra.mxu0 %v2626
    %2767 = vmatprep.subr.mxu0 0.0
    %2768 = vmatpush1.msra.mxu0 %v2629
    %2769 = vmatprep.subr.mxu0 0.0
    %2770 = vmatpush1.msra.mxu0 %v2632
    %2771 = vmatprep.subr.mxu0 0.0
    %2772 = vmatpush1.msra.mxu0 %v2635
    %2773 = vmatprep.subr.mxu0 0.0
    %2774 = vmatpush1.msra.mxu0 %v2638
    %2775 = vmatprep.subr.mxu0 0.0
    %2776 = vmatpush1.msra.mxu0 %v2641
    %2777 = vmatprep.subr.mxu0 0.0
    %2778 = vmatpush1.msra.mxu0 %v2644
    %2779 = vmatprep.subr.mxu0 0.0
    %2780 = vmatpush1.msra.mxu0 %v2647
    %2781 = vmatprep.subr.mxu0 0.0
    %2782 = vmatpush1.msra.mxu0 %v2650
    %2783 = vmatprep.subr.mxu0 0.0
    %2784 = vmatpush1.msra.mxu0 0.0
    %2785 = vmatprep.subr.mxu0 0.0
    %2786 = vmatpush1.msra.mxu0 0.0
    %2787 = vmatprep.subr.mxu0 0.0
    %2788 = vmatpush1.msra.mxu0 0.0
    %2789 = vmatprep.subr.mxu0 0.0
    %2790 = vmatpush1.msra.mxu0 0.0
    %2791 = vmatprep.subr.mxu0 0.0
    %2792 = vmatpush1.msra.mxu0 0.0
    %2793 = vmatprep.subr.mxu0 0.0
    %2794 = vmatpush1.msra.mxu0 0.0
    %2795 = vmatprep.subr.mxu0 0.0
    %2796 = vmatpush1.msra.mxu0 0.0
    %2797 = vmatprep.subr.mxu0 0.0
    %2798 = vmatpush1.msra.mxu0 0.0
    %2799 = vmatprep.subr.mxu0 0.0
    %2800 = vmatpush1.msra.mxu0 0.0
    %2801 = vmatprep.subr.mxu0 0.0
    %2802 = vmatpush1.msra.mxu0 0.0
    %2803 = vmatprep.subr.mxu0 0.0
    %2804 = vmatpush1.msra.mxu0 0.0
    %2805 = vmatprep.subr.mxu0 0.0
    %2806 = vmatpush1.msra.mxu0 0.0
    %2807 = vmatprep.subr.mxu0 0.0
    %2808 = vmatpush1.msra.mxu0 0.0
    %2809 = vmatprep.subr.mxu0 0.0
    %2810 = vmatpush1.msra.mxu0 0.0
    %2811 = vmatprep.subr.mxu0 0.0
    %2812 = vmatpush1.msra.mxu0 0.0
    %2813 = vmatprep.subr.mxu0 0.0
    %2814 = vmatpush1.msra.mxu0 0.0
    %2815 = vmatprep.mubr.f32.mxu0 0.0
    %2816 = vmatmul.mubr.f32.gmra.mrb[0].mxu0 %v2337
    %v2817 = vpop.f32.mrb[0].mxu0
    %v2818 = vadd.f32 %v2664, %v2817
    %v2819 = vpop.f32.mrb[0].mxu0
    %2820 = vmatprep.mubr.f32.mxu0 0.0
    %2821 = vmatmul.mubr.f32.gmra.mrb[0].mxu0 %v2338
    %v2822 = vpop.f32.mrb[0].mxu0
    %v2823 = vadd.f32 %v2664, %v2822
    %v2824 = vpop.f32.mrb[0].mxu0
    %2825 = vmatprep.mubr.f32.mxu0 0.0
    %2826 = vmatmul.mubr.f32.gmra.mrb[0].mxu0 %v2339
    %v2827 = vpop.f32.mrb[0].mxu0
    %v2828 = vadd.f32 %v2664, %v2827
    %v2829 = vpop.f32.mrb[0].mxu0
    %2830 = vdwg.mxu0
    %v2831 = vld [vmem:[%s59] sm:$0xff]
    %v2832 = vld [vmem:[%s59 + $0x8] sm:$0xff]
    %v2833 = vld [vmem:[%s59 + $0x10] sm:$0xff]
    %v2834 = vld [vmem:[%s59 + $0x18] sm:$0xff]
    %v2835 = vld [vmem:[%s59 + $0x20] sm:$0xff]
    %v2836 = vld [vmem:[%s59 + $0x28] sm:$0xff]
    %v2837 = vld [vmem:[%s59 + $0x30] sm:$0xff]
    %v2838 = vld [vmem:[%s59 + $0x38] sm:$0xff]
    %v2839 = vld [vmem:[%s59 + $0x40] sm:$0xff]
    %v2840 = vld [vmem:[%s59 + $0x48] sm:$0xff]
    %v2841 = vld [vmem:[%s59 + $0x50] sm:$0xff]
    %v2842 = vld [vmem:[%s59 + $0x58] sm:$0xff]
    %v2843 = vld [vmem:[%s59 + $0x60] sm:$0xff]
    %v2844 = vld [vmem:[%s59 + $0x68] sm:$0xff]
    %v2845 = vld [vmem:[%s59 + $0x70] sm:$0xff]
    %v2846 = vld [vmem:[%s59 + $0x78] sm:$0xff]
    %v2847 = vld [vmem:[%s59 + $0x80] sm:$0xff]
    %v2848 = vld [vmem:[%s59 + $0x88] sm:$0xff]
    %v2849 = vld [vmem:[%s59 + $0x90] sm:$0xff]
    %v2850 = vld [vmem:[%s59 + $0x98] sm:$0xff]
    %v2851 = vld [vmem:[%s59 + $0xa0] sm:$0xff]
    %v2852 = vld [vmem:[%s59 + $0xa8] sm:$0xff]
    %v2853 = vld [vmem:[%s59 + $0xb0] sm:$0xff]
    %v2854 = vld [vmem:[%s59 + $0xb8] sm:$0xff]
    %v2855 = vld [vmem:[%s59 + $0xc0] sm:$0xff]
    %v2856 = vld [vmem:[%s59 + $0xc8] sm:$0xff]
    %v2857 = vld [vmem:[%s59 + $0xd0] sm:$0xff]
    %v2858 = vld [vmem:[%s59 + $0xd8] sm:$0xff]
    %v2859 = vld [vmem:[%s59 + $0xe0] sm:$0xff]
    %v2860 = vld [vmem:[%s59 + $0xe8] sm:$0xff]
    %v2861 = vld [vmem:[%s59 + $0xf0] sm:$0xff]
    %v2862 = vld [vmem:[%s59 + $0xf8] sm:$0xff]
    %v2863 = vld [vmem:[#allocation25] sm:$0x3]
    %v2865 = vlaneseq
    %v2866 = vshrl.u32 %v2865, 7
    %v2867 = vsub.s32 0, %v2866
    %v2868 = vrot.slane %v2863, %v2867
    %v2869 = vlaneseq
    %v2870 = vshrl.u32 %v2869, 7
    %v2871 = vsub.s32 1, %v2870
    %v2872 = vrot.slane %v2863, %v2871
    %2875 = vmatprep.subr.mxu0 %v2832
    %2876 = vmatpush1.msra.mxu0 %v2831
    %2877 = vmatprep.subr.mxu0 %v2834
    %2878 = vmatpush1.msra.mxu0 %v2833
    %2879 = vmatprep.subr.mxu0 %v2836
    %2880 = vmatpush1.msra.mxu0 %v2835
    %2881 = vmatprep.subr.mxu0 %v2838
    %2882 = vmatpush1.msra.mxu0 %v2837
    %2883 = vmatprep.subr.mxu0 %v2840
    %2884 = vmatpush1.msra.mxu0 %v2839
    %2885 = vmatprep.subr.mxu0 %v2842
    %2886 = vmatpush1.msra.mxu0 %v2841
    %2887 = vmatprep.subr.mxu0 %v2844
    %2888 = vmatpush1.msra.mxu0 %v2843
    %2889 = vmatprep.subr.mxu0 %v2846
    %2890 = vmatpush1.msra.mxu0 %v2845
    %2891 = vmatprep.subr.mxu0 %v2848
    %2892 = vmatpush1.msra.mxu0 %v2847
    %2893 = vmatprep.subr.mxu0 %v2850
    %2894 = vmatpush1.msra.mxu0 %v2849
    %2895 = vmatprep.subr.mxu0 %v2852
    %2896 = vmatpush1.msra.mxu0 %v2851
    %2897 = vmatprep.subr.mxu0 %v2854
    %2898 = vmatpush1.msra.mxu0 %v2853
    %2899 = vmatprep.subr.mxu0 %v2856
    %2900 = vmatpush1.msra.mxu0 %v2855
    %2901 = vmatprep.subr.mxu0 %v2858
    %2902 = vmatpush1.msra.mxu0 %v2857
    %2903 = vmatprep.subr.mxu0 %v2860
    %2904 = vmatpush1.msra.mxu0 %v2859
    %2905 = vmatprep.subr.mxu0 %v2862
    %2906 = vmatpush1.msra.mxu0 %v2861
    %2907 = vmatprep.subr.mxu0 0.0
    %2908 = vmatpush1.msra.mxu0 0.0
    %2909 = vmatprep.subr.mxu0 0.0
    %2910 = vmatpush1.msra.mxu0 0.0
    %2911 = vmatprep.subr.mxu0 0.0
    %2912 = vmatpush1.msra.mxu0 0.0
    %2913 = vmatprep.subr.mxu0 0.0
    %2914 = vmatpush1.msra.mxu0 0.0
    %2915 = vmatprep.subr.mxu0 0.0
    %2916 = vmatpush1.msra.mxu0 0.0
    %2917 = vmatprep.subr.mxu0 0.0
    %2918 = vmatpush1.msra.mxu0 0.0
    %2919 = vmatprep.subr.mxu0 0.0
    %2920 = vmatpush1.msra.mxu0 0.0
    %2921 = vmatprep.subr.mxu0 0.0
    %2922 = vmatpush1.msra.mxu0 0.0
    %2923 = vmatprep.subr.mxu0 0.0
    %2924 = vmatpush1.msra.mxu0 0.0
    %2925 = vmatprep.subr.mxu0 0.0
    %2926 = vmatpush1.msra.mxu0 0.0
    %2927 = vmatprep.subr.mxu0 0.0
    %2928 = vmatpush1.msra.mxu0 0.0
    %2929 = vmatprep.subr.mxu0 0.0
    %2930 = vmatpush1.msra.mxu0 0.0
    %2931 = vmatprep.subr.mxu0 0.0
    %2932 = vmatpush1.msra.mxu0 0.0
    %2933 = vmatprep.subr.mxu0 0.0
    %2934 = vmatpush1.msra.mxu0 0.0
    %2935 = vmatprep.subr.mxu0 0.0
    %2936 = vmatpush1.msra.mxu0 0.0
    %2937 = vmatprep.subr.mxu0 0.0
    %2938 = vmatpush1.msra.mxu0 0.0
    %2939 = vmatprep.mubr.f32.mxu0 0.0
    %2940 = vmatmul.mubr.f32.gmra.mrb[0].mxu0 %v2481
    %v2941 = vpop.f32.mrb[0].mxu0
    %v2942 = vadd.f32 %v2868, %v2941
    %v2943 = vpop.f32.mrb[0].mxu0
    %v2944 = vadd.f32 %v2872, %v2943
    %2945 = vdwg.mxu0
    %2946 = vmatprep.subr.mxu0 0.0
    %2947 = vmatpush1.msra.mxu0 %v2735
    %2948 = vmatprep.subr.mxu0 0.0
    %2949 = vmatpush1.msra.mxu0 %v2741
    %2950 = vmatprep.subr.mxu0 0.0
    %2951 = vmatpush1.msra.mxu0 %v2747
    %2952 = vmatprep.subr.mxu0 0.0
    %2953 = vmatpush1.msra.mxu0 0.0
    %2954 = vmatprep.subr.mxu0 0.0
    %2955 = vmatpush1.msra.mxu0 0.0
    %2956 = vmatprep.subr.mxu0 0.0
    %2957 = vmatpush1.msra.mxu0 0.0
    %2958 = vmatprep.subr.mxu0 0.0
    %2959 = vmatpush1.msra.mxu0 0.0
    %2960 = vmatprep.subr.mxu0 0.0
    %2961 = vmatpush1.msra.mxu0 0.0
    %2962 = vmatprep.subr.mxu0 0.0
    %2963 = vmatpush1.msra.mxu0 0.0
    %2964 = vmatprep.subr.mxu0 0.0
    %2965 = vmatpush1.msra.mxu0 0.0
    %2966 = vmatprep.subr.mxu0 0.0
    %2967 = vmatpush1.msra.mxu0 0.0
    %2968 = vmatprep.subr.mxu0 0.0
    %2969 = vmatpush1.msra.mxu0 0.0
    %2970 = vmatprep.subr.mxu0 0.0
    %2971 = vmatpush1.msra.mxu0 0.0
    %2972 = vmatprep.subr.mxu0 0.0
    %2973 = vmatpush1.msra.mxu0 0.0
    %2974 = vmatprep.subr.mxu0 0.0
    %2975 = vmatpush1.msra.mxu0 0.0
    %2976 = vmatprep.subr.mxu0 0.0
    %2977 = vmatpush1.msra.mxu0 0.0
    %2978 = vmatprep.subr.mxu0 0.0
    %2979 = vmatpush1.msra.mxu0 0.0
    %2980 = vmatprep.subr.mxu0 0.0
    %2981 = vmatpush1.msra.mxu0 0.0
    %2982 = vmatprep.subr.mxu0 0.0
    %2983 = vmatpush1.msra.mxu0 0.0
    %2984 = vmatprep.subr.mxu0 0.0
    %2985 = vmatpush1.msra.mxu0 0.0
    %2986 = vmatprep.subr.mxu0 0.0
    %2987 = vmatpush1.msra.mxu0 0.0
    %2988 = vmatprep.subr.mxu0 0.0
    %2989 = vmatpush1.msra.mxu0 0.0
    %2990 = vmatprep.subr.mxu0 0.0
    %2991 = vmatpush1.msra.mxu0 0.0
    %2992 = vmatprep.subr.mxu0 0.0
    %2993 = vmatpush1.msra.mxu0 0.0
    %2994 = vmatprep.subr.mxu0 0.0
    %2995 = vmatpush1.msra.mxu0 0.0
    %2996 = vmatprep.subr.mxu0 0.0
    %2997 = vmatpush1.msra.mxu0 0.0
    %2998 = vmatprep.subr.mxu0 0.0
    %2999 = vmatpush1.msra.mxu0 0.0
    %3000 = vmatprep.subr.mxu0 0.0
    %3001 = vmatpush1.msra.mxu0 0.0
    %3002 = vmatprep.subr.mxu0 0.0
    %3003 = vmatpush1.msra.mxu0 0.0
    %3004 = vmatprep.subr.mxu0 0.0
    %3005 = vmatpush1.msra.mxu0 0.0
    %3006 = vmatprep.subr.mxu0 0.0
    %3007 = vmatpush1.msra.mxu0 0.0
    %3008 = vmatprep.subr.mxu0 0.0
    %3009 = vmatpush1.msra.mxu0 0.0
    %3010 = vmatprep.mubr.f32.mxu0 0.0
    %3011 = vmatmul.mubr.f32.gmra.mrb[0].mxu0 %v882
    %v3012 = vpop.f32.mrb[0].mxu0
    %v3013 = vadd.f32 0.0, %v3012
    %v3014 = vpop.f32.mrb[0].mxu0
    %3015 = vmatprep.mubr.f32.mxu0 0.0
    %3016 = vmatmul.mubr.f32.gmra.mrb[0].mxu0 %v885
    %v3017 = vpop.f32.mrb[0].mxu0
    %v3018 = vadd.f32 0.0, %v3017
    %v3019 = vpop.f32.mrb[0].mxu0
    %3020 = vdwg.mxu0
    %3021 = vmatprep.subr.mxu0 0.0
    %3022 = vmatpush1.msra.mxu0 %v2593
    %3023 = vmatprep.subr.mxu0 0.0
    %3024 = vmatpush1.msra.mxu0 %v2599
    %3025 = vmatprep.subr.mxu0 0.0
    %3026 = vmatpush1.msra.mxu0 0.0
    %3027 = vmatprep.subr.mxu0 0.0
    %3028 = vmatpush1.msra.mxu0 0.0
    %3029 = vmatprep.subr.mxu0 0.0
    %3030 = vmatpush1.msra.mxu0 0.0
    %3031 = vmatprep.subr.mxu0 0.0
    %3032 = vmatpush1.msra.mxu0 0.0
    %3033 = vmatprep.subr.mxu0 0.0
    %3034 = vmatpush1.msra.mxu0 0.0
    %3035 = vmatprep.subr.mxu0 0.0
    %3036 = vmatpush1.msra.mxu0 0.0
    %3037 = vmatprep.subr.mxu0 0.0
    %3038 = vmatpush1.msra.mxu0 0.0
    %3039 = vmatprep.subr.mxu0 0.0
    %3040 = vmatpush1.msra.mxu0 0.0
    %3041 = vmatprep.subr.mxu0 0.0
    %3042 = vmatpush1.msra.mxu0 0.0
    %3043 = vmatprep.subr.mxu0 0.0
    %3044 = vmatpush1.msra.mxu0 0.0
    %3045 = vmatprep.subr.mxu0 0.0
    %3046 = vmatpush1.msra.mxu0 0.0
    %3047 = vmatprep.subr.mxu0 0.0
    %3048 = vmatpush1.msra.mxu0 0.0
    %3049 = vmatprep.subr.mxu0 0.0
    %3050 = vmatpush1.msra.mxu0 0.0
    %3051 = vmatprep.subr.mxu0 0.0
    %3052 = vmatpush1.msra.mxu0 0.0
    %3053 = vmatprep.subr.mxu0 0.0
    %3054 = vmatpush1.msra.mxu0 0.0
    %3055 = vmatprep.subr.mxu0 0.0
    %3056 = vmatpush1.msra.mxu0 0.0
    %3057 = vmatprep.subr.mxu0 0.0
    %3058 = vmatpush1.msra.mxu0 0.0
    %3059 = vmatprep.subr.mxu0 0.0
    %3060 = vmatpush1.msra.mxu0 0.0
    %3061 = vmatprep.subr.mxu0 0.0
    %3062 = vmatpush1.msra.mxu0 0.0
    %3063 = vmatprep.subr.mxu0 0.0
    %3064 = vmatpush1.msra.mxu0 0.0
    %3065 = vmatprep.subr.mxu0 0.0
    %3066 = vmatpush1.msra.mxu0 0.0
    %3067 = vmatprep.subr.mxu0 0.0
    %3068 = vmatpush1.msra.mxu0 0.0
    %3069 = vmatprep.subr.mxu0 0.0
    %3070 = vmatpush1.msra.mxu0 0.0
    %3071 = vmatprep.subr.mxu0 0.0
    %3072 = vmatpush1.msra.mxu0 0.0
    %3073 = vmatprep.subr.mxu0 0.0
    %3074 = vmatpush1.msra.mxu0 0.0
    %3075 = vmatprep.subr.mxu0 0.0
    %3076 = vmatpush1.msra.mxu0 0.0
    %3077 = vmatprep.subr.mxu0 0.0
    %3078 = vmatpush1.msra.mxu0 0.0
    %3079 = vmatprep.subr.mxu0 0.0
    %3080 = vmatpush1.msra.mxu0 0.0
    %3081 = vmatprep.subr.mxu0 0.0
    %3082 = vmatpush1.msra.mxu0 0.0
    %3083 = vmatprep.subr.mxu0 0.0
    %3084 = vmatpush1.msra.mxu0 0.0
    %3085 = vmatprep.mubr.f32.mxu0 0.0
    %3086 = vmatmul.mubr.f32.gmra.mrb[0].mxu0 %v964
    %v3087 = vpop.f32.mrb[0].mxu0
    %v3088 = vadd.f32 %v3013, %v3087
    %v3089 = vpop.f32.mrb[0].mxu0
    %3090 = vmatprep.mubr.f32.mxu0 0.0
    %3091 = vmatmul.mubr.f32.gmra.mrb[0].mxu0 %v967
    %v3092 = vpop.f32.mrb[0].mxu0
    %v3093 = vadd.f32 %v3018, %v3092
    %v3094 = vpop.f32.mrb[0].mxu0
    %3095 = vdwg.mxu0
    %v3096 = vmax.f32 %v3088, 0.0
    %v3097 = vmax.f32 %v3093, 0.0
    %v3098 = vmul.f32 %v3096, 0.5
    %v3099 = vmul.f32 %v3097, 0.5
    %3100 = vmatprep.subr.mxu0 0.0
    %3101 = vmatpush1.msra.mxu0 %v2595
    %3102 = vmatprep.subr.mxu0 0.0
    %3103 = vmatpush1.msra.mxu0 %v2601
    %3104 = vmatprep.subr.mxu0 0.0
    %3105 = vmatpush1.msra.mxu0 0.0
    %3106 = vmatprep.subr.mxu0 0.0
    %3107 = vmatpush1.msra.mxu0 0.0
    %3108 = vmatprep.subr.mxu0 0.0
    %3109 = vmatpush1.msra.mxu0 0.0
    %3110 = vmatprep.subr.mxu0 0.0
    %3111 = vmatpush1.msra.mxu0 0.0
    %3112 = vmatprep.subr.mxu0 0.0
    %3113 = vmatpush1.msra.mxu0 0.0
    %3114 = vmatprep.subr.mxu0 0.0
    %3115 = vmatpush1.msra.mxu0 0.0
    %3116 = vmatprep.subr.mxu0 0.0
    %3117 = vmatpush1.msra.mxu0 0.0
    %3118 = vmatprep.subr.mxu0 0.0
    %3119 = vmatpush1.msra.mxu0 0.0
    %3120 = vmatprep.subr.mxu0 0.0
    %3121 = vmatpush1.msra.mxu0 0.0
    %3122 = vmatprep.subr.mxu0 0.0
    %3123 = vmatpush1.msra.mxu0 0.0
    %3124 = vmatprep.subr.mxu0 0.0
    %3125 = vmatpush1.msra.mxu0 0.0
    %3126 = vmatprep.subr.mxu0 0.0
    %3127 = vmatpush1.msra.mxu0 0.0
    %3128 = vmatprep.subr.mxu0 0.0
    %3129 = vmatpush1.msra.mxu0 0.0
    %3130 = vmatprep.subr.mxu0 0.0
    %3131 = vmatpush1.msra.mxu0 0.0
    %3132 = vmatprep.subr.mxu0 0.0
    %3133 = vmatpush1.msra.mxu0 0.0
    %3134 = vmatprep.subr.mxu0 0.0
    %3135 = vmatpush1.msra.mxu0 0.0
    %3136 = vmatprep.subr.mxu0 0.0
    %3137 = vmatpush1.msra.mxu0 0.0
    %3138 = vmatprep.subr.mxu0 0.0
    %3139 = vmatpush1.msra.mxu0 0.0
    %3140 = vmatprep.subr.mxu0 0.0
    %3141 = vmatpush1.msra.mxu0 0.0
    %3142 = vmatprep.subr.mxu0 0.0
    %3143 = vmatpush1.msra.mxu0 0.0
    %3144 = vmatprep.subr.mxu0 0.0
    %3145 = vmatpush1.msra.mxu0 0.0
    %3146 = vmatprep.subr.mxu0 0.0
    %3147 = vmatpush1.msra.mxu0 0.0
    %3148 = vmatprep.subr.mxu0 0.0
    %3149 = vmatpush1.msra.mxu0 0.0
    %3150 = vmatprep.subr.mxu0 0.0
    %3151 = vmatpush1.msra.mxu0 0.0
    %3152 = vmatprep.subr.mxu0 0.0
    %3153 = vmatpush1.msra.mxu0 0.0
    %3154 = vmatprep.subr.mxu0 0.0
    %3155 = vmatpush1.msra.mxu0 0.0
    %3156 = vmatprep.subr.mxu0 0.0
    %3157 = vmatpush1.msra.mxu0 0.0
    %3158 = vmatprep.subr.mxu0 0.0
    %3159 = vmatpush1.msra.mxu0 0.0
    %3160 = vmatprep.subr.mxu0 0.0
    %3161 = vmatpush1.msra.mxu0 0.0
    %3162 = vmatprep.subr.mxu0 0.0
    %3163 = vmatpush1.msra.mxu0 0.0
    %3164 = vmatprep.mubr.f32.mxu0 0.0
    %3165 = vmatmul.mubr.f32.gmra.mrb[0].mxu0 %v1049
    %v3166 = vpop.f32.mrb[0].mxu0
    %v3167 = vadd.f32 0.0, %v3166
    %v3168 = vpop.f32.mrb[0].mxu0
    %3169 = vmatprep.mubr.f32.mxu0 0.0
    %3170 = vmatmul.mubr.f32.gmra.mrb[0].mxu0 %v1052
    %v3171 = vpop.f32.mrb[0].mxu0
    %v3172 = vadd.f32 0.0, %v3171
    %v3173 = vpop.f32.mrb[0].mxu0
    %3174 = vmatprep.mubr.f32.mxu0 0.0
    %3175 = vmatmul.mubr.f32.gmra.mrb[0].mxu0 %v1055
    %v3176 = vpop.f32.mrb[0].mxu0
    %v3177 = vadd.f32 0.0, %v3176
    %v3178 = vpop.f32.mrb[0].mxu0
    %3179 = vdwg.mxu0
    %3180 = vmatprep.subr.mxu0 0.0
    %3181 = vmatpush1.msra.mxu0 %v2737
    %3182 = vmatprep.subr.mxu0 0.0
    %3183 = vmatpush1.msra.mxu0 %v2743
    %3184 = vmatprep.subr.mxu0 0.0
    %3185 = vmatpush1.msra.mxu0 %v2749
    %3186 = vmatprep.subr.mxu0 0.0
    %3187 = vmatpush1.msra.mxu0 0.0
    %3188 = vmatprep.subr.mxu0 0.0
    %3189 = vmatpush1.msra.mxu0 0.0
    %3190 = vmatprep.subr.mxu0 0.0
    %3191 = vmatpush1.msra.mxu0 0.0
    %3192 = vmatprep.subr.mxu0 0.0
    %3193 = vmatpush1.msra.mxu0 0.0
    %3194 = vmatprep.subr.mxu0 0.0
    %3195 = vmatpush1.msra.mxu0 0.0
    %3196 = vmatprep.subr.mxu0 0.0
    %3197 = vmatpush1.msra.mxu0 0.0
    %3198 = vmatprep.subr.mxu0 0.0
    %3199 = vmatpush1.msra.mxu0 0.0
    %3200 = vmatprep.subr.mxu0 0.0
    %3201 = vmatpush1.msra.mxu0 0.0
    %3202 = vmatprep.subr.mxu0 0.0
    %3203 = vmatpush1.msra.mxu0 0.0
    %3204 = vmatprep.subr.mxu0 0.0
    %3205 = vmatpush1.msra.mxu0 0.0
    %3206 = vmatprep.subr.mxu0 0.0
    %3207 = vmatpush1.msra.mxu0 0.0
    %3208 = vmatprep.subr.mxu0 0.0
    %3209 = vmatpush1.msra.mxu0 0.0
    %3210 = vmatprep.subr.mxu0 0.0
    %3211 = vmatpush1.msra.mxu0 0.0
    %3212 = vmatprep.subr.mxu0 0.0
    %3213 = vmatpush1.msra.mxu0 0.0
    %3214 = vmatprep.subr.mxu0 0.0
    %3215 = vmatpush1.msra.mxu0 0.0
    %3216 = vmatprep.subr.mxu0 0.0
    %3217 = vmatpush1.msra.mxu0 0.0
    %3218 = vmatprep.subr.mxu0 0.0
    %3219 = vmatpush1.msra.mxu0 0.0
    %3220 = vmatprep.subr.mxu0 0.0
    %3221 = vmatpush1.msra.mxu0 0.0
    %3222 = vmatprep.subr.mxu0 0.0
    %3223 = vmatpush1.msra.mxu0 0.0
    %3224 = vmatprep.subr.mxu0 0.0
    %3225 = vmatpush1.msra.mxu0 0.0
    %3226 = vmatprep.subr.mxu0 0.0
    %3227 = vmatpush1.msra.mxu0 0.0
    %3228 = vmatprep.subr.mxu0 0.0
    %3229 = vmatpush1.msra.mxu0 0.0
    %3230 = vmatprep.subr.mxu0 0.0
    %3231 = vmatpush1.msra.mxu0 0.0
    %3232 = vmatprep.subr.mxu0 0.0
    %3233 = vmatpush1.msra.mxu0 0.0
    %3234 = vmatprep.subr.mxu0 0.0
    %3235 = vmatpush1.msra.mxu0 0.0
    %3236 = vmatprep.subr.mxu0 0.0
    %3237 = vmatpush1.msra.mxu0 0.0
    %3238 = vmatprep.subr.mxu0 0.0
    %3239 = vmatpush1.msra.mxu0 0.0
    %3240 = vmatprep.subr.mxu0 0.0
    %3241 = vmatpush1.msra.mxu0 0.0
    %3242 = vmatprep.subr.mxu0 0.0
    %3243 = vmatpush1.msra.mxu0 0.0
    %3244 = vmatprep.mubr.f32.mxu0 0.0
    %3245 = vmatmul.mubr.f32.gmra.mrb[0].mxu0 %v1138
    %v3246 = vpop.f32.mrb[0].mxu0
    %v3247 = vadd.f32 %v3167, %v3246
    %v3248 = vpop.f32.mrb[0].mxu0
    %3249 = vmatprep.mubr.f32.mxu0 0.0
    %3250 = vmatmul.mubr.f32.gmra.mrb[0].mxu0 %v1141
    %v3251 = vpop.f32.mrb[0].mxu0
    %v3252 = vadd.f32 %v3172, %v3251
    %v3253 = vpop.f32.mrb[0].mxu0
    %3254 = vmatprep.mubr.f32.mxu0 0.0
    %3255 = vmatmul.mubr.f32.gmra.mrb[0].mxu0 %v1144
    %v3256 = vpop.f32.mrb[0].mxu0
    %v3257 = vadd.f32 %v3177, %v3256
    %v3258 = vpop.f32.mrb[0].mxu0
    %3259 = vdwg.mxu0
    %3260 = vmatprep.subr.mxu0 0.0
    %3261 = vmatpush1.msra.mxu0 %v2944
    %3262 = vmatprep.subr.mxu0 0.0
    %3263 = vmatpush1.msra.mxu0 0.0
    %3264 = vmatprep.subr.mxu0 0.0
    %3265 = vmatpush1.msra.mxu0 0.0
    %3266 = vmatprep.subr.mxu0 0.0
    %3267 = vmatpush1.msra.mxu0 0.0
    %3268 = vmatprep.subr.mxu0 0.0
    %3269 = vmatpush1.msra.mxu0 0.0
    %3270 = vmatprep.subr.mxu0 0.0
    %3271 = vmatpush1.msra.mxu0 0.0
    %3272 = vmatprep.subr.mxu0 0.0
    %3273 = vmatpush1.msra.mxu0 0.0
    %3274 = vmatprep.subr.mxu0 0.0
    %3275 = vmatpush1.msra.mxu0 0.0
    %3276 = vmatprep.subr.mxu0 0.0
    %3277 = vmatpush1.msra.mxu0 0.0
    %3278 = vmatprep.subr.mxu0 0.0
    %3279 = vmatpush1.msra.mxu0 0.0
    %3280 = vmatprep.subr.mxu0 0.0
    %3281 = vmatpush1.msra.mxu0 0.0
    %3282 = vmatprep.subr.mxu0 0.0
    %3283 = vmatpush1.msra.mxu0 0.0
    %3284 = vmatprep.subr.mxu0 0.0
    %3285 = vmatpush1.msra.mxu0 0.0
    %3286 = vmatprep.subr.mxu0 0.0
    %3287 = vmatpush1.msra.mxu0 0.0
    %3288 = vmatprep.subr.mxu0 0.0
    %3289 = vmatpush1.msra.mxu0 0.0
    %3290 = vmatprep.subr.mxu0 0.0
    %3291 = vmatpush1.msra.mxu0 0.0
    %3292 = vmatprep.subr.mxu0 0.0
    %3293 = vmatpush1.msra.mxu0 0.0
    %3294 = vmatprep.subr.mxu0 0.0
    %3295 = vmatpush1.msra.mxu0 0.0
    %3296 = vmatprep.subr.mxu0 0.0
    %3297 = vmatpush1.msra.mxu0 0.0
    %3298 = vmatprep.subr.mxu0 0.0
    %3299 = vmatpush1.msra.mxu0 0.0
    %3300 = vmatprep.subr.mxu0 0.0
    %3301 = vmatpush1.msra.mxu0 0.0
    %3302 = vmatprep.subr.mxu0 0.0
    %3303 = vmatpush1.msra.mxu0 0.0
    %3304 = vmatprep.subr.mxu0 0.0
    %3305 = vmatpush1.msra.mxu0 0.0
    %3306 = vmatprep.subr.mxu0 0.0
    %3307 = vmatpush1.msra.mxu0 0.0
    %3308 = vmatprep.subr.mxu0 0.0
    %3309 = vmatpush1.msra.mxu0 0.0
    %3310 = vmatprep.subr.mxu0 0.0
    %3311 = vmatpush1.msra.mxu0 0.0
    %3312 = vmatprep.subr.mxu0 0.0
    %3313 = vmatpush1.msra.mxu0 0.0
    %3314 = vmatprep.subr.mxu0 0.0
    %3315 = vmatpush1.msra.mxu0 0.0
    %3316 = vmatprep.subr.mxu0 0.0
    %3317 = vmatpush1.msra.mxu0 0.0
    %3318 = vmatprep.subr.mxu0 0.0
    %3319 = vmatpush1.msra.mxu0 0.0
    %3320 = vmatprep.subr.mxu0 0.0
    %3321 = vmatpush1.msra.mxu0 0.0
    %3322 = vmatprep.subr.mxu0 0.0
    %3323 = vmatpush1.msra.mxu0 0.0
    %3324 = vmatprep.mubr.f32.mxu0 0.0
    %3325 = vmatmul.mubr.f32.gmra.mrb[0].mxu0 %v1228
    %v3326 = vpop.f32.mrb[0].mxu0
    %v3327 = vadd.f32 0.0, %v3326
    %v3328 = vpop.f32.mrb[0].mxu0
    %3329 = vmatprep.mubr.f32.mxu0 0.0
    %3330 = vmatmul.mubr.f32.gmra.mrb[0].mxu0 %v1231
    %v3331 = vpop.f32.mrb[0].mxu0
    %v3332 = vadd.f32 0.0, %v3331
    %v3333 = vpop.f32.mrb[0].mxu0
    %3334 = vmatprep.mubr.f32.mxu0 0.0
    %3335 = vmatmul.mubr.f32.gmra.mrb[0].mxu0 %v1234
    %v3336 = vpop.f32.mrb[0].mxu0
    %v3337 = vadd.f32 0.0, %v3336
    %v3338 = vpop.f32.mrb[0].mxu0
    %3339 = vdwg.mxu0
    %v3340 = vadd.f32 %v3247, %v3327
    %v3341 = vadd.f32 %v3252, %v3332
    %v3342 = vadd.f32 %v3257, %v3337
    %v3343 = vmax.f32 %v3340, 0.0
    %v3344 = vmax.f32 %v3341, 0.0
    %v3345 = vmax.f32 %v3342, 0.0
    %v3346 = vmul.f32 %v3343, 0.33333334
    %v3347 = vmul.f32 %v3344, 0.33333334
    %v3348 = vmul.f32 %v3345, 0.33333334
    %3349 = vmatprep.subr.mxu0 0.0
    %3350 = vmatpush1.msra.mxu0 %v2818
    %3351 = vmatprep.subr.mxu0 0.0
    %3352 = vmatpush1.msra.mxu0 %v2823
    %3353 = vmatprep.subr.mxu0 0.0
    %3354 = vmatpush1.msra.mxu0 %v2828
    %3355 = vmatprep.subr.mxu0 0.0
    %3356 = vmatpush1.msra.mxu0 0.0
    %3357 = vmatprep.subr.mxu0 0.0
    %3358 = vmatpush1.msra.mxu0 0.0
    %3359 = vmatprep.subr.mxu0 0.0
    %3360 = vmatpush1.msra.mxu0 0.0
    %3361 = vmatprep.subr.mxu0 0.0
    %3362 = vmatpush1.msra.mxu0 0.0
    %3363 = vmatprep.subr.mxu0 0.0
    %3364 = vmatpush1.msra.mxu0 0.0
    %3365 = vmatprep.subr.mxu0 0.0
    %3366 = vmatpush1.msra.mxu0 0.0
    %3367 = vmatprep.subr.mxu0 0.0
    %3368 = vmatpush1.msra.mxu0 0.0
    %3369 = vmatprep.subr.mxu0 0.0
    %3370 = vmatpush1.msra.mxu0 0.0
    %3371 = vmatprep.subr.mxu0 0.0
    %3372 = vmatpush1.msra.mxu0 0.0
    %3373 = vmatprep.subr.mxu0 0.0
    %3374 = vmatpush1.msra.mxu0 0.0
    %3375 = vmatprep.subr.mxu0 0.0
    %3376 = vmatpush1.msra.mxu0 0.0
    %3377 = vmatprep.subr.mxu0 0.0
    %3378 = vmatpush1.msra.mxu0 0.0
    %3379 = vmatprep.subr.mxu0 0.0
    %3380 = vmatpush1.msra.mxu0 0.0
    %3381 = vmatprep.subr.mxu0 0.0
    %3382 = vmatpush1.msra.mxu0 0.0
    %3383 = vmatprep.subr.mxu0 0.0
    %3384 = vmatpush1.msra.mxu0 0.0
    %3385 = vmatprep.subr.mxu0 0.0
    %3386 = vmatpush1.msra.mxu0 0.0
    %3387 = vmatprep.subr.mxu0 0.0
    %3388 = vmatpush1.msra.mxu0 0.0
    %3389 = vmatprep.subr.mxu0 0.0
    %3390 = vmatpush1.msra.mxu0 0.0
    %3391 = vmatprep.subr.mxu0 0.0
    %3392 = vmatpush1.msra.mxu0 0.0
    %3393 = vmatprep.subr.mxu0 0.0
    %3394 = vmatpush1.msra.mxu0 0.0
    %3395 = vmatprep.subr.mxu0 0.0
    %3396 = vmatpush1.msra.mxu0 0.0
    %3397 = vmatprep.subr.mxu0 0.0
    %3398 = vmatpush1.msra.mxu0 0.0
    %3399 = vmatprep.subr.mxu0 0.0
    %3400 = vmatpush1.msra.mxu0 0.0
    %3401 = vmatprep.subr.mxu0 0.0
    %3402 = vmatpush1.msra.mxu0 0.0
    %3403 = vmatprep.subr.mxu0 0.0
    %3404 = vmatpush1.msra.mxu0 0.0
    %3405 = vmatprep.subr.mxu0 0.0
    %3406 = vmatpush1.msra.mxu0 0.0
    %3407 = vmatprep.subr.mxu0 0.0
    %3408 = vmatpush1.msra.mxu0 0.0
    %3409 = vmatprep.subr.mxu0 0.0
    %3410 = vmatpush1.msra.mxu0 0.0
    %3411 = vmatprep.subr.mxu0 0.0
    %3412 = vmatpush1.msra.mxu0 0.0
    %3413 = vmatprep.mubr.f32.mxu0 0.0
    %3414 = vmatmul.mubr.f32.gmra.mrb[0].mxu0 %v1326
    %v3415 = vpop.f32.mrb[0].mxu0
    %v3416 = vadd.f32 0.0, %v3415
    %v3417 = vpop.f32.mrb[0].mxu0
    %3418 = vdwg.mxu0
    %3419 = vmatprep.subr.mxu0 0.0
    %3420 = vmatpush1.msra.mxu0 %v2942
    %3421 = vmatprep.subr.mxu0 0.0
    %3422 = vmatpush1.msra.mxu0 0.0
    %3423 = vmatprep.subr.mxu0 0.0
    %3424 = vmatpush1.msra.mxu0 0.0
    %3425 = vmatprep.subr.mxu0 0.0
    %3426 = vmatpush1.msra.mxu0 0.0
    %3427 = vmatprep.subr.mxu0 0.0
    %3428 = vmatpush1.msra.mxu0 0.0
    %3429 = vmatprep.subr.mxu0 0.0
    %3430 = vmatpush1.msra.mxu0 0.0
    %3431 = vmatprep.subr.mxu0 0.0
    %3432 = vmatpush1.msra.mxu0 0.0
    %3433 = vmatprep.subr.mxu0 0.0
    %3434 = vmatpush1.msra.mxu0 0.0
    %3435 = vmatprep.subr.mxu0 0.0
    %3436 = vmatpush1.msra.mxu0 0.0
    %3437 = vmatprep.subr.mxu0 0.0
    %3438 = vmatpush1.msra.mxu0 0.0
    %3439 = vmatprep.subr.mxu0 0.0
    %3440 = vmatpush1.msra.mxu0 0.0
    %3441 = vmatprep.subr.mxu0 0.0
    %3442 = vmatpush1.msra.mxu0 0.0
    %3443 = vmatprep.subr.mxu0 0.0
    %3444 = vmatpush1.msra.mxu0 0.0
    %3445 = vmatprep.subr.mxu0 0.0
    %3446 = vmatpush1.msra.mxu0 0.0
    %3447 = vmatprep.subr.mxu0 0.0
    %3448 = vmatpush1.msra.mxu0 0.0
    %3449 = vmatprep.subr.mxu0 0.0
    %3450 = vmatpush1.msra.mxu0 0.0
    %3451 = vmatprep.subr.mxu0 0.0
    %3452 = vmatpush1.msra.mxu0 0.0
    %3453 = vmatprep.subr.mxu0 0.0
    %3454 = vmatpush1.msra.mxu0 0.0
    %3455 = vmatprep.subr.mxu0 0.0
    %3456 = vmatpush1.msra.mxu0 0.0
    %3457 = vmatprep.subr.mxu0 0.0
    %3458 = vmatpush1.msra.mxu0 0.0
    %3459 = vmatprep.subr.mxu0 0.0
    %3460 = vmatpush1.msra.mxu0 0.0
    %3461 = vmatprep.subr.mxu0 0.0
    %3462 = vmatpush1.msra.mxu0 0.0
    %3463 = vmatprep.subr.mxu0 0.0
    %3464 = vmatpush1.msra.mxu0 0.0
    %3465 = vmatprep.subr.mxu0 0.0
    %3466 = vmatpush1.msra.mxu0 0.0
    %3467 = vmatprep.subr.mxu0 0.0
    %3468 = vmatpush1.msra.mxu0 0.0
    %3469 = vmatprep.subr.mxu0 0.0
    %3470 = vmatpush1.msra.mxu0 0.0
    %3471 = vmatprep.subr.mxu0 0.0
    %3472 = vmatpush1.msra.mxu0 0.0
    %3473 = vmatprep.subr.mxu0 0.0
    %3474 = vmatpush1.msra.mxu0 0.0
    %3475 = vmatprep.subr.mxu0 0.0
    %3476 = vmatpush1.msra.mxu0 0.0
    %3477 = vmatprep.subr.mxu0 0.0
    %3478 = vmatpush1.msra.mxu0 0.0
    %3479 = vmatprep.subr.mxu0 0.0
    %3480 = vmatpush1.msra.mxu0 0.0
    %3481 = vmatprep.subr.mxu0 0.0
    %3482 = vmatpush1.msra.mxu0 0.0
    %3483 = vmatprep.mubr.f32.mxu0 0.0
    %3484 = vmatmul.mubr.f32.gmra.mrb[0].mxu0 %v1399
    %v3485 = vpop.f32.mrb[0].mxu0
    %v3486 = vadd.f32 %v3416, %v3485
    %v3487 = vpop.f32.mrb[0].mxu0
    %3488 = vdwg.mxu0
    %v3489 = vmax.f32 %v3486, 0.0
    %v3490 = vmul.f32 %v3489, 0.5
    %v3491 = vld [vmem:[%s63] sm:$0xff]
    %v3492 = vld [vmem:[%s63 + $0x8] sm:$0xff]
    %v3493 = vld [vmem:[%s63 + $0x10] sm:$0xff]
    %v3494 = vld [vmem:[%s63 + $0x18] sm:$0xff]
    %v3495 = vld [vmem:[%s63 + $0x20] sm:$0xff]
    %v3496 = vld [vmem:[%s63 + $0x28] sm:$0xff]
    %v3497 = vld [vmem:[%s63 + $0x30] sm:$0xff]
    %v3498 = vld [vmem:[%s63 + $0x38] sm:$0xff]
    %v3499 = vld [vmem:[%s63 + $0x40] sm:$0xff]
    %v3500 = vld [vmem:[%s63 + $0x48] sm:$0xff]
    %v3501 = vld [vmem:[%s63 + $0x50] sm:$0xff]
    %v3502 = vld [vmem:[%s63 + $0x58] sm:$0xff]
    %v3503 = vld [vmem:[%s63 + $0x60] sm:$0xff]
    %v3504 = vld [vmem:[%s63 + $0x68] sm:$0xff]
    %v3505 = vld [vmem:[%s63 + $0x70] sm:$0xff]
    %v3506 = vld [vmem:[%s63 + $0x78] sm:$0xff]
    %v3507 = vld [vmem:[%s65] sm:$0xff]
    %v3508 = vld [vmem:[%s65 + $0x8] sm:$0xff]
    %v3509 = vld [vmem:[%s65 + $0x10] sm:$0xff]
    %v3510 = vld [vmem:[%s65 + $0x18] sm:$0xff]
    %v3511 = vld [vmem:[%s65 + $0x20] sm:$0xff]
    %v3512 = vld [vmem:[%s65 + $0x28] sm:$0xff]
    %v3513 = vld [vmem:[%s65 + $0x30] sm:$0xff]
    %v3514 = vld [vmem:[%s65 + $0x38] sm:$0xff]
    %v3515 = vld [vmem:[%s65 + $0x40] sm:$0xff]
    %v3516 = vld [vmem:[%s65 + $0x48] sm:$0xff]
    %v3517 = vld [vmem:[%s65 + $0x50] sm:$0xff]
    %v3518 = vld [vmem:[%s65 + $0x58] sm:$0xff]
    %v3519 = vld [vmem:[%s65 + $0x60] sm:$0xff]
    %v3520 = vld [vmem:[%s65 + $0x68] sm:$0xff]
    %v3521 = vld [vmem:[%s65 + $0x70] sm:$0xff]
    %v3522 = vld [vmem:[%s65 + $0x78] sm:$0xff]
    %3523 = vmatprep.subr.mxu0 0.0
    %3524 = vmatpush1.msra.mxu0 %v3507
    %3525 = vmatprep.subr.mxu0 0.0
    %3526 = vmatpush1.msra.mxu0 %v3508
    %3527 = vmatprep.subr.mxu0 0.0
    %3528 = vmatpush1.msra.mxu0 %v3509
    %3529 = vmatprep.subr.mxu0 0.0
    %3530 = vmatpush1.msra.mxu0 %v3510
    %3531 = vmatprep.subr.mxu0 0.0
    %3532 = vmatpush1.msra.mxu0 %v3511
    %3533 = vmatprep.subr.mxu0 0.0
    %3534 = vmatpush1.msra.mxu0 %v3512
    %3535 = vmatprep.subr.mxu0 0.0
    %3536 = vmatpush1.msra.mxu0 %v3513
    %3537 = vmatprep.subr.mxu0 0.0
    %3538 = vmatpush1.msra.mxu0 %v3514
    %3539 = vmatprep.subr.mxu0 0.0
    %3540 = vmatpush1.msra.mxu0 %v3515
    %3541 = vmatprep.subr.mxu0 0.0
    %3542 = vmatpush1.msra.mxu0 %v3516
    %3543 = vmatprep.subr.mxu0 0.0
    %3544 = vmatpush1.msra.mxu0 %v3517
    %3545 = vmatprep.subr.mxu0 0.0
    %3546 = vmatpush1.msra.mxu0 %v3518
    %3547 = vmatprep.subr.mxu0 0.0
    %3548 = vmatpush1.msra.mxu0 %v3519
    %3549 = vmatprep.subr.mxu0 0.0
    %3550 = vmatpush1.msra.mxu0 %v3520
    %3551 = vmatprep.subr.mxu0 0.0
    %3552 = vmatpush1.msra.mxu0 %v3521
    %3553 = vmatprep.subr.mxu0 0.0
    %3554 = vmatpush1.msra.mxu0 %v3522
    %3555 = vmatprep.subr.mxu0 0.0
    %3556 = vmatpush1.msra.mxu0 0.0
    %3557 = vmatprep.subr.mxu0 0.0
    %3558 = vmatpush1.msra.mxu0 0.0
    %3559 = vmatprep.subr.mxu0 0.0
    %3560 = vmatpush1.msra.mxu0 0.0
    %3561 = vmatprep.subr.mxu0 0.0
    %3562 = vmatpush1.msra.mxu0 0.0
    %3563 = vmatprep.subr.mxu0 0.0
    %3564 = vmatpush1.msra.mxu0 0.0
    %3565 = vmatprep.subr.mxu0 0.0
    %3566 = vmatpush1.msra.mxu0 0.0
    %3567 = vmatprep.subr.mxu0 0.0
    %3568 = vmatpush1.msra.mxu0 0.0
    %3569 = vmatprep.subr.mxu0 0.0
    %3570 = vmatpush1.msra.mxu0 0.0
    %3571 = vmatprep.subr.mxu0 0.0
    %3572 = vmatpush1.msra.mxu0 0.0
    %3573 = vmatprep.subr.mxu0 0.0
    %3574 = vmatpush1.msra.mxu0 0.0
    %3575 = vmatprep.subr.mxu0 0.0
    %3576 = vmatpush1.msra.mxu0 0.0
    %3577 = vmatprep.subr.mxu0 0.0
    %3578 = vmatpush1.msra.mxu0 0.0
    %3579 = vmatprep.subr.mxu0 0.0
    %3580 = vmatpush1.msra.mxu0 0.0
    %3581 = vmatprep.subr.mxu0 0.0
    %3582 = vmatpush1.msra.mxu0 0.0
    %3583 = vmatprep.subr.mxu0 0.0
    %3584 = vmatpush1.msra.mxu0 0.0
    %3585 = vmatprep.subr.mxu0 0.0
    %3586 = vmatpush1.msra.mxu0 0.0
    %3587 = vmatprep.mubr.f32.mxu0 0.0
    %3588 = vmatmul.mubr.f32.gmra.mrb[0].mxu0 %v2089
    %v3589 = vpop.f32.mrb[0].mxu0
    %v3590 = vadd.f32 0.0, %v3589
    %v3591 = vpop.f32.mrb[0].mxu0
    %3592 = vmatprep.mubr.f32.mxu0 0.0
    %3593 = vmatmul.mubr.f32.gmra.mrb[0].mxu0 %v2090
    %v3594 = vpop.f32.mrb[0].mxu0
    %v3595 = vadd.f32 0.0, %v3594
    %v3596 = vpop.f32.mrb[0].mxu0
    %3597 = vdwg.mxu0
    %3598 = vmatprep.subr.mxu0 0.0
    %3599 = vmatpush1.msra.mxu0 %v3491
    %3600 = vmatprep.subr.mxu0 0.0
    %3601 = vmatpush1.msra.mxu0 %v3492
    %3602 = vmatprep.subr.mxu0 0.0
    %3603 = vmatpush1.msra.mxu0 %v3493
    %3604 = vmatprep.subr.mxu0 0.0
    %3605 = vmatpush1.msra.mxu0 %v3494
    %3606 = vmatprep.subr.mxu0 0.0
    %3607 = vmatpush1.msra.mxu0 %v3495
    %3608 = vmatprep.subr.mxu0 0.0
    %3609 = vmatpush1.msra.mxu0 %v3496
    %3610 = vmatprep.subr.mxu0 0.0
    %3611 = vmatpush1.msra.mxu0 %v3497
    %3612 = vmatprep.subr.mxu0 0.0
    %3613 = vmatpush1.msra.mxu0 %v3498
    %3614 = vmatprep.subr.mxu0 0.0
    %3615 = vmatpush1.msra.mxu0 %v3499
    %3616 = vmatprep.subr.mxu0 0.0
    %3617 = vmatpush1.msra.mxu0 %v3500
    %3618 = vmatprep.subr.mxu0 0.0
    %3619 = vmatpush1.msra.mxu0 %v3501
    %3620 = vmatprep.subr.mxu0 0.0
    %3621 = vmatpush1.msra.mxu0 %v3502
    %3622 = vmatprep.subr.mxu0 0.0
    %3623 = vmatpush1.msra.mxu0 %v3503
    %3624 = vmatprep.subr.mxu0 0.0
    %3625 = vmatpush1.msra.mxu0 %v3504
    %3626 = vmatprep.subr.mxu0 0.0
    %3627 = vmatpush1.msra.mxu0 %v3505
    %3628 = vmatprep.subr.mxu0 0.0
    %3629 = vmatpush1.msra.mxu0 %v3506
    %3630 = vmatprep.subr.mxu0 0.0
    %3631 = vmatpush1.msra.mxu0 0.0
    %3632 = vmatprep.subr.mxu0 0.0
    %3633 = vmatpush1.msra.mxu0 0.0
    %3634 = vmatprep.subr.mxu0 0.0
    %3635 = vmatpush1.msra.mxu0 0.0
    %3636 = vmatprep.subr.mxu0 0.0
    %3637 = vmatpush1.msra.mxu0 0.0
    %3638 = vmatprep.subr.mxu0 0.0
    %3639 = vmatpush1.msra.mxu0 0.0
    %3640 = vmatprep.subr.mxu0 0.0
    %3641 = vmatpush1.msra.mxu0 0.0
    %3642 = vmatprep.subr.mxu0 0.0
    %3643 = vmatpush1.msra.mxu0 0.0
    %3644 = vmatprep.subr.mxu0 0.0
    %3645 = vmatpush1.msra.mxu0 0.0
    %3646 = vmatprep.subr.mxu0 0.0
    %3647 = vmatpush1.msra.mxu0 0.0
    %3648 = vmatprep.subr.mxu0 0.0
    %3649 = vmatpush1.msra.mxu0 0.0
    %3650 = vmatprep.subr.mxu0 0.0
    %3651 = vmatpush1.msra.mxu0 0.0
    %3652 = vmatprep.subr.mxu0 0.0
    %3653 = vmatpush1.msra.mxu0 0.0
    %3654 = vmatprep.subr.mxu0 0.0
    %3655 = vmatpush1.msra.mxu0 0.0
    %3656 = vmatprep.subr.mxu0 0.0
    %3657 = vmatpush1.msra.mxu0 0.0
    %3658 = vmatprep.subr.mxu0 0.0
    %3659 = vmatpush1.msra.mxu0 0.0
    %3660 = vmatprep.subr.mxu0 0.0
    %3661 = vmatpush1.msra.mxu0 0.0
    %3662 = vmatprep.mubr.f32.mxu0 0.0
    %3663 = vmatmul.mubr.f32.gmra.mrb[0].mxu0 %v1046
    %v3664 = vpop.f32.mrb[0].mxu0
    %v3665 = vadd.f32 %v3590, %v3664
    %v3666 = vpop.f32.mrb[0].mxu0
    %3667 = vmatprep.mubr.f32.mxu0 0.0
    %3668 = vmatmul.mubr.f32.gmra.mrb[0].mxu0 %v1047
    %v3669 = vpop.f32.mrb[0].mxu0
    %v3670 = vadd.f32 %v3595, %v3669
    %v3671 = vpop.f32.mrb[0].mxu0
    %3672 = vdwg.mxu0
    %v3673 = vld [vmem:[%s67] sm:$0xff]
    %v3674 = vld [vmem:[%s67 + $0x8] sm:$0xff]
    %v3675 = vld [vmem:[%s67 + $0x10] sm:$0xff]
    %v3676 = vld [vmem:[%s67 + $0x18] sm:$0xff]
    %v3677 = vld [vmem:[%s67 + $0x20] sm:$0xff]
    %v3678 = vld [vmem:[%s67 + $0x28] sm:$0xff]
    %v3679 = vld [vmem:[%s67 + $0x30] sm:$0xff]
    %v3680 = vld [vmem:[%s67 + $0x38] sm:$0xff]
    %v3681 = vld [vmem:[%s67 + $0x40] sm:$0xff]
    %v3682 = vld [vmem:[%s67 + $0x48] sm:$0xff]
    %v3683 = vld [vmem:[%s67 + $0x50] sm:$0xff]
    %v3684 = vld [vmem:[%s67 + $0x58] sm:$0xff]
    %v3685 = vld [vmem:[%s67 + $0x60] sm:$0xff]
    %v3686 = vld [vmem:[%s67 + $0x68] sm:$0xff]
    %v3687 = vld [vmem:[%s67 + $0x70] sm:$0xff]
    %v3688 = vld [vmem:[%s67 + $0x78] sm:$0xff]
    %3689 = vmatprep.subr.mxu0 0.0
    %3690 = vmatpush1.msra.mxu0 %v3673
    %3691 = vmatprep.subr.mxu0 0.0
    %3692 = vmatpush1.msra.mxu0 %v3674
    %3693 = vmatprep.subr.mxu0 0.0
    %3694 = vmatpush1.msra.mxu0 %v3675
    %3695 = vmatprep.subr.mxu0 0.0
    %3696 = vmatpush1.msra.mxu0 %v3676
    %3697 = vmatprep.subr.mxu0 0.0
    %3698 = vmatpush1.msra.mxu0 %v3677
    %3699 = vmatprep.subr.mxu0 0.0
    %3700 = vmatpush1.msra.mxu0 %v3678
    %3701 = vmatprep.subr.mxu0 0.0
    %3702 = vmatpush1.msra.mxu0 %v3679
    %3703 = vmatprep.subr.mxu0 0.0
    %3704 = vmatpush1.msra.mxu0 %v3680
    %3705 = vmatprep.subr.mxu0 0.0
    %3706 = vmatpush1.msra.mxu0 %v3681
    %3707 = vmatprep.subr.mxu0 0.0
    %3708 = vmatpush1.msra.mxu0 %v3682
    %3709 = vmatprep.subr.mxu0 0.0
    %3710 = vmatpush1.msra.mxu0 %v3683
    %3711 = vmatprep.subr.mxu0 0.0
    %3712 = vmatpush1.msra.mxu0 %v3684
    %3713 = vmatprep.subr.mxu0 0.0
    %3714 = vmatpush1.msra.mxu0 %v3685
    %3715 = vmatprep.subr.mxu0 0.0
    %3716 = vmatpush1.msra.mxu0 %v3686
    %3717 = vmatprep.subr.mxu0 0.0
    %3718 = vmatpush1.msra.mxu0 %v3687
    %3719 = vmatprep.subr.mxu0 0.0
    %3720 = vmatpush1.msra.mxu0 %v3688
    %3721 = vmatprep.subr.mxu0 0.0
    %3722 = vmatpush1.msra.mxu0 0.0
    %3723 = vmatprep.subr.mxu0 0.0
    %3724 = vmatpush1.msra.mxu0 0.0
    %3725 = vmatprep.subr.mxu0 0.0
    %3726 = vmatpush1.msra.mxu0 0.0
    %3727 = vmatprep.subr.mxu0 0.0
    %3728 = vmatpush1.msra.mxu0 0.0
    %3729 = vmatprep.subr.mxu0 0.0
    %3730 = vmatpush1.msra.mxu0 0.0
    %3731 = vmatprep.subr.mxu0 0.0
    %3732 = vmatpush1.msra.mxu0 0.0
    %3733 = vmatprep.subr.mxu0 0.0
    %3734 = vmatpush1.msra.mxu0 0.0
    %3735 = vmatprep.subr.mxu0 0.0
    %3736 = vmatpush1.msra.mxu0 0.0
    %3737 = vmatprep.subr.mxu0 0.0
    %3738 = vmatpush1.msra.mxu0 0.0
    %3739 = vmatprep.subr.mxu0 0.0
    %3740 = vmatpush1.msra.mxu0 0.0
    %3741 = vmatprep.subr.mxu0 0.0
    %3742 = vmatpush1.msra.mxu0 0.0
    %3743 = vmatprep.subr.mxu0 0.0
    %3744 = vmatpush1.msra.mxu0 0.0
    %3745 = vmatprep.subr.mxu0 0.0
    %3746 = vmatpush1.msra.mxu0 0.0
    %3747 = vmatprep.subr.mxu0 0.0
    %3748 = vmatpush1.msra.mxu0 0.0
    %3749 = vmatprep.subr.mxu0 0.0
    %3750 = vmatpush1.msra.mxu0 0.0
    %3751 = vmatprep.subr.mxu0 0.0
    %3752 = vmatpush1.msra.mxu0 0.0
    %3753 = vmatprep.mubr.f32.mxu0 0.0
    %3754 = vmatmul.mubr.f32.gmra.mrb[0].mxu0 %v3098
    %v3755 = vpop.f32.mrb[0].mxu0
    %v3756 = vadd.f32 0.0, %v3755
    %v3757 = vpop.f32.mrb[0].mxu0
    %3758 = vmatprep.mubr.f32.mxu0 0.0
    %3759 = vmatmul.mubr.f32.gmra.mrb[0].mxu0 %v3099
    %v3760 = vpop.f32.mrb[0].mxu0
    %v3761 = vadd.f32 0.0, %v3760
    %v3762 = vpop.f32.mrb[0].mxu0
    %3763 = vdwg.mxu0
    %v3764 = vadd.f32 %v3665, %v3756
    %v3765 = vadd.f32 %v3670, %v3761
    %v3766 = vld [vmem:[#allocation26] sm:$0x1]
    %v3768 = vlaneseq
    %v3769 = vshrl.u32 %v3768, 7
    %v3770 = vsub.s32 0, %v3769
    %v3771 = vrot.slane %v3766, %v3770
    %v3773 = vadd.f32 %v3764, %v3771
    %v3774 = vadd.f32 %v3765, %v3771
    %v3775 = vld [vmem:[%s71] sm:$0xff]
    %v3776 = vld [vmem:[%s71 + $0x8] sm:$0xff]
    %v3777 = vld [vmem:[%s71 + $0x10] sm:$0xff]
    %v3778 = vld [vmem:[%s71 + $0x18] sm:$0xff]
    %v3779 = vld [vmem:[%s71 + $0x20] sm:$0xff]
    %v3780 = vld [vmem:[%s71 + $0x28] sm:$0xff]
    %v3781 = vld [vmem:[%s71 + $0x30] sm:$0xff]
    %v3782 = vld [vmem:[%s71 + $0x38] sm:$0xff]
    %v3783 = vld [vmem:[%s71 + $0x40] sm:$0xff]
    %v3784 = vld [vmem:[%s71 + $0x48] sm:$0xff]
    %v3785 = vld [vmem:[%s71 + $0x50] sm:$0xff]
    %v3786 = vld [vmem:[%s71 + $0x58] sm:$0xff]
    %v3787 = vld [vmem:[%s71 + $0x60] sm:$0xff]
    %v3788 = vld [vmem:[%s71 + $0x68] sm:$0xff]
    %v3789 = vld [vmem:[%s71 + $0x70] sm:$0xff]
    %v3790 = vld [vmem:[%s71 + $0x78] sm:$0xff]
    %v3791 = vld [vmem:[%s73] sm:$0xff]
    %v3792 = vld [vmem:[%s73 + $0x8] sm:$0xff]
    %v3793 = vld [vmem:[%s73 + $0x10] sm:$0xff]
    %v3794 = vld [vmem:[%s73 + $0x18] sm:$0xff]
    %v3795 = vld [vmem:[%s73 + $0x20] sm:$0xff]
    %v3796 = vld [vmem:[%s73 + $0x28] sm:$0xff]
    %v3797 = vld [vmem:[%s73 + $0x30] sm:$0xff]
    %v3798 = vld [vmem:[%s73 + $0x38] sm:$0xff]
    %v3799 = vld [vmem:[%s73 + $0x40] sm:$0xff]
    %v3800 = vld [vmem:[%s73 + $0x48] sm:$0xff]
    %v3801 = vld [vmem:[%s73 + $0x50] sm:$0xff]
    %v3802 = vld [vmem:[%s73 + $0x58] sm:$0xff]
    %v3803 = vld [vmem:[%s73 + $0x60] sm:$0xff]
    %v3804 = vld [vmem:[%s73 + $0x68] sm:$0xff]
    %v3805 = vld [vmem:[%s73 + $0x70] sm:$0xff]
    %v3806 = vld [vmem:[%s73 + $0x78] sm:$0xff]
    %3807 = vmatprep.subr.mxu0 0.0
    %3808 = vmatpush1.msra.mxu0 %v3791
    %3809 = vmatprep.subr.mxu0 0.0
    %3810 = vmatpush1.msra.mxu0 %v3792
    %3811 = vmatprep.subr.mxu0 0.0
    %3812 = vmatpush1.msra.mxu0 %v3793
    %3813 = vmatprep.subr.mxu0 0.0
    %3814 = vmatpush1.msra.mxu0 %v3794
    %3815 = vmatprep.subr.mxu0 0.0
    %3816 = vmatpush1.msra.mxu0 %v3795
    %3817 = vmatprep.subr.mxu0 0.0
    %3818 = vmatpush1.msra.mxu0 %v3796
    %3819 = vmatprep.subr.mxu0 0.0
    %3820 = vmatpush1.msra.mxu0 %v3797
    %3821 = vmatprep.subr.mxu0 0.0
    %3822 = vmatpush1.msra.mxu0 %v3798
    %3823 = vmatprep.subr.mxu0 0.0
    %3824 = vmatpush1.msra.mxu0 %v3799
    %3825 = vmatprep.subr.mxu0 0.0
    %3826 = vmatpush1.msra.mxu0 %v3800
    %3827 = vmatprep.subr.mxu0 0.0
    %3828 = vmatpush1.msra.mxu0 %v3801
    %3829 = vmatprep.subr.mxu0 0.0
    %3830 = vmatpush1.msra.mxu0 %v3802
    %3831 = vmatprep.subr.mxu0 0.0
    %3832 = vmatpush1.msra.mxu0 %v3803
    %3833 = vmatprep.subr.mxu0 0.0
    %3834 = vmatpush1.msra.mxu0 %v3804
    %3835 = vmatprep.subr.mxu0 0.0
    %3836 = vmatpush1.msra.mxu0 %v3805
    %3837 = vmatprep.subr.mxu0 0.0
    %3838 = vmatpush1.msra.mxu0 %v3806
    %3839 = vmatprep.subr.mxu0 0.0
    %3840 = vmatpush1.msra.mxu0 0.0
    %3841 = vmatprep.subr.mxu0 0.0
    %3842 = vmatpush1.msra.mxu0 0.0
    %3843 = vmatprep.subr.mxu0 0.0
    %3844 = vmatpush1.msra.mxu0 0.0
    %3845 = vmatprep.subr.mxu0 0.0
    %3846 = vmatpush1.msra.mxu0 0.0
    %3847 = vmatprep.subr.mxu0 0.0
    %3848 = vmatpush1.msra.mxu0 0.0
    %3849 = vmatprep.subr.mxu0 0.0
    %3850 = vmatpush1.msra.mxu0 0.0
    %3851 = vmatprep.subr.mxu0 0.0
    %3852 = vmatpush1.msra.mxu0 0.0
    %3853 = vmatprep.subr.mxu0 0.0
    %3854 = vmatpush1.msra.mxu0 0.0
    %3855 = vmatprep.subr.mxu0 0.0
    %3856 = vmatpush1.msra.mxu0 0.0
    %3857 = vmatprep.subr.mxu0 0.0
    %3858 = vmatpush1.msra.mxu0 0.0
    %3859 = vmatprep.subr.mxu0 0.0
    %3860 = vmatpush1.msra.mxu0 0.0
    %3861 = vmatprep.subr.mxu0 0.0
    %3862 = vmatpush1.msra.mxu0 0.0
    %3863 = vmatprep.subr.mxu0 0.0
    %3864 = vmatpush1.msra.mxu0 0.0
    %3865 = vmatprep.subr.mxu0 0.0
    %3866 = vmatpush1.msra.mxu0 0.0
    %3867 = vmatprep.subr.mxu0 0.0
    %3868 = vmatpush1.msra.mxu0 0.0
    %3869 = vmatprep.subr.mxu0 0.0
    %3870 = vmatpush1.msra.mxu0 0.0
    %3871 = vmatprep.mubr.f32.mxu0 0.0
    %3872 = vmatmul.mubr.f32.gmra.mrb[0].mxu0 %v2337
    %v3873 = vpop.f32.mrb[0].mxu0
    %v3874 = vadd.f32 0.0, %v3873
    %v3875 = vpop.f32.mrb[0].mxu0
    %3876 = vmatprep.mubr.f32.mxu0 0.0
    %3877 = vmatmul.mubr.f32.gmra.mrb[0].mxu0 %v2338
    %v3878 = vpop.f32.mrb[0].mxu0
    %v3879 = vadd.f32 0.0, %v3878
    %v3880 = vpop.f32.mrb[0].mxu0
    %3881 = vmatprep.mubr.f32.mxu0 0.0
    %3882 = vmatmul.mubr.f32.gmra.mrb[0].mxu0 %v2339
    %v3883 = vpop.f32.mrb[0].mxu0
    %v3884 = vadd.f32 0.0, %v3883
    %v3885 = vpop.f32.mrb[0].mxu0
    %3886 = vdwg.mxu0
    %3887 = vmatprep.subr.mxu0 0.0
    %3888 = vmatpush1.msra.mxu0 %v3775
    %3889 = vmatprep.subr.mxu0 0.0
    %3890 = vmatpush1.msra.mxu0 %v3776
    %3891 = vmatprep.subr.mxu0 0.0
    %3892 = vmatpush1.msra.mxu0 %v3777
    %3893 = vmatprep.subr.mxu0 0.0
    %3894 = vmatpush1.msra.mxu0 %v3778
    %3895 = vmatprep.subr.mxu0 0.0
    %3896 = vmatpush1.msra.mxu0 %v3779
    %3897 = vmatprep.subr.mxu0 0.0
    %3898 = vmatpush1.msra.mxu0 %v3780
    %3899 = vmatprep.subr.mxu0 0.0
    %3900 = vmatpush1.msra.mxu0 %v3781
    %3901 = vmatprep.subr.mxu0 0.0
    %3902 = vmatpush1.msra.mxu0 %v3782
    %3903 = vmatprep.subr.mxu0 0.0
    %3904 = vmatpush1.msra.mxu0 %v3783
    %3905 = vmatprep.subr.mxu0 0.0
    %3906 = vmatpush1.msra.mxu0 %v3784
    %3907 = vmatprep.subr.mxu0 0.0
    %3908 = vmatpush1.msra.mxu0 %v3785
    %3909 = vmatprep.subr.mxu0 0.0
    %3910 = vmatpush1.msra.mxu0 %v3786
    %3911 = vmatprep.subr.mxu0 0.0
    %3912 = vmatpush1.msra.mxu0 %v3787
    %3913 = vmatprep.subr.mxu0 0.0
    %3914 = vmatpush1.msra.mxu0 %v3788
    %3915 = vmatprep.subr.mxu0 0.0
    %3916 = vmatpush1.msra.mxu0 %v3789
    %3917 = vmatprep.subr.mxu0 0.0
    %3918 = vmatpush1.msra.mxu0 %v3790
    %3919 = vmatprep.subr.mxu0 0.0
    %3920 = vmatpush1.msra.mxu0 0.0
    %3921 = vmatprep.subr.mxu0 0.0
    %3922 = vmatpush1.msra.mxu0 0.0
    %3923 = vmatprep.subr.mxu0 0.0
    %3924 = vmatpush1.msra.mxu0 0.0
    %3925 = vmatprep.subr.mxu0 0.0
    %3926 = vmatpush1.msra.mxu0 0.0
    %3927 = vmatprep.subr.mxu0 0.0
    %3928 = vmatpush1.msra.mxu0 0.0
    %3929 = vmatprep.subr.mxu0 0.0
    %3930 = vmatpush1.msra.mxu0 0.0
    %3931 = vmatprep.subr.mxu0 0.0
    %3932 = vmatpush1.msra.mxu0 0.0
    %3933 = vmatprep.subr.mxu0 0.0
    %3934 = vmatpush1.msra.mxu0 0.0
    %3935 = vmatprep.subr.mxu0 0.0
    %3936 = vmatpush1.msra.mxu0 0.0
    %3937 = vmatprep.subr.mxu0 0.0
    %3938 = vmatpush1.msra.mxu0 0.0
    %3939 = vmatprep.subr.mxu0 0.0
    %3940 = vmatpush1.msra.mxu0 0.0
    %3941 = vmatprep.subr.mxu0 0.0
    %3942 = vmatpush1.msra.mxu0 0.0
    %3943 = vmatprep.subr.mxu0 0.0
    %3944 = vmatpush1.msra.mxu0 0.0
    %3945 = vmatprep.subr.mxu0 0.0
    %3946 = vmatpush1.msra.mxu0 0.0
    %3947 = vmatprep.subr.mxu0 0.0
    %3948 = vmatpush1.msra.mxu0 0.0
    %3949 = vmatprep.subr.mxu0 0.0
    %3950 = vmatpush1.msra.mxu0 0.0
    %3951 = vmatprep.mubr.f32.mxu0 0.0
    %3952 = vmatmul.mubr.f32.gmra.mrb[0].mxu0 %v1322
    %v3953 = vpop.f32.mrb[0].mxu0
    %v3954 = vadd.f32 %v3874, %v3953
    %v3955 = vpop.f32.mrb[0].mxu0
    %3956 = vmatprep.mubr.f32.mxu0 0.0
    %3957 = vmatmul.mubr.f32.gmra.mrb[0].mxu0 %v1323
    %v3958 = vpop.f32.mrb[0].mxu0
    %v3959 = vadd.f32 %v3879, %v3958
    %v3960 = vpop.f32.mrb[0].mxu0
    %3961 = vmatprep.mubr.f32.mxu0 0.0
    %3962 = vmatmul.mubr.f32.gmra.mrb[0].mxu0 %v1324
    %v3963 = vpop.f32.mrb[0].mxu0
    %v3964 = vadd.f32 %v3884, %v3963
    %v3965 = vpop.f32.mrb[0].mxu0
    %3966 = vdwg.mxu0
    %v3967 = vld [vmem:[%s75] sm:$0xff]
    %v3968 = vld [vmem:[%s75 + $0x8] sm:$0xff]
    %v3969 = vld [vmem:[%s75 + $0x10] sm:$0xff]
    %v3970 = vld [vmem:[%s75 + $0x18] sm:$0xff]
    %v3971 = vld [vmem:[%s75 + $0x20] sm:$0xff]
    %v3972 = vld [vmem:[%s75 + $0x28] sm:$0xff]
    %v3973 = vld [vmem:[%s75 + $0x30] sm:$0xff]
    %v3974 = vld [vmem:[%s75 + $0x38] sm:$0xff]
    %v3975 = vld [vmem:[%s75 + $0x40] sm:$0xff]
    %v3976 = vld [vmem:[%s75 + $0x48] sm:$0xff]
    %v3977 = vld [vmem:[%s75 + $0x50] sm:$0xff]
    %v3978 = vld [vmem:[%s75 + $0x58] sm:$0xff]
    %v3979 = vld [vmem:[%s75 + $0x60] sm:$0xff]
    %v3980 = vld [vmem:[%s75 + $0x68] sm:$0xff]
    %v3981 = vld [vmem:[%s75 + $0x70] sm:$0xff]
    %v3982 = vld [vmem:[%s75 + $0x78] sm:$0xff]
    %3983 = vmatprep.subr.mxu0 0.0
    %3984 = vmatpush1.msra.mxu0 %v3967
    %3985 = vmatprep.subr.mxu0 0.0
    %3986 = vmatpush1.msra.mxu0 %v3968
    %3987 = vmatprep.subr.mxu0 0.0
    %3988 = vmatpush1.msra.mxu0 %v3969
    %3989 = vmatprep.subr.mxu0 0.0
    %3990 = vmatpush1.msra.mxu0 %v3970
    %3991 = vmatprep.subr.mxu0 0.0
    %3992 = vmatpush1.msra.mxu0 %v3971
    %3993 = vmatprep.subr.mxu0 0.0
    %3994 = vmatpush1.msra.mxu0 %v3972
    %3995 = vmatprep.subr.mxu0 0.0
    %3996 = vmatpush1.msra.mxu0 %v3973
    %3997 = vmatprep.subr.mxu0 0.0
    %3998 = vmatpush1.msra.mxu0 %v3974
    %3999 = vmatprep.subr.mxu0 0.0
    %4000 = vmatpush1.msra.mxu0 %v3975
    %4001 = vmatprep.subr.mxu0 0.0
    %4002 = vmatpush1.msra.mxu0 %v3976
    %4003 = vmatprep.subr.mxu0 0.0
    %4004 = vmatpush1.msra.mxu0 %v3977
    %4005 = vmatprep.subr.mxu0 0.0
    %4006 = vmatpush1.msra.mxu0 %v3978
    %4007 = vmatprep.subr.mxu0 0.0
    %4008 = vmatpush1.msra.mxu0 %v3979
    %4009 = vmatprep.subr.mxu0 0.0
    %4010 = vmatpush1.msra.mxu0 %v3980
    %4011 = vmatprep.subr.mxu0 0.0
    %4012 = vmatpush1.msra.mxu0 %v3981
    %4013 = vmatprep.subr.mxu0 0.0
    %4014 = vmatpush1.msra.mxu0 %v3982
    %4015 = vmatprep.subr.mxu0 0.0
    %4016 = vmatpush1.msra.mxu0 0.0
    %4017 = vmatprep.subr.mxu0 0.0
    %4018 = vmatpush1.msra.mxu0 0.0
    %4019 = vmatprep.subr.mxu0 0.0
    %4020 = vmatpush1.msra.mxu0 0.0
    %4021 = vmatprep.subr.mxu0 0.0
    %4022 = vmatpush1.msra.mxu0 0.0
    %4023 = vmatprep.subr.mxu0 0.0
    %4024 = vmatpush1.msra.mxu0 0.0
    %4025 = vmatprep.subr.mxu0 0.0
    %4026 = vmatpush1.msra.mxu0 0.0
    %4027 = vmatprep.subr.mxu0 0.0
    %4028 = vmatpush1.msra.mxu0 0.0
    %4029 = vmatprep.subr.mxu0 0.0
    %4030 = vmatpush1.msra.mxu0 0.0
    %4031 = vmatprep.subr.mxu0 0.0
    %4032 = vmatpush1.msra.mxu0 0.0
    %4033 = vmatprep.subr.mxu0 0.0
    %4034 = vmatpush1.msra.mxu0 0.0
    %4035 = vmatprep.subr.mxu0 0.0
    %4036 = vmatpush1.msra.mxu0 0.0
    %4037 = vmatprep.subr.mxu0 0.0
    %4038 = vmatpush1.msra.mxu0 0.0
    %4039 = vmatprep.subr.mxu0 0.0
    %4040 = vmatpush1.msra.mxu0 0.0
    %4041 = vmatprep.subr.mxu0 0.0
    %4042 = vmatpush1.msra.mxu0 0.0
    %4043 = vmatprep.subr.mxu0 0.0
    %4044 = vmatpush1.msra.mxu0 0.0
    %4045 = vmatprep.subr.mxu0 0.0
    %4046 = vmatpush1.msra.mxu0 0.0
    %4047 = vmatprep.mubr.f32.mxu0 0.0
    %4048 = vmatmul.mubr.f32.gmra.mrb[0].mxu0 %v3346
    %v4049 = vpop.f32.mrb[0].mxu0
    %v4050 = vadd.f32 0.0, %v4049
    %v4051 = vpop.f32.mrb[0].mxu0
    %4052 = vmatprep.mubr.f32.mxu0 0.0
    %4053 = vmatmul.mubr.f32.gmra.mrb[0].mxu0 %v3347
    %v4054 = vpop.f32.mrb[0].mxu0
    %v4055 = vadd.f32 0.0, %v4054
    %v4056 = vpop.f32.mrb[0].mxu0
    %4057 = vmatprep.mubr.f32.mxu0 0.0
    %4058 = vmatmul.mubr.f32.gmra.mrb[0].mxu0 %v3348
    %v4059 = vpop.f32.mrb[0].mxu0
    %v4060 = vadd.f32 0.0, %v4059
    %v4061 = vpop.f32.mrb[0].mxu0
    %4062 = vdwg.mxu0
    %v4063 = vadd.f32 %v3954, %v4050
    %v4064 = vadd.f32 %v3959, %v4055
    %v4065 = vadd.f32 %v3964, %v4060
    %v4066 = vld [vmem:[#allocation28] sm:$0x1]
    %v4068 = vlaneseq
    %v4069 = vshrl.u32 %v4068, 7
    %v4070 = vsub.s32 0, %v4069
    %v4071 = vrot.slane %v4066, %v4070
    %v4073 = vadd.f32 %v4063, %v4071
    %v4074 = vadd.f32 %v4064, %v4071
    %v4075 = vadd.f32 %v4065, %v4071
    %v4076 = vld [vmem:[%s79] sm:$0xff]
    %v4077 = vld [vmem:[%s79 + $0x8] sm:$0xff]
    %v4078 = vld [vmem:[%s79 + $0x10] sm:$0xff]
    %v4079 = vld [vmem:[%s79 + $0x18] sm:$0xff]
    %v4080 = vld [vmem:[%s79 + $0x20] sm:$0xff]
    %v4081 = vld [vmem:[%s79 + $0x28] sm:$0xff]
    %v4082 = vld [vmem:[%s79 + $0x30] sm:$0xff]
    %v4083 = vld [vmem:[%s79 + $0x38] sm:$0xff]
    %v4084 = vld [vmem:[%s79 + $0x40] sm:$0xff]
    %v4085 = vld [vmem:[%s79 + $0x48] sm:$0xff]
    %v4086 = vld [vmem:[%s79 + $0x50] sm:$0xff]
    %v4087 = vld [vmem:[%s79 + $0x58] sm:$0xff]
    %v4088 = vld [vmem:[%s79 + $0x60] sm:$0xff]
    %v4089 = vld [vmem:[%s79 + $0x68] sm:$0xff]
    %v4090 = vld [vmem:[%s79 + $0x70] sm:$0xff]
    %v4091 = vld [vmem:[%s79 + $0x78] sm:$0xff]
    %v4092 = vld [vmem:[%s81] sm:$0xff]
    %v4093 = vld [vmem:[%s81 + $0x8] sm:$0xff]
    %v4094 = vld [vmem:[%s81 + $0x10] sm:$0xff]
    %v4095 = vld [vmem:[%s81 + $0x18] sm:$0xff]
    %v4096 = vld [vmem:[%s81 + $0x20] sm:$0xff]
    %v4097 = vld [vmem:[%s81 + $0x28] sm:$0xff]
    %v4098 = vld [vmem:[%s81 + $0x30] sm:$0xff]
    %v4099 = vld [vmem:[%s81 + $0x38] sm:$0xff]
    %v4100 = vld [vmem:[%s81 + $0x40] sm:$0xff]
    %v4101 = vld [vmem:[%s81 + $0x48] sm:$0xff]
    %v4102 = vld [vmem:[%s81 + $0x50] sm:$0xff]
    %v4103 = vld [vmem:[%s81 + $0x58] sm:$0xff]
    %v4104 = vld [vmem:[%s81 + $0x60] sm:$0xff]
    %v4105 = vld [vmem:[%s81 + $0x68] sm:$0xff]
    %v4106 = vld [vmem:[%s81 + $0x70] sm:$0xff]
    %v4107 = vld [vmem:[%s81 + $0x78] sm:$0xff]
    %4108 = vmatprep.subr.mxu0 0.0
    %4109 = vmatpush1.msra.mxu0 %v4092
    %4110 = vmatprep.subr.mxu0 0.0
    %4111 = vmatpush1.msra.mxu0 %v4093
    %4112 = vmatprep.subr.mxu0 0.0
    %4113 = vmatpush1.msra.mxu0 %v4094
    %4114 = vmatprep.subr.mxu0 0.0
    %4115 = vmatpush1.msra.mxu0 %v4095
    %4116 = vmatprep.subr.mxu0 0.0
    %4117 = vmatpush1.msra.mxu0 %v4096
    %4118 = vmatprep.subr.mxu0 0.0
    %4119 = vmatpush1.msra.mxu0 %v4097
    %4120 = vmatprep.subr.mxu0 0.0
    %4121 = vmatpush1.msra.mxu0 %v4098
    %4122 = vmatprep.subr.mxu0 0.0
    %4123 = vmatpush1.msra.mxu0 %v4099
    %4124 = vmatprep.subr.mxu0 0.0
    %4125 = vmatpush1.msra.mxu0 %v4100
    %4126 = vmatprep.subr.mxu0 0.0
    %4127 = vmatpush1.msra.mxu0 %v4101
    %4128 = vmatprep.subr.mxu0 0.0
    %4129 = vmatpush1.msra.mxu0 %v4102
    %4130 = vmatprep.subr.mxu0 0.0
    %4131 = vmatpush1.msra.mxu0 %v4103
    %4132 = vmatprep.subr.mxu0 0.0
    %4133 = vmatpush1.msra.mxu0 %v4104
    %4134 = vmatprep.subr.mxu0 0.0
    %4135 = vmatpush1.msra.mxu0 %v4105
    %4136 = vmatprep.subr.mxu0 0.0
    %4137 = vmatpush1.msra.mxu0 %v4106
    %4138 = vmatprep.subr.mxu0 0.0
    %4139 = vmatpush1.msra.mxu0 %v4107
    %4140 = vmatprep.subr.mxu0 0.0
    %4141 = vmatpush1.msra.mxu0 0.0
    %4142 = vmatprep.subr.mxu0 0.0
    %4143 = vmatpush1.msra.mxu0 0.0
    %4144 = vmatprep.subr.mxu0 0.0
    %4145 = vmatpush1.msra.mxu0 0.0
    %4146 = vmatprep.subr.mxu0 0.0
    %4147 = vmatpush1.msra.mxu0 0.0
    %4148 = vmatprep.subr.mxu0 0.0
    %4149 = vmatpush1.msra.mxu0 0.0
    %4150 = vmatprep.subr.mxu0 0.0
    %4151 = vmatpush1.msra.mxu0 0.0
    %4152 = vmatprep.subr.mxu0 0.0
    %4153 = vmatpush1.msra.mxu0 0.0
    %4154 = vmatprep.subr.mxu0 0.0
    %4155 = vmatpush1.msra.mxu0 0.0
    %4156 = vmatprep.subr.mxu0 0.0
    %4157 = vmatpush1.msra.mxu0 0.0
    %4158 = vmatprep.subr.mxu0 0.0
    %4159 = vmatpush1.msra.mxu0 0.0
    %4160 = vmatprep.subr.mxu0 0.0
    %4161 = vmatpush1.msra.mxu0 0.0
    %4162 = vmatprep.subr.mxu0 0.0
    %4163 = vmatpush1.msra.mxu0 0.0
    %4164 = vmatprep.subr.mxu0 0.0
    %4165 = vmatpush1.msra.mxu0 0.0
    %4166 = vmatprep.subr.mxu0 0.0
    %4167 = vmatpush1.msra.mxu0 0.0
    %4168 = vmatprep.subr.mxu0 0.0
    %4169 = vmatpush1.msra.mxu0 0.0
    %4170 = vmatprep.subr.mxu0 0.0
    %4171 = vmatpush1.msra.mxu0 0.0
    %4172 = vmatprep.mubr.f32.mxu0 0.0
    %4173 = vmatmul.mubr.f32.gmra.mrb[0].mxu0 %v2481
    %v4174 = vpop.f32.mrb[0].mxu0
    %v4175 = vadd.f32 0.0, %v4174
    %v4176 = vpop.f32.mrb[0].mxu0
    %4177 = vdwg.mxu0
    %4178 = vmatprep.subr.mxu0 0.0
    %4179 = vmatpush1.msra.mxu0 %v4076
    %4180 = vmatprep.subr.mxu0 0.0
    %4181 = vmatpush1.msra.mxu0 %v4077
    %4182 = vmatprep.subr.mxu0 0.0
    %4183 = vmatpush1.msra.mxu0 %v4078
    %4184 = vmatprep.subr.mxu0 0.0
    %4185 = vmatpush1.msra.mxu0 %v4079
    %4186 = vmatprep.subr.mxu0 0.0
    %4187 = vmatpush1.msra.mxu0 %v4080
    %4188 = vmatprep.subr.mxu0 0.0
    %4189 = vmatpush1.msra.mxu0 %v4081
    %4190 = vmatprep.subr.mxu0 0.0
    %4191 = vmatpush1.msra.mxu0 %v4082
    %4192 = vmatprep.subr.mxu0 0.0
    %4193 = vmatpush1.msra.mxu0 %v4083
    %4194 = vmatprep.subr.mxu0 0.0
    %4195 = vmatpush1.msra.mxu0 %v4084
    %4196 = vmatprep.subr.mxu0 0.0
    %4197 = vmatpush1.msra.mxu0 %v4085
    %4198 = vmatprep.subr.mxu0 0.0
    %4199 = vmatpush1.msra.mxu0 %v4086
    %4200 = vmatprep.subr.mxu0 0.0
    %4201 = vmatpush1.msra.mxu0 %v4087
    %4202 = vmatprep.subr.mxu0 0.0
    %4203 = vmatpush1.msra.mxu0 %v4088
    %4204 = vmatprep.subr.mxu0 0.0
    %4205 = vmatpush1.msra.mxu0 %v4089
    %4206 = vmatprep.subr.mxu0 0.0
    %4207 = vmatpush1.msra.mxu0 %v4090
    %4208 = vmatprep.subr.mxu0 0.0
    %4209 = vmatpush1.msra.mxu0 %v4091
    %4210 = vmatprep.subr.mxu0 0.0
    %4211 = vmatpush1.msra.mxu0 0.0
    %4212 = vmatprep.subr.mxu0 0.0
    %4213 = vmatpush1.msra.mxu0 0.0
    %4214 = vmatprep.subr.mxu0 0.0
    %4215 = vmatpush1.msra.mxu0 0.0
    %4216 = vmatprep.subr.mxu0 0.0
    %4217 = vmatpush1.msra.mxu0 0.0
    %4218 = vmatprep.subr.mxu0 0.0
    %4219 = vmatpush1.msra.mxu0 0.0
    %4220 = vmatprep.subr.mxu0 0.0
    %4221 = vmatpush1.msra.mxu0 0.0
    %4222 = vmatprep.subr.mxu0 0.0
    %4223 = vmatpush1.msra.mxu0 0.0
    %4224 = vmatprep.subr.mxu0 0.0
    %4225 = vmatpush1.msra.mxu0 0.0
    %4226 = vmatprep.subr.mxu0 0.0
    %4227 = vmatpush1.msra.mxu0 0.0
    %4228 = vmatprep.subr.mxu0 0.0
    %4229 = vmatpush1.msra.mxu0 0.0
    %4230 = vmatprep.subr.mxu0 0.0
    %4231 = vmatpush1.msra.mxu0 0.0
    %4232 = vmatprep.subr.mxu0 0.0
    %4233 = vmatpush1.msra.mxu0 0.0
    %4234 = vmatprep.subr.mxu0 0.0
    %4235 = vmatpush1.msra.mxu0 0.0
    %4236 = vmatprep.subr.mxu0 0.0
    %4237 = vmatpush1.msra.mxu0 0.0
    %4238 = vmatprep.subr.mxu0 0.0
    %4239 = vmatpush1.msra.mxu0 0.0
    %4240 = vmatprep.subr.mxu0 0.0
    %4241 = vmatpush1.msra.mxu0 0.0
    %4242 = vmatprep.mubr.f32.mxu0 0.0
    %4243 = vmatmul.mubr.f32.gmra.mrb[0].mxu0 %v1472
    %v4244 = vpop.f32.mrb[0].mxu0
    %v4245 = vadd.f32 %v4175, %v4244
    %v4246 = vpop.f32.mrb[0].mxu0
    %4247 = vdwg.mxu0
    %v4248 = vld [vmem:[%s83] sm:$0xff]
    %v4249 = vld [vmem:[%s83 + $0x8] sm:$0xff]
    %v4250 = vld [vmem:[%s83 + $0x10] sm:$0xff]
    %v4251 = vld [vmem:[%s83 + $0x18] sm:$0xff]
    %v4252 = vld [vmem:[%s83 + $0x20] sm:$0xff]
    %v4253 = vld [vmem:[%s83 + $0x28] sm:$0xff]
    %v4254 = vld [vmem:[%s83 + $0x30] sm:$0xff]
    %v4255 = vld [vmem:[%s83 + $0x38] sm:$0xff]
    %v4256 = vld [vmem:[%s83 + $0x40] sm:$0xff]
    %v4257 = vld [vmem:[%s83 + $0x48] sm:$0xff]
    %v4258 = vld [vmem:[%s83 + $0x50] sm:$0xff]
    %v4259 = vld [vmem:[%s83 + $0x58] sm:$0xff]
    %v4260 = vld [vmem:[%s83 + $0x60] sm:$0xff]
    %v4261 = vld [vmem:[%s83 + $0x68] sm:$0xff]
    %v4262 = vld [vmem:[%s83 + $0x70] sm:$0xff]
    %v4263 = vld [vmem:[%s83 + $0x78] sm:$0xff]
    %4264 = vmatprep.subr.mxu0 0.0
    %4265 = vmatpush1.msra.mxu0 %v4248
    %4266 = vmatprep.subr.mxu0 0.0
    %4267 = vmatpush1.msra.mxu0 %v4249
    %4268 = vmatprep.subr.mxu0 0.0
    %4269 = vmatpush1.msra.mxu0 %v4250
    %4270 = vmatprep.subr.mxu0 0.0
    %4271 = vmatpush1.msra.mxu0 %v4251
    %4272 = vmatprep.subr.mxu0 0.0
    %4273 = vmatpush1.msra.mxu0 %v4252
    %4274 = vmatprep.subr.mxu0 0.0
    %4275 = vmatpush1.msra.mxu0 %v4253
    %4276 = vmatprep.subr.mxu0 0.0
    %4277 = vmatpush1.msra.mxu0 %v4254
    %4278 = vmatprep.subr.mxu0 0.0
    %4279 = vmatpush1.msra.mxu0 %v4255
    %4280 = vmatprep.subr.mxu0 0.0
    %4281 = vmatpush1.msra.mxu0 %v4256
    %4282 = vmatprep.subr.mxu0 0.0
    %4283 = vmatpush1.msra.mxu0 %v4257
    %4284 = vmatprep.subr.mxu0 0.0
    %4285 = vmatpush1.msra.mxu0 %v4258
    %4286 = vmatprep.subr.mxu0 0.0
    %4287 = vmatpush1.msra.mxu0 %v4259
    %4288 = vmatprep.subr.mxu0 0.0
    %4289 = vmatpush1.msra.mxu0 %v4260
    %4290 = vmatprep.subr.mxu0 0.0
    %4291 = vmatpush1.msra.mxu0 %v4261
    %4292 = vmatprep.subr.mxu0 0.0
    %4293 = vmatpush1.msra.mxu0 %v4262
    %4294 = vmatprep.subr.mxu0 0.0
    %4295 = vmatpush1.msra.mxu0 %v4263
    %4296 = vmatprep.subr.mxu0 0.0
    %4297 = vmatpush1.msra.mxu0 0.0
    %4298 = vmatprep.subr.mxu0 0.0
    %4299 = vmatpush1.msra.mxu0 0.0
    %4300 = vmatprep.subr.mxu0 0.0
    %4301 = vmatpush1.msra.mxu0 0.0
    %4302 = vmatprep.subr.mxu0 0.0
    %4303 = vmatpush1.msra.mxu0 0.0
    %4304 = vmatprep.subr.mxu0 0.0
    %4305 = vmatpush1.msra.mxu0 0.0
    %4306 = vmatprep.subr.mxu0 0.0
    %4307 = vmatpush1.msra.mxu0 0.0
    %4308 = vmatprep.subr.mxu0 0.0
    %4309 = vmatpush1.msra.mxu0 0.0
    %4310 = vmatprep.subr.mxu0 0.0
    %4311 = vmatpush1.msra.mxu0 0.0
    %4312 = vmatprep.subr.mxu0 0.0
    %4313 = vmatpush1.msra.mxu0 0.0
    %4314 = vmatprep.subr.mxu0 0.0
    %4315 = vmatpush1.msra.mxu0 0.0
    %4316 = vmatprep.subr.mxu0 0.0
    %4317 = vmatpush1.msra.mxu0 0.0
    %4318 = vmatprep.subr.mxu0 0.0
    %4319 = vmatpush1.msra.mxu0 0.0
    %4320 = vmatprep.subr.mxu0 0.0
    %4321 = vmatpush1.msra.mxu0 0.0
    %4322 = vmatprep.subr.mxu0 0.0
    %4323 = vmatpush1.msra.mxu0 0.0
    %4324 = vmatprep.subr.mxu0 0.0
    %4325 = vmatpush1.msra.mxu0 0.0
    %4326 = vmatprep.subr.mxu0 0.0
    %4327 = vmatpush1.msra.mxu0 0.0
    %4328 = vmatprep.mubr.f32.mxu0 0.0
    %4329 = vmatmul.mubr.f32.gmra.mrb[0].mxu0 %v3490
    %v4330 = vpop.f32.mrb[0].mxu0
    %v4331 = vadd.f32 0.0, %v4330
    %v4332 = vpop.f32.mrb[0].mxu0
    %4333 = vdwg.mxu0
    %v4334 = vadd.f32 %v4245, %v4331
    %v4335 = vld [vmem:[#allocation29] sm:$0x1]
    %v4337 = vlaneseq
    %v4338 = vshrl.u32 %v4337, 7
    %v4339 = vsub.s32 0, %v4338
    %v4340 = vrot.slane %v4335, %v4339
    %v4342 = vadd.f32 %v4334, %v4340
    %v4343 = vld [vmem:[%s21] sm:$0x3]
    %v4345 = vsel %vm962, %v4343, 0
    %4347 = vmatprep.subr.mxu0 0.0
    %4348 = vmatpush1.msra.mxu0 %v3773
    %4349 = vmatprep.subr.mxu0 0.0
    %4350 = vmatpush1.msra.mxu0 %v3774
    %4351 = vmatprep.subr.mxu0 0.0
    %4352 = vmatpush1.msra.mxu0 0.0
    %4353 = vmatprep.subr.mxu0 0.0
    %4354 = vmatpush1.msra.mxu0 0.0
    %4355 = vmatprep.subr.mxu0 0.0
    %4356 = vmatpush1.msra.mxu0 0.0
    %4357 = vmatprep.subr.mxu0 0.0
    %4358 = vmatpush1.msra.mxu0 0.0
    %4359 = vmatprep.subr.mxu0 0.0
    %4360 = vmatpush1.msra.mxu0 0.0
    %4361 = vmatprep.subr.mxu0 0.0
    %4362 = vmatpush1.msra.mxu0 0.0
    %4363 = vmatprep.subr.mxu0 0.0
    %4364 = vmatpush1.msra.mxu0 0.0
    %4365 = vmatprep.subr.mxu0 0.0
    %4366 = vmatpush1.msra.mxu0 0.0
    %4367 = vmatprep.subr.mxu0 0.0
    %4368 = vmatpush1.msra.mxu0 0.0
    %4369 = vmatprep.subr.mxu0 0.0
    %4370 = vmatpush1.msra.mxu0 0.0
    %4371 = vmatprep.subr.mxu0 0.0
    %4372 = vmatpush1.msra.mxu0 0.0
    %4373 = vmatprep.subr.mxu0 0.0
    %4374 = vmatpush1.msra.mxu0 0.0
    %4375 = vmatprep.subr.mxu0 0.0
    %4376 = vmatpush1.msra.mxu0 0.0
    %4377 = vmatprep.subr.mxu0 0.0
    %4378 = vmatpush1.msra.mxu0 0.0
    %4379 = vmatprep.subr.mxu0 0.0
    %4380 = vmatpush1.msra.mxu0 0.0
    %4381 = vmatprep.subr.mxu0 0.0
    %4382 = vmatpush1.msra.mxu0 0.0
    %4383 = vmatprep.subr.mxu0 0.0
    %4384 = vmatpush1.msra.mxu0 0.0
    %4385 = vmatprep.subr.mxu0 0.0
    %4386 = vmatpush1.msra.mxu0 0.0
    %4387 = vmatprep.subr.mxu0 0.0
    %4388 = vmatpush1.msra.mxu0 0.0
    %4389 = vmatprep.subr.mxu0 0.0
    %4390 = vmatpush1.msra.mxu0 0.0
    %4391 = vmatprep.subr.mxu0 0.0
    %4392 = vmatpush1.msra.mxu0 0.0
    %4393 = vmatprep.subr.mxu0 0.0
    %4394 = vmatpush1.msra.mxu0 0.0
    %4395 = vmatprep.subr.mxu0 0.0
    %4396 = vmatpush1.msra.mxu0 0.0
    %4397 = vmatprep.subr.mxu0 0.0
    %4398 = vmatpush1.msra.mxu0 0.0
    %4399 = vmatprep.subr.mxu0 0.0
    %4400 = vmatpush1.msra.mxu0 0.0
    %4401 = vmatprep.subr.mxu0 0.0
    %4402 = vmatpush1.msra.mxu0 0.0
    %4403 = vmatprep.subr.mxu0 0.0
    %4404 = vmatpush1.msra.mxu0 0.0
    %4405 = vmatprep.subr.mxu0 0.0
    %4406 = vmatpush1.msra.mxu0 0.0
    %4407 = vmatprep.subr.mxu0 0.0
    %4408 = vmatpush1.msra.mxu0 0.0
    %4409 = vmatprep.subr.mxu0 0.0
    %4410 = vmatpush1.msra.mxu0 0.0
    %4411 = vmatprep.mubr.f32.mxu0 0.0
    %4412 = vmatmul.mubr.f32.gmra.mrb[0].mxu0 %v4345
    %v4413 = vpop.f32.mrb[0].mxu0
    %v4414 = vadd.f32 0.0, %v4413
    %v4415 = vpop.f32.mrb[0].mxu0
    %4416 = vdwg.mxu0
    %v4417 = vld [vmem:[%s23] sm:$0x3]
    %v4419 = vsel %vm880, %v4417, 0
    %4421 = vmatprep.subr.mxu0 0.0
    %4422 = vmatpush1.msra.mxu0 %v4073
    %4423 = vmatprep.subr.mxu0 0.0
    %4424 = vmatpush1.msra.mxu0 %v4074
    %4425 = vmatprep.subr.mxu0 0.0
    %4426 = vmatpush1.msra.mxu0 %v4075
    %4427 = vmatprep.subr.mxu0 0.0
    %4428 = vmatpush1.msra.mxu0 0.0
    %4429 = vmatprep.subr.mxu0 0.0
    %4430 = vmatpush1.msra.mxu0 0.0
    %4431 = vmatprep.subr.mxu0 0.0
    %4432 = vmatpush1.msra.mxu0 0.0
    %4433 = vmatprep.subr.mxu0 0.0
    %4434 = vmatpush1.msra.mxu0 0.0
    %4435 = vmatprep.subr.mxu0 0.0
    %4436 = vmatpush1.msra.mxu0 0.0
    %4437 = vmatprep.subr.mxu0 0.0
    %4438 = vmatpush1.msra.mxu0 0.0
    %4439 = vmatprep.subr.mxu0 0.0
    %4440 = vmatpush1.msra.mxu0 0.0
    %4441 = vmatprep.subr.mxu0 0.0
    %4442 = vmatpush1.msra.mxu0 0.0
    %4443 = vmatprep.subr.mxu0 0.0
    %4444 = vmatpush1.msra.mxu0 0.0
    %4445 = vmatprep.subr.mxu0 0.0
    %4446 = vmatpush1.msra.mxu0 0.0
    %4447 = vmatprep.subr.mxu0 0.0
    %4448 = vmatpush1.msra.mxu0 0.0
    %4449 = vmatprep.subr.mxu0 0.0
    %4450 = vmatpush1.msra.mxu0 0.0
    %4451 = vmatprep.subr.mxu0 0.0
    %4452 = vmatpush1.msra.mxu0 0.0
    %4453 = vmatprep.subr.mxu0 0.0
    %4454 = vmatpush1.msra.mxu0 0.0
    %4455 = vmatprep.subr.mxu0 0.0
    %4456 = vmatpush1.msra.mxu0 0.0
    %4457 = vmatprep.subr.mxu0 0.0
    %4458 = vmatpush1.msra.mxu0 0.0
    %4459 = vmatprep.subr.mxu0 0.0
    %4460 = vmatpush1.msra.mxu0 0.0
    %4461 = vmatprep.subr.mxu0 0.0
    %4462 = vmatpush1.msra.mxu0 0.0
    %4463 = vmatprep.subr.mxu0 0.0
    %4464 = vmatpush1.msra.mxu0 0.0
    %4465 = vmatprep.subr.mxu0 0.0
    %4466 = vmatpush1.msra.mxu0 0.0
    %4467 = vmatprep.subr.mxu0 0.0
    %4468 = vmatpush1.msra.mxu0 0.0
    %4469 = vmatprep.subr.mxu0 0.0
    %4470 = vmatpush1.msra.mxu0 0.0
    %4471 = vmatprep.subr.mxu0 0.0
    %4472 = vmatpush1.msra.mxu0 0.0
    %4473 = vmatprep.subr.mxu0 0.0
    %4474 = vmatpush1.msra.mxu0 0.0
    %4475 = vmatprep.subr.mxu0 0.0
    %4476 = vmatpush1.msra.mxu0 0.0
    %4477 = vmatprep.subr.mxu0 0.0
    %4478 = vmatpush1.msra.mxu0 0.0
    %4479 = vmatprep.subr.mxu0 0.0
    %4480 = vmatpush1.msra.mxu0 0.0
    %4481 = vmatprep.subr.mxu0 0.0
    %4482 = vmatpush1.msra.mxu0 0.0
    %4483 = vmatprep.subr.mxu0 0.0
    %4484 = vmatpush1.msra.mxu0 0.0
    %4485 = vmatprep.mubr.f32.mxu0 0.0
    %4486 = vmatmul.mubr.f32.gmra.mrb[0].mxu0 %v4419
    %v4487 = vpop.f32.mrb[0].mxu0
    %v4488 = vadd.f32 0.0, %v4487
    %v4489 = vpop.f32.mrb[0].mxu0
    %4490 = vdwg.mxu0
    %v4491 = vld [vmem:[%s25] sm:$0x3]
    %v4493 = vsel %vm1226, %v4491, 0
    %4495 = vmatprep.subr.mxu0 0.0
    %4496 = vmatpush1.msra.mxu0 %v4342
    %4497 = vmatprep.subr.mxu0 0.0
    %4498 = vmatpush1.msra.mxu0 0.0
    %4499 = vmatprep.subr.mxu0 0.0
    %4500 = vmatpush1.msra.mxu0 0.0
    %4501 = vmatprep.subr.mxu0 0.0
    %4502 = vmatpush1.msra.mxu0 0.0
    %4503 = vmatprep.subr.mxu0 0.0
    %4504 = vmatpush1.msra.mxu0 0.0
    %4505 = vmatprep.subr.mxu0 0.0
    %4506 = vmatpush1.msra.mxu0 0.0
    %4507 = vmatprep.subr.mxu0 0.0
    %4508 = vmatpush1.msra.mxu0 0.0
    %4509 = vmatprep.subr.mxu0 0.0
    %4510 = vmatpush1.msra.mxu0 0.0
    %4511 = vmatprep.subr.mxu0 0.0
    %4512 = vmatpush1.msra.mxu0 0.0
    %4513 = vmatprep.subr.mxu0 0.0
    %4514 = vmatpush1.msra.mxu0 0.0
    %4515 = vmatprep.subr.mxu0 0.0
    %4516 = vmatpush1.msra.mxu0 0.0
    %4517 = vmatprep.subr.mxu0 0.0
    %4518 = vmatpush1.msra.mxu0 0.0
    %4519 = vmatprep.subr.mxu0 0.0
    %4520 = vmatpush1.msra.mxu0 0.0
    %4521 = vmatprep.subr.mxu0 0.0
    %4522 = vmatpush1.msra.mxu0 0.0
    %4523 = vmatprep.subr.mxu0 0.0
    %4524 = vmatpush1.msra.mxu0 0.0
    %4525 = vmatprep.subr.mxu0 0.0
    %4526 = vmatpush1.msra.mxu0 0.0
    %4527 = vmatprep.subr.mxu0 0.0
    %4528 = vmatpush1.msra.mxu0 0.0
    %4529 = vmatprep.subr.mxu0 0.0
    %4530 = vmatpush1.msra.mxu0 0.0
    %4531 = vmatprep.subr.mxu0 0.0
    %4532 = vmatpush1.msra.mxu0 0.0
    %4533 = vmatprep.subr.mxu0 0.0
    %4534 = vmatpush1.msra.mxu0 0.0
    %4535 = vmatprep.subr.mxu0 0.0
    %4536 = vmatpush1.msra.mxu0 0.0
    %4537 = vmatprep.subr.mxu0 0.0
    %4538 = vmatpush1.msra.mxu0 0.0
    %4539 = vmatprep.subr.mxu0 0.0
    %4540 = vmatpush1.msra.mxu0 0.0
    %4541 = vmatprep.subr.mxu0 0.0
    %4542 = vmatpush1.msra.mxu0 0.0
    %4543 = vmatprep.subr.mxu0 0.0
    %4544 = vmatpush1.msra.mxu0 0.0
    %4545 = vmatprep.subr.mxu0 0.0
    %4546 = vmatpush1.msra.mxu0 0.0
    %4547 = vmatprep.subr.mxu0 0.0
    %4548 = vmatpush1.msra.mxu0 0.0
    %4549 = vmatprep.subr.mxu0 0.0
    %4550 = vmatpush1.msra.mxu0 0.0
    %4551 = vmatprep.subr.mxu0 0.0
    %4552 = vmatpush1.msra.mxu0 0.0
    %4553 = vmatprep.subr.mxu0 0.0
    %4554 = vmatpush1.msra.mxu0 0.0
    %4555 = vmatprep.subr.mxu0 0.0
    %4556 = vmatpush1.msra.mxu0 0.0
    %4557 = vmatprep.subr.mxu0 0.0
    %4558 = vmatpush1.msra.mxu0 0.0
    %4559 = vmatprep.mubr.f32.mxu0 0.0
    %4560 = vmatmul.mubr.f32.gmra.mrb[0].mxu0 %v4493
    %v4561 = vpop.f32.mrb[0].mxu0
    %v4562 = vadd.f32 0.0, %v4561
    %v4563 = vpop.f32.mrb[0].mxu0
    %4564 = vdwg.mxu0
    %v4565 = vld [vmem:[#allocation31] sm:$0xff]
    %v4566 = vld [vmem:[#allocation31 + $0x8] sm:$0x3]
    %v4567 = vld [vmem:[#allocation32] sm:$0xff]
    %v4568 = vld [vmem:[#allocation32 + $0x8] sm:$0x3]
    %vm4569 = vcmask 80896
    %v4571 = vsel %vm4569, %v4488, 0
    %vm4573 = vcmask 1041408
    %v4575 = vsel %vm4573, %v4568, 0
    %4577 = vmatprep.subr.mxu0 0.0
    %4578 = vmatpush1.msra.mxu0 %v4567
    %4579 = vmatprep.subr.mxu0 0.0
    %4580 = vmatpush1.msra.mxu0 %v4575
    %4581 = vmatprep.subr.mxu0 0.0
    %4582 = vmatpush1.msra.mxu0 0.0
    %4583 = vmatprep.subr.mxu0 0.0
    %4584 = vmatpush1.msra.mxu0 0.0
    %4585 = vmatprep.subr.mxu0 0.0
    %4586 = vmatpush1.msra.mxu0 0.0
    %4587 = vmatprep.subr.mxu0 0.0
    %4588 = vmatpush1.msra.mxu0 0.0
    %4589 = vmatprep.subr.mxu0 0.0
    %4590 = vmatpush1.msra.mxu0 0.0
    %4591 = vmatprep.subr.mxu0 0.0
    %4592 = vmatpush1.msra.mxu0 0.0
    %4593 = vmatprep.subr.mxu0 0.0
    %4594 = vmatpush1.msra.mxu0 0.0
    %4595 = vmatprep.subr.mxu0 0.0
    %4596 = vmatpush1.msra.mxu0 0.0
    %4597 = vmatprep.subr.mxu0 0.0
    %4598 = vmatpush1.msra.mxu0 0.0
    %4599 = vmatprep.subr.mxu0 0.0
    %4600 = vmatpush1.msra.mxu0 0.0
    %4601 = vmatprep.subr.mxu0 0.0
    %4602 = vmatpush1.msra.mxu0 0.0
    %4603 = vmatprep.subr.mxu0 0.0
    %4604 = vmatpush1.msra.mxu0 0.0
    %4605 = vmatprep.subr.mxu0 0.0
    %4606 = vmatpush1.msra.mxu0 0.0
    %4607 = vmatprep.subr.mxu0 0.0
    %4608 = vmatpush1.msra.mxu0 0.0
    %4609 = vmatprep.subr.mxu0 0.0
    %4610 = vmatpush1.msra.mxu0 0.0
    %4611 = vmatprep.subr.mxu0 0.0
    %4612 = vmatpush1.msra.mxu0 0.0
    %4613 = vmatprep.subr.mxu0 0.0
    %4614 = vmatpush1.msra.mxu0 0.0
    %4615 = vmatprep.subr.mxu0 0.0
    %4616 = vmatpush1.msra.mxu0 0.0
    %4617 = vmatprep.subr.mxu0 0.0
    %4618 = vmatpush1.msra.mxu0 0.0
    %4619 = vmatprep.subr.mxu0 0.0
    %4620 = vmatpush1.msra.mxu0 0.0
    %4621 = vmatprep.subr.mxu0 0.0
    %4622 = vmatpush1.msra.mxu0 0.0
    %4623 = vmatprep.subr.mxu0 0.0
    %4624 = vmatpush1.msra.mxu0 0.0
    %4625 = vmatprep.subr.mxu0 0.0
    %4626 = vmatpush1.msra.mxu0 0.0
    %4627 = vmatprep.subr.mxu0 0.0
    %4628 = vmatpush1.msra.mxu0 0.0
    %4629 = vmatprep.subr.mxu0 0.0
    %4630 = vmatpush1.msra.mxu0 0.0
    %4631 = vmatprep.subr.mxu0 0.0
    %4632 = vmatpush1.msra.mxu0 0.0
    %4633 = vmatprep.subr.mxu0 0.0
    %4634 = vmatpush1.msra.mxu0 0.0
    %4635 = vmatprep.subr.mxu0 0.0
    %4636 = vmatpush1.msra.mxu0 0.0
    %4637 = vmatprep.subr.mxu0 0.0
    %4638 = vmatpush1.msra.mxu0 0.0
    %4639 = vmatprep.subr.mxu0 0.0
    %4640 = vmatpush1.msra.mxu0 0.0
    %4641 = vmatprep.mubr.f32.mxu0 0.0
    %4642 = vmatmul.mubr.f32.gmra.mrb[0].mxu0 %v4571
    %v4643 = vpop.f32.mrb[0].mxu0
    %v4644 = vadd.f32 0.0, %v4643
    %v4645 = vpop.f32.mrb[0].mxu0
    %4646 = vdwg.mxu0
    %v4648 = vsel %vm4569, %v4414, 0
    %v4651 = vsel %vm4573, %v4566, 0
    %4653 = vmatprep.subr.mxu0 0.0
    %4654 = vmatpush1.msra.mxu0 %v4565
    %4655 = vmatprep.subr.mxu0 0.0
    %4656 = vmatpush1.msra.mxu0 %v4651
    %4657 = vmatprep.subr.mxu0 0.0
    %4658 = vmatpush1.msra.mxu0 0.0
    %4659 = vmatprep.subr.mxu0 0.0
    %4660 = vmatpush1.msra.mxu0 0.0
    %4661 = vmatprep.subr.mxu0 0.0
    %4662 = vmatpush1.msra.mxu0 0.0
    %4663 = vmatprep.subr.mxu0 0.0
    %4664 = vmatpush1.msra.mxu0 0.0
    %4665 = vmatprep.subr.mxu0 0.0
    %4666 = vmatpush1.msra.mxu0 0.0
    %4667 = vmatprep.subr.mxu0 0.0
    %4668 = vmatpush1.msra.mxu0 0.0
    %4669 = vmatprep.subr.mxu0 0.0
    %4670 = vmatpush1.msra.mxu0 0.0
    %4671 = vmatprep.subr.mxu0 0.0
    %4672 = vmatpush1.msra.mxu0 0.0
    %4673 = vmatprep.subr.mxu0 0.0
    %4674 = vmatpush1.msra.mxu0 0.0
    %4675 = vmatprep.subr.mxu0 0.0
    %4676 = vmatpush1.msra.mxu0 0.0
    %4677 = vmatprep.subr.mxu0 0.0
    %4678 = vmatpush1.msra.mxu0 0.0
    %4679 = vmatprep.subr.mxu0 0.0
    %4680 = vmatpush1.msra.mxu0 0.0
    %4681 = vmatprep.subr.mxu0 0.0
    %4682 = vmatpush1.msra.mxu0 0.0
    %4683 = vmatprep.subr.mxu0 0.0
    %4684 = vmatpush1.msra.mxu0 0.0
    %4685 = vmatprep.subr.mxu0 0.0
    %4686 = vmatpush1.msra.mxu0 0.0
    %4687 = vmatprep.subr.mxu0 0.0
    %4688 = vmatpush1.msra.mxu0 0.0
    %4689 = vmatprep.subr.mxu0 0.0
    %4690 = vmatpush1.msra.mxu0 0.0
    %4691 = vmatprep.subr.mxu0 0.0
    %4692 = vmatpush1.msra.mxu0 0.0
    %4693 = vmatprep.subr.mxu0 0.0
    %4694 = vmatpush1.msra.mxu0 0.0
    %4695 = vmatprep.subr.mxu0 0.0
    %4696 = vmatpush1.msra.mxu0 0.0
    %4697 = vmatprep.subr.mxu0 0.0
    %4698 = vmatpush1.msra.mxu0 0.0
    %4699 = vmatprep.subr.mxu0 0.0
    %4700 = vmatpush1.msra.mxu0 0.0
    %4701 = vmatprep.subr.mxu0 0.0
    %4702 = vmatpush1.msra.mxu0 0.0
    %4703 = vmatprep.subr.mxu0 0.0
    %4704 = vmatpush1.msra.mxu0 0.0
    %4705 = vmatprep.subr.mxu0 0.0
    %4706 = vmatpush1.msra.mxu0 0.0
    %4707 = vmatprep.subr.mxu0 0.0
    %4708 = vmatpush1.msra.mxu0 0.0
    %4709 = vmatprep.subr.mxu0 0.0
    %4710 = vmatpush1.msra.mxu0 0.0
    %4711 = vmatprep.subr.mxu0 0.0
    %4712 = vmatpush1.msra.mxu0 0.0
    %4713 = vmatprep.subr.mxu0 0.0
    %4714 = vmatpush1.msra.mxu0 0.0
    %4715 = vmatprep.subr.mxu0 0.0
    %4716 = vmatpush1.msra.mxu0 0.0
    %4717 = vmatprep.mubr.f32.mxu0 0.0
    %4718 = vmatmul.mubr.f32.gmra.mrb[0].mxu0 %v4648
    %v4719 = vpop.f32.mrb[0].mxu0
    %v4720 = vadd.f32 %v4644, %v4719
    %v4721 = vpop.f32.mrb[0].mxu0
    %4722 = vdwg.mxu0
    %v4723 = vld [vmem:[#allocation34] sm:$0xff]
    %v4724 = vld [vmem:[#allocation34 + $0x8] sm:$0x3]
    %v4726 = vsel %vm4569, %v4562, 0
    %v4729 = vsel %vm4573, %v4724, 0
    %4731 = vmatprep.subr.mxu0 0.0
    %4732 = vmatpush1.msra.mxu0 %v4723
    %4733 = vmatprep.subr.mxu0 0.0
    %4734 = vmatpush1.msra.mxu0 %v4729
    %4735 = vmatprep.subr.mxu0 0.0
    %4736 = vmatpush1.msra.mxu0 0.0
    %4737 = vmatprep.subr.mxu0 0.0
    %4738 = vmatpush1.msra.mxu0 0.0
    %4739 = vmatprep.subr.mxu0 0.0
    %4740 = vmatpush1.msra.mxu0 0.0
    %4741 = vmatprep.subr.mxu0 0.0
    %4742 = vmatpush1.msra.mxu0 0.0
    %4743 = vmatprep.subr.mxu0 0.0
    %4744 = vmatpush1.msra.mxu0 0.0
    %4745 = vmatprep.subr.mxu0 0.0
    %4746 = vmatpush1.msra.mxu0 0.0
    %4747 = vmatprep.subr.mxu0 0.0
    %4748 = vmatpush1.msra.mxu0 0.0
    %4749 = vmatprep.subr.mxu0 0.0
    %4750 = vmatpush1.msra.mxu0 0.0
    %4751 = vmatprep.subr.mxu0 0.0
    %4752 = vmatpush1.msra.mxu0 0.0
    %4753 = vmatprep.subr.mxu0 0.0
    %4754 = vmatpush1.msra.mxu0 0.0
    %4755 = vmatprep.subr.mxu0 0.0
    %4756 = vmatpush1.msra.mxu0 0.0
    %4757 = vmatprep.subr.mxu0 0.0
    %4758 = vmatpush1.msra.mxu0 0.0
    %4759 = vmatprep.subr.mxu0 0.0
    %4760 = vmatpush1.msra.mxu0 0.0
    %4761 = vmatprep.subr.mxu0 0.0
    %4762 = vmatpush1.msra.mxu0 0.0
    %4763 = vmatprep.subr.mxu0 0.0
    %4764 = vmatpush1.msra.mxu0 0.0
    %4765 = vmatprep.subr.mxu0 0.0
    %4766 = vmatpush1.msra.mxu0 0.0
    %4767 = vmatprep.subr.mxu0 0.0
    %4768 = vmatpush1.msra.mxu0 0.0
    %4769 = vmatprep.subr.mxu0 0.0
    %4770 = vmatpush1.msra.mxu0 0.0
    %4771 = vmatprep.subr.mxu0 0.0
    %4772 = vmatpush1.msra.mxu0 0.0
    %4773 = vmatprep.subr.mxu0 0.0
    %4774 = vmatpush1.msra.mxu0 0.0
    %4775 = vmatprep.subr.mxu0 0.0
    %4776 = vmatpush1.msra.mxu0 0.0
    %4777 = vmatprep.subr.mxu0 0.0
    %4778 = vmatpush1.msra.mxu0 0.0
    %4779 = vmatprep.subr.mxu0 0.0
    %4780 = vmatpush1.msra.mxu0 0.0
    %4781 = vmatprep.subr.mxu0 0.0
    %4782 = vmatpush1.msra.mxu0 0.0
    %4783 = vmatprep.subr.mxu0 0.0
    %4784 = vmatpush1.msra.mxu0 0.0
    %4785 = vmatprep.subr.mxu0 0.0
    %4786 = vmatpush1.msra.mxu0 0.0
    %4787 = vmatprep.subr.mxu0 0.0
    %4788 = vmatpush1.msra.mxu0 0.0
    %4789 = vmatprep.subr.mxu0 0.0
    %4790 = vmatpush1.msra.mxu0 0.0
    %4791 = vmatprep.subr.mxu0 0.0
    %4792 = vmatpush1.msra.mxu0 0.0
    %4793 = vmatprep.subr.mxu0 0.0
    %4794 = vmatpush1.msra.mxu0 0.0
    %4795 = vmatprep.mubr.f32.mxu0 0.0
    %4796 = vmatmul.mubr.f32.gmra.mrb[0].mxu0 %v4726
    %v4797 = vpop.f32.mrb[0].mxu0
    %v4798 = vadd.f32 0.0, %v4797
    %v4799 = vpop.f32.mrb[0].mxu0
    %4800 = vdwg.mxu0
    %v4801 = vadd.f32 %v4720, %v4798
    %v4802 = vld [vmem:[#allocation35] sm:$0x1]
    %v4804 = vlaneseq
    %v4805 = vshrl.u32 %v4804, 7
    %v4806 = vsub.s32 0, %v4805
    %v4807 = vrot.slane %v4802, %v4806
    %v4809 = vadd.f32 %v4801, %v4807
    %vm4810 = vcmask 74752
    %v4811 = vsel %vm4810, %v4809, -inf
    %4812 = vmax.xlane.f32.xlu0 %v4811
    %v4813 = vpop.xlane.xlu0 %4812
    %v4814 = vsub.f32 %v4809, %v4813
    %v4815 = vmul.f32 %v4814, 1.442695
    %v4816 = vpow.pop %v4815
    %v4817 = vsel %vm4810, %v4816, 0.0
    %4818 = vadd.xlane.f32.xlu0 %v4817
    %v4819 = vpop.xlane.xlu0 %4818
    %v4820 = vrcp.pop %v4819
    %v4821 = vmul.f32 %v4816, %v4820
    %4822 = vst.msk [vmem:[#allocation37] sm:$0x3] %vm4810, %v4821
    // Predicated region
    $region278: #{superpixel_scconv.1} parent=1 // pred_check
      _
    $region279: #{superpixel_scconv.1} parent=1 // pred_check_branch
      %4824 = sbr.rel (0) target = $region281
    $region280: #{superpixel_scconv.1} parent=1 // pred_region
      %s4826 = ssub.s32 32, 32
      %4827 = vsyncadd [#allocation4], %s4826
      %s4829 = sshll.u32 [#allocation37], 4
      %s4830 = int_to_ptr.vmem [resolvable:$true] %s4829
      %4832 = dma.vmem_to_hbm [thread:$0]  %s4830, 32, %s95, [#allocation4]
    $region281: #{superpixel_scconv.1} parent=1 // pred_fallthru
      _
    // Predicated region
    $region282: #{superpixel_scconv.1} parent=1 // pred_check
      _
    $region283: #{superpixel_scconv.1} parent=1 // pred_check_branch
      %4834 = sbr.rel (0) target = $region285
    $region284: #{superpixel_scconv.1} parent=1 // pred_region
      %4835 = dma.done [#allocation4], 32
    $region285: #{superpixel_scconv.1} parent=1 // pred_fallthru
      _
    %4836 = vsyncpa [#allocation3], 1
    %4837 = vsyncpa [#allocation6], 1
    %4838 = vsyncpa [#allocation9], 1
    %4839 = vsyncpa [#allocation12], 1
    %4840 = vsyncpa [#allocation15], 1
    %4841 = vsyncpa [#allocation18], 1
    %4842 = vsyncpa [#allocation21], 1
    %4843 = vsyncpa [#allocation24], 1
    %4844 = vsyncpa [#allocation27], 1
    %4845 = vsyncpa [#allocation30], 1
    %4846 = vsyncpa [#allocation33], 1
    %4847 = vsyncpa [#allocation36], 1
    %4848 = vsyncpa [#allocation4], 1

</llo_original>
